<compile_context>
chip_gen: v6e
topology: v6e:2x2x1
jax: 0.10.0
libtpu: 0.0.40
codegen_flags: <defaults>
</compile_context>

<pallas_src>
import math

import jax
import jax.numpy as jnp
from jax import lax
from jax.experimental import pallas as pl
from jax.experimental.pallas import tpu as pltpu


# ----------------------------------------------------------------------------
# Fused Pallas kernel
# ----------------------------------------------------------------------------

def _make_encoder_kernel(C, L, k, conv_num, num_header, Bt, compute_dtype):
    dh = C // num_header
    pad = k // 2
    n_ln = conv_num + 2
    c0 = (((0,), (0,)), ((), ()))   # contract dim 0 of both operands
    c1 = (((1,), (1,)), ((), ()))   # contract dim 1 of both operands
    inv_n = 1.0 / float(C * L)

    def shifted(xb, off):
        # xs[:, l] = xb[:, l + off] with zeros outside [0, L); static offset,
        # built per batch element so conv halos never leak across batches.
        if off == 0:
            return xb
        if off > 0:
            return jnp.concatenate(
                [xb[:, off:], jnp.zeros((C, off), xb.dtype)], axis=1)
        return jnp.concatenate(
            [jnp.zeros((C, -off), xb.dtype), xb[:, :L + off]], axis=1)

    def lane_cat(blocks):
        # concat per-batch (rows, L) blocks along lanes (128-aligned).
        if Bt == 1:
            return blocks[0]
        return jnp.concatenate(blocks, axis=1)

    def kernel(x_ref, pe_ref, lnw_ref, lnb_ref, convw_ref, convb_ref,
               wproj_ref, fcw_ref, fcb_ref, o_ref):

        def layer_norm(blocks, idx):
            # Per-batch stats in ONE pass (sum + sum of squares), then a single
            # row-batched (Bt*C, L) x (L, L) matmul for all batch elements.
            zs = []
            for zb in blocks:
                s1 = jnp.sum(zb) * inv_n
                s2 = jnp.sum(zb * zb) * inv_n
                var = s2 - s1 * s1
                zs.append((zb - s1) * lax.rsqrt(var + 1e-5))
            zn = jnp.concatenate(zs, axis=0).astype(compute_dtype)   # (Bt*C, L)
            y = (jnp.dot(zn, lnw_ref[idx],
                         preferred_element_type=jnp.float32)
                 + lnb_ref[idx])                                      # (Bt*C, L)
            return [y[b * C:(b + 1) * C, :] for b in range(Bt)]

        # ---- positional encoding (dropout = identity) ----
        outs = [x_ref[b].astype(jnp.float32) + pe_ref[...] for b in range(Bt)]
        ress = layer_norm(outs, 0)

        # ---- conv stack: relu(conv1d(out) + b) + res ; LN ----
        for i in range(conv_num):
            stacks = []
            for b in range(Bt):
                xb = outs[b].astype(compute_dtype)
                stacks.append(jnp.concatenate(
                    [shifted(xb, j - pad) for j in range(k)], axis=0))  # (k*C, L)
            rhs = lane_cat(stacks)                                      # (k*C, Bt*L)
            conv = (jnp.dot(convw_ref[i], rhs,
                            preferred_element_type=jnp.float32)
                    + convb_ref[i])                                     # (C, Bt*L)
            outs = [jnp.maximum(conv[:, b * L:(b + 1) * L], 0.0) + ress[b]
                    for b in range(Bt)]
            # TODO(synk): F.dropout(training=True) in the reference is stochastic; identity here.
            ress = outs
            outs = layer_norm(outs, 1 + i)

        # ---- self-attention (fused [Wq*scale | Wk | Wv@Wo_sum] projection) ----
        xb_cat = lane_cat([o.astype(compute_dtype) for o in outs])      # (C, Bt*L)
        proj = lax.dot_general(wproj_ref[...], xb_cat, c0,
                               preferred_element_type=jnp.float32)      # (2dh+C, Bt*L)
        new_outs = []
        for b in range(Bt):
            pb = proj[:, b * L:(b + 1) * L]
            qT = pb[0:dh, :].astype(compute_dtype)                      # (dh, L)
            kT = pb[dh:2 * dh, :].astype(compute_dtype)                 # (dh, L)
            vT = pb[2 * dh:2 * dh + C, :]                               # (C, L), = (Wv@Wo_sum)^T x
            s = lax.dot_general(qT, kT, c0,
                                preferred_element_type=jnp.float32)     # (L, L)
            s = s - jnp.max(s, axis=-1, keepdims=True)
            p = jnp.exp(s)
            p = p * pl.reciprocal(jnp.sum(p, axis=-1, keepdims=True),
                                  approx=True)
            att = lax.dot_general(vT.astype(compute_dtype),
                                  p.astype(compute_dtype), c1,
                                  preferred_element_type=jnp.float32)   # (C, L)
            new_outs.append(att + ress[b])
        outs = new_outs
        ress = outs

        # ---- final LN + Linear + relu + residual ----
        outs = layer_norm(outs, n_ln - 1)
        y = (jnp.dot(fcw_ref[...],
                     lane_cat([o.astype(compute_dtype) for o in outs]),
                     preferred_element_type=jnp.float32)
             + fcb_ref[...])                                            # (C, Bt*L)
        for b in range(Bt):
            o_ref[b] = (jnp.maximum(y[:, b * L:(b + 1) * L], 0.0)
                        + ress[b]).astype(o_ref.dtype)

    return kernel


def encoder_block_forward(x, prep, *, conv_num, k, num_header, batch_tile=2,
                          compute_dtype=jnp.bfloat16):
    B, C, L = x.shape
    assert k % 2 == 1, "only odd kernel sizes give 'same' length (PyTorch pad=k//2)"
    assert L % 128 == 0, "L should be lane-dense (multiple of 128)"
    Bt = min(batch_tile, B)
    assert B % Bt == 0, "batch must be divisible by the batch tile"
    n_ln = conv_num + 2
    dh = C // num_header

    def full(shape):
        return pl.BlockSpec(shape, lambda i, _s=len(shape): (0,) * _s)

    kernel = _make_encoder_kernel(C, L, k, conv_num, num_header, Bt,
                                  compute_dtype)
    return pl.pallas_call(
        kernel,
        out_shape=jax.ShapeDtypeStruct((B, C, L), x.dtype),
        grid=(B // Bt,),
        in_specs=[
            pl.BlockSpec((Bt, C, L), lambda i: (i, 0, 0)),   # activation tile
            full((C, L)),                                    # pe (transposed)
            full((n_ln, L, L)),                              # LN weights (sliced)
            full((n_ln, 1, L)),                              # LN biases
            full((conv_num, C, k * C)),                      # conv weights (tap-fused)
            full((conv_num, C, 1)),                          # conv biases
            full((C, 2 * dh + C)),                           # [Wq*scale | Wk | Wv@Wo_sum]
            full((C, C)),                                    # fc weight
            full((C, 1)),                                    # fc bias
        ],
        out_specs=pl.BlockSpec((Bt, C, L), lambda i: (i, 0, 0)),
        compiler_params=pltpu.CompilerParams(
            dimension_semantics=("parallel",),
            vmem_limit_bytes=32 * 1024 * 1024),
    )(x, prep["pe_t"], prep["ln_w"], prep["ln_b"], prep["conv_w"],
      prep["conv_b"], prep["w_proj"], prep["fc_w"], prep["fc_b"])


# ----------------------------------------------------------------------------
# One-time parameter preprocessing (hoisted out of the per-call path)
# ----------------------------------------------------------------------------

def prepare_params(params, L, *, conv_num, num_header,
                   compute_dtype=jnp.bfloat16):
    C = params["fc_w"].shape[0]
    dh = C // num_header
    k = params["conv_w"][0].shape[-1]
    scale = 1.0 / math.sqrt(C / num_header)
    ln_ws = [params["ln_begin_w"]] + list(params["ln_w"]) + [params["ln_end_w"]]
    ln_bs = [params["ln_begin_b"]] + list(params["ln_b"]) + [params["ln_end_b"]]
    # concat([h]*H) @ Wo == h @ Wo_sum;  fuse Wv @ Wo_sum and fold the softmax
    # scale into Wq (exact, scale is a power of two for power-of-two dh).
    wo_sum = params["Wo"].reshape(num_header, dh, C).sum(axis=0)          # (dh, C)
    w_proj = jnp.concatenate(
        [params["Wq"] * scale, params["Wk"], params["Wv"] @ wo_sum], axis=1)
    # conv weights (C_out, C_in, k) -> tap-fused (C_out, k*C_in):
    # column j*C + c_in multiplies shifted(x, j - pad)[c_in].
    conv_w = jnp.stack([jnp.transpose(w, (0, 2, 1)).reshape(C, k * C)
                        for w in params["conv_w"]])
    return {
        "pe_t": params["pe"][:L].T.astype(jnp.float32),                       # (C, L)
        "ln_w": jnp.stack([w[:L, :L] for w in ln_ws]).astype(compute_dtype),  # (n_ln, L, L)
        "ln_b": jnp.stack([b[0:1, :L] for b in ln_bs]).astype(jnp.float32),   # (n_ln, 1, L)
        "conv_w": conv_w.astype(compute_dtype),                               # (cn, C, k*C)
        "conv_b": jnp.stack([b.reshape(C, 1)
                             for b in params["conv_b"]]).astype(jnp.float32), # (cn, C, 1)
        "w_proj": w_proj.astype(compute_dtype),                               # (C, 2*dh + C)
        "fc_w": params["fc_w"].astype(compute_dtype),                         # (C, C)
        "fc_b": params["fc_b"].reshape(C, 1).astype(jnp.float32),             # (C, 1)
    }


# ----------------------------------------------------------------------------
# Deterministic parameter init (shapes per the module __init__)
# ----------------------------------------------------------------------------

def init_params(key, C, k, conv_num, num_header, max_length=512):
    dh = C // num_header
    keys = jax.random.split(key, 8 + 2 * conv_num)
    it = iter(keys)
    params = {}

    # PosEncoder buffer
    position = jnp.arange(max_length, dtype=jnp.float32)[:, None]
    div_term = jnp.exp(jnp.arange(0, C, 2, dtype=jnp.float32)
                       * (-math.log(10000.0) / C))
    pe = jnp.zeros((max_length, C), jnp.float32)
    pe = pe.at[:, 0::2].set(jnp.sin(position * div_term))
    pe = pe.at[:, 1::2].set(jnp.cos(position * div_term))
    params["pe"] = pe

    def ln_init(kk):
        w = jax.random.uniform(kk, (max_length, max_length), jnp.float32, -0.1, 0.1)
        b = jnp.zeros((max_length, max_length), jnp.float32)
        return w, b

    params["ln_begin_w"], params["ln_begin_b"] = ln_init(next(it))
    lw, lb = [], []
    for _ in range(conv_num):
        w, b = ln_init(next(it))
        lw.append(w)
        lb.append(b)
    params["ln_w"], params["ln_b"] = lw, lb
    params["ln_end_w"], params["ln_end_b"] = ln_init(next(it))

    # Conv1d stacks: weight (C_out, C_in, k), bias (C_out,)
    cw, cb = [], []
    bound = 1.0 / math.sqrt(C * k)
    for _ in range(conv_num):
        kk = next(it)
        cw.append(jax.random.uniform(kk, (C, C, k), jnp.float32, -bound, bound))
        cb.append(jax.random.uniform(jax.random.fold_in(kk, 1), (C,), jnp.float32,
                                     -bound, bound))
    params["conv_w"], params["conv_b"] = cw, cb

    # SelfAttention: only index [1] of Wqs/Wks/Wvs is used by the reference
    # forward (its indexing bug), which we reproduce.
    kq, kk_, kv, ko = jax.random.split(next(it), 4)
    xav = math.sqrt(6.0 / (C + dh))
    wqs = [jax.random.uniform(jax.random.fold_in(kq, i), (C, dh), jnp.float32, -xav, xav)
           for i in range(num_header)]
    wks = [jax.random.uniform(jax.random.fold_in(kk_, i), (C, dh), jnp.float32, -xav, xav)
           for i in range(num_header)]
    wvs = [jax.random.uniform(jax.random.fold_in(kv, i), (C, dh), jnp.float32, -xav, xav)
           for i in range(num_header)]
    params["Wq"], params["Wk"], params["Wv"] = wqs[1], wks[1], wvs[1]
    kbound = math.sqrt(6.0 / C)
    params["Wo"] = jax.random.uniform(ko, (C, C), jnp.float32, -kbound, kbound)

    # Linear(C, C)
    kfw, kfb = jax.random.split(next(it))
    fb = 1.0 / math.sqrt(C)
    params["fc_w"] = jax.random.uniform(kfw, (C, C), jnp.float32, -fb, fb)
    params["fc_b"] = jax.random.uniform(kfb, (C,), jnp.float32, -fb, fb)
    return params


# ----------------------------------------------------------------------------
# Pure-JAX float32 reference (for correctness check)
# ----------------------------------------------------------------------------

def ref_forward(x, params, *, conv_num, k, num_header):
    B, C, L = x.shape
    scale = 1.0 / math.sqrt(C / num_header)
    out = x + params["pe"][:L].T[None]

    def ln(z, w, b):
        mean = z.mean(axis=(1, 2), keepdims=True)
        var = jnp.square(z - mean).mean(axis=(1, 2), keepdims=True)
        zn = (z - mean) / jnp.sqrt(var + 1e-5)
        return jnp.matmul(zn, w[:L, :L]) + b[0, :L]

    res = ln(out, params["ln_begin_w"], params["ln_begin_b"])
    for i in range(conv_num):
        conv = jax.lax.conv_general_dilated(
            out, params["conv_w"][i], (1,), [(k // 2, k // 2)],
            dimension_numbers=("NCH", "OIH", "NCH"))
        out = jnp.maximum(conv + params["conv_b"][i][None, :, None], 0.0) + res
        res = out
        out = ln(out, params["ln_w"][i], params["ln_b"][i])
    xt = jnp.transpose(out, (0, 2, 1))
    q = xt @ params["Wq"]
    kk = xt @ params["Wk"]
    v = xt @ params["Wv"]
    s = jnp.einsum("bld,bmd->blm", q, kk) * scale
    p = jax.nn.softmax(s, axis=-1)
    h = p @ v
    head = jnp.concatenate([h] * num_header, axis=2)
    att = jnp.transpose(head @ params["Wo"], (0, 2, 1))
    out = att + res
    res = out
    out = ln(out, params["ln_end_w"], params["ln_end_b"])
    y = jnp.einsum("bcl,oc->bol", out, params["fc_w"]) + params["fc_b"][None, :, None]
    out = jnp.maximum(y, 0.0) + res
    return out


if __name__ == "__main__":
    # Small but lane-dense shapes: L = 128 fills the 128-lane vregs.
    # B=4 with batch_tile=2 -> grid=(2,): two batch elements per step (256
    # MXU lanes / 64 LN rows per matmul) and two grid steps for megacore.
    B, C, L = 4, 32, 128
    conv_num, k, num_header = 2, 5, 2
    batch_tile = 2

    key = jax.random.PRNGKey(0)
    pkey, xkey = jax.random.split(key)
    params = init_params(pkey, C, k, conv_num, num_header)
    x = jax.random.normal(xkey, (B, C, L), jnp.float32)

    prep = prepare_params(params, L, conv_num=conv_num, num_header=num_header,
                          compute_dtype=jnp.bfloat16)

    @jax.jit
    def fwd(xx, pp):
        return encoder_block_forward(xx, pp, conv_num=conv_num, k=k,
                                     num_header=num_header,
                                     batch_tile=batch_tile,
                                     compute_dtype=jnp.bfloat16)

    out = jax.block_until_ready(fwd(x, prep))
    ref = jax.block_until_ready(
        ref_forward(x, params, conv_num=conv_num, k=k, num_header=num_header))

    assert out.shape == (B, C, L)
    # Kernel uses bf16 MXU operands (f32 accumulation); reference is full f32,
    # so allow bf16-level drift while still catching any structural error.
    rel_l2 = float(jnp.sqrt(jnp.sum((out - ref) ** 2) / jnp.sum(ref ** 2)))
    max_err = float(jnp.max(jnp.abs(out - ref)))
    assert rel_l2 < 3e-2, (rel_l2, max_err)
    assert max_err < 1.5e-1, (rel_l2, max_err)
    print("KERNEL_OK")
</pallas_src>

<mosaic_0001>
module attributes {stable_mosaic.version = 11 : i64} {
  func.func @kernel(%arg0: i32, %arg1: memref<2x32x128xf32, #tpu.memory_space<vmem>>, %arg2: memref<32x128xf32, #tpu.memory_space<vmem>>, %arg3: memref<4x128x128xbf16, #tpu.memory_space<vmem>>, %arg4: memref<4x1x128xf32, #tpu.memory_space<vmem>>, %arg5: memref<2x32x160xbf16, #tpu.memory_space<vmem>>, %arg6: memref<2x32x1xf32, #tpu.memory_space<vmem>>, %arg7: memref<32x64xbf16, #tpu.memory_space<vmem>>, %arg8: memref<32x32xbf16, #tpu.memory_space<vmem>>, %arg9: memref<32x1xf32, #tpu.memory_space<vmem>>, %arg10: memref<2x32x128xf32, #tpu.memory_space<vmem>>) attributes {dimension_semantics = [#tpu.dimension_semantics<parallel>], iteration_bounds = array<i64: 2>, scalar_prefetch = 0 : i64, scratch_operands = 0 : i64, tpu.core_type = #tpu.core_type<tc>, window_params = [{transform_indices = @transform_0, window_bounds = array<i64: 2, 32, 128>}, {pipeline_mode = #tpu.pipeline_mode<synchronous>, transform_indices = @transform_1, window_bounds = array<i64: 32, 128>}, {pipeline_mode = #tpu.pipeline_mode<synchronous>, transform_indices = @transform_2, window_bounds = array<i64: 4, 128, 128>}, {pipeline_mode = #tpu.pipeline_mode<synchronous>, transform_indices = @transform_3, window_bounds = array<i64: 4, 1, 128>}, {pipeline_mode = #tpu.pipeline_mode<synchronous>, transform_indices = @transform_4, window_bounds = array<i64: 2, 32, 160>}, {pipeline_mode = #tpu.pipeline_mode<synchronous>, transform_indices = @transform_5, window_bounds = array<i64: 2, 32, 1>}, {pipeline_mode = #tpu.pipeline_mode<synchronous>, transform_indices = @transform_6, window_bounds = array<i64: 32, 64>}, {pipeline_mode = #tpu.pipeline_mode<synchronous>, transform_indices = @transform_7, window_bounds = array<i64: 32, 32>}, {pipeline_mode = #tpu.pipeline_mode<synchronous>, transform_indices = @transform_8, window_bounds = array<i64: 32, 1>}, {transform_indices = @transform_9, window_bounds = array<i64: 2, 32, 128>}]} {
    %c0 = arith.constant 0 : index
    %c0_0 = arith.constant 0 : index
    %c0_1 = arith.constant 0 : index
    %0 = vector.load %arg1[%c0, %c0_0, %c0_1] : memref<2x32x128xf32, #tpu.memory_space<vmem>>, vector<1x32x128xf32>
    %1 = vector.shape_cast %0 : vector<1x32x128xf32> to vector<32x128xf32>
    %c0_2 = arith.constant 0 : index
    %c0_3 = arith.constant 0 : index
    %2 = vector.load %arg2[%c0_2, %c0_3] : memref<32x128xf32, #tpu.memory_space<vmem>>, vector<32x128xf32>
    %3 = arith.addf %1, %2 : vector<32x128xf32>
    %c1 = arith.constant 1 : index
    %c0_4 = arith.constant 0 : index
    %c0_5 = arith.constant 0 : index
    %4 = vector.load %arg1[%c1, %c0_4, %c0_5] : memref<2x32x128xf32, #tpu.memory_space<vmem>>, vector<1x32x128xf32>
    %5 = vector.shape_cast %4 : vector<1x32x128xf32> to vector<32x128xf32>
    %c0_6 = arith.constant 0 : index
    %c0_7 = arith.constant 0 : index
    %6 = vector.load %arg2[%c0_6, %c0_7] : memref<32x128xf32, #tpu.memory_space<vmem>>, vector<32x128xf32>
    %7 = arith.addf %5, %6 : vector<32x128xf32>
    %8 = vector.shape_cast %3 : vector<32x128xf32> to vector<1x32x128xf32>
    %cst = arith.constant dense<0.000000e+00> : vector<1xf32>
    %9 = vector.multi_reduction <add>, %8, %cst [1, 2] : vector<1x32x128xf32> to vector<1xf32>
    %10 = vector.shape_cast %9 : vector<1xf32> to vector<1x1x1xf32>
    %11 = vector.extract %10[0, 0, 0] : f32 from vector<1x1x1xf32>
    %cst_8 = arith.constant 2.44140625E-4 : f32
    %12 = arith.mulf %11, %cst_8 : f32
    %13 = arith.mulf %3, %3 : vector<32x128xf32>
    %14 = vector.shape_cast %13 : vector<32x128xf32> to vector<1x32x128xf32>
    %cst_9 = arith.constant dense<0.000000e+00> : vector<1xf32>
    %15 = vector.multi_reduction <add>, %14, %cst_9 [1, 2] : vector<1x32x128xf32> to vector<1xf32>
    %16 = vector.shape_cast %15 : vector<1xf32> to vector<1x1x1xf32>
    %17 = vector.extract %16[0, 0, 0] : f32 from vector<1x1x1xf32>
    %cst_10 = arith.constant 2.44140625E-4 : f32
    %18 = arith.mulf %17, %cst_10 : f32
    %19 = arith.mulf %12, %12 : f32
    %20 = arith.subf %18, %19 : f32
    %21 = vector.broadcast %12 : f32 to vector<32x128xf32>
    %22 = arith.subf %3, %21 : vector<32x128xf32>
    %cst_11 = arith.constant 9.99999974E-6 : f32
    %23 = arith.addf %20, %cst_11 : f32
    %24 = math.rsqrt %23 : f32
    %25 = vector.broadcast %24 : f32 to vector<32x128xf32>
    %26 = arith.mulf %22, %25 : vector<32x128xf32>
    %27 = vector.shape_cast %7 : vector<32x128xf32> to vector<1x32x128xf32>
    %cst_12 = arith.constant dense<0.000000e+00> : vector<1xf32>
    %28 = vector.multi_reduction <add>, %27, %cst_12 [1, 2] : vector<1x32x128xf32> to vector<1xf32>
    %29 = vector.shape_cast %28 : vector<1xf32> to vector<1x1x1xf32>
    %30 = vector.extract %29[0, 0, 0] : f32 from vector<1x1x1xf32>
    %cst_13 = arith.constant 2.44140625E-4 : f32
    %31 = arith.mulf %30, %cst_13 : f32
    %32 = arith.mulf %7, %7 : vector<32x128xf32>
    %33 = vector.shape_cast %32 : vector<32x128xf32> to vector<1x32x128xf32>
    %cst_14 = arith.constant dense<0.000000e+00> : vector<1xf32>
    %34 = vector.multi_reduction <add>, %33, %cst_14 [1, 2] : vector<1x32x128xf32> to vector<1xf32>
    %35 = vector.shape_cast %34 : vector<1xf32> to vector<1x1x1xf32>
    %36 = vector.extract %35[0, 0, 0] : f32 from vector<1x1x1xf32>
    %cst_15 = arith.constant 2.44140625E-4 : f32
    %37 = arith.mulf %36, %cst_15 : f32
    %38 = arith.mulf %31, %31 : f32
    %39 = arith.subf %37, %38 : f32
    %40 = vector.broadcast %31 : f32 to vector<32x128xf32>
    %41 = arith.subf %7, %40 : vector<32x128xf32>
    %cst_16 = arith.constant 9.99999974E-6 : f32
    %42 = arith.addf %39, %cst_16 : f32
    %43 = math.rsqrt %42 : f32
    %44 = vector.broadcast %43 : f32 to vector<32x128xf32>
    %45 = arith.mulf %41, %44 : vector<32x128xf32>
    %46 = tpu.concatenate %26, %45 in 0 : vector<32x128xf32>, vector<32x128xf32> -> vector<64x128xf32>
    %47 = arith.truncf %46 : vector<64x128xf32> to vector<64x128xbf16>
    %c0_17 = arith.constant 0 : index
    %c0_18 = arith.constant 0 : index
    %c0_19 = arith.constant 0 : index
    %48 = vector.load %arg3[%c0_17, %c0_18, %c0_19] : memref<4x128x128xbf16, #tpu.memory_space<vmem>>, vector<1x128x128xbf16>
    %49 = vector.shape_cast %48 : vector<1x128x128xbf16> to vector<128x128xbf16>
    %cst_20 = arith.constant dense<0.000000e+00> : vector<64x128xf32>
    %50 = tpu.matmul %47, %49, %cst_20 {dimension_numbers = #tpu.dot_dimension_numbers<[1], [0], [0], [1], [0, 0, 1, 1], [], []>} : vector<64x128xbf16>, vector<128x128xbf16>, vector<64x128xf32> -> vector<64x128xf32>
    %c0_21 = arith.constant 0 : index
    %c0_22 = arith.constant 0 : index
    %c0_23 = arith.constant 0 : index
    %51 = vector.load %arg4[%c0_21, %c0_22, %c0_23] : memref<4x1x128xf32, #tpu.memory_space<vmem>>, vector<1x1x128xf32>
    %52 = vector.shape_cast %51 : vector<1x1x128xf32> to vector<1x128xf32>
    %53 = vector.broadcast %52 : vector<1x128xf32> to vector<64x128xf32>
    %54 = arith.addf %50, %53 : vector<64x128xf32>
    %55 = vector.extract_strided_slice %54 {offsets = [0, 0], sizes = [32, 128], strides = [1, 1]} : vector<64x128xf32> to vector<32x128xf32>
    %56 = vector.extract_strided_slice %54 {offsets = [32, 0], sizes = [32, 128], strides = [1, 1]} : vector<64x128xf32> to vector<32x128xf32>
    %57 = arith.truncf %3 : vector<32x128xf32> to vector<32x128xbf16>
    %cst_24 = arith.constant 0.000000e+00 : bf16
    %58 = vector.broadcast %cst_24 : bf16 to vector<32x2xbf16>
    %59 = vector.extract_strided_slice %57 {offsets = [0, 0], sizes = [32, 126], strides = [1, 1]} : vector<32x128xbf16> to vector<32x126xbf16>
    %60 = tpu.concatenate %58, %59 in 1 : vector<32x2xbf16>, vector<32x126xbf16> -> vector<32x128xbf16>
    %cst_25 = arith.constant 0.000000e+00 : bf16
    %61 = vector.broadcast %cst_25 : bf16 to vector<32x1xbf16>
    %62 = vector.extract_strided_slice %57 {offsets = [0, 0], sizes = [32, 127], strides = [1, 1]} : vector<32x128xbf16> to vector<32x127xbf16>
    %63 = tpu.concatenate %61, %62 in 1 : vector<32x1xbf16>, vector<32x127xbf16> -> vector<32x128xbf16>
    %64 = vector.extract_strided_slice %57 {offsets = [0, 1], sizes = [32, 127], strides = [1, 1]} : vector<32x128xbf16> to vector<32x127xbf16>
    %cst_26 = arith.constant 0.000000e+00 : bf16
    %65 = vector.broadcast %cst_26 : bf16 to vector<32x1xbf16>
    %66 = tpu.concatenate %64, %65 in 1 : vector<32x127xbf16>, vector<32x1xbf16> -> vector<32x128xbf16>
    %67 = vector.extract_strided_slice %57 {offsets = [0, 2], sizes = [32, 126], strides = [1, 1]} : vector<32x128xbf16> to vector<32x126xbf16>
    %cst_27 = arith.constant 0.000000e+00 : bf16
    %68 = vector.broadcast %cst_27 : bf16 to vector<32x2xbf16>
    %69 = tpu.concatenate %67, %68 in 1 : vector<32x126xbf16>, vector<32x2xbf16> -> vector<32x128xbf16>
    %70 = tpu.concatenate %60, %63, %57, %66, %69 in 0 : vector<32x128xbf16>, vector<32x128xbf16>, vector<32x128xbf16>, vector<32x128xbf16>, vector<32x128xbf16> -> vector<160x128xbf16>
    %71 = arith.truncf %7 : vector<32x128xf32> to vector<32x128xbf16>
    %cst_28 = arith.constant 0.000000e+00 : bf16
    %72 = vector.broadcast %cst_28 : bf16 to vector<32x2xbf16>
    %73 = vector.extract_strided_slice %71 {offsets = [0, 0], sizes = [32, 126], strides = [1, 1]} : vector<32x128xbf16> to vector<32x126xbf16>
    %74 = tpu.concatenate %72, %73 in 1 : vector<32x2xbf16>, vector<32x126xbf16> -> vector<32x128xbf16>
    %cst_29 = arith.constant 0.000000e+00 : bf16
    %75 = vector.broadcast %cst_29 : bf16 to vector<32x1xbf16>
    %76 = vector.extract_strided_slice %71 {offsets = [0, 0], sizes = [32, 127], strides = [1, 1]} : vector<32x128xbf16> to vector<32x127xbf16>
    %77 = tpu.concatenate %75, %76 in 1 : vector<32x1xbf16>, vector<32x127xbf16> -> vector<32x128xbf16>
    %78 = vector.extract_strided_slice %71 {offsets = [0, 1], sizes = [32, 127], strides = [1, 1]} : vector<32x128xbf16> to vector<32x127xbf16>
    %cst_30 = arith.constant 0.000000e+00 : bf16
    %79 = vector.broadcast %cst_30 : bf16 to vector<32x1xbf16>
    %80 = tpu.concatenate %78, %79 in 1 : vector<32x127xbf16>, vector<32x1xbf16> -> vector<32x128xbf16>
    %81 = vector.extract_strided_slice %71 {offsets = [0, 2], sizes = [32, 126], strides = [1, 1]} : vector<32x128xbf16> to vector<32x126xbf16>
    %cst_31 = arith.constant 0.000000e+00 : bf16
    %82 = vector.broadcast %cst_31 : bf16 to vector<32x2xbf16>
    %83 = tpu.concatenate %81, %82 in 1 : vector<32x126xbf16>, vector<32x2xbf16> -> vector<32x128xbf16>
    %84 = tpu.concatenate %74, %77, %71, %80, %83 in 0 : vector<32x128xbf16>, vector<32x128xbf16>, vector<32x128xbf16>, vector<32x128xbf16>, vector<32x128xbf16> -> vector<160x128xbf16>
    %85 = tpu.concatenate %70, %84 in 1 : vector<160x128xbf16>, vector<160x128xbf16> -> vector<160x256xbf16>
    %c0_32 = arith.constant 0 : index
    %c0_33 = arith.constant 0 : index
    %c0_34 = arith.constant 0 : index
    %86 = vector.load %arg5[%c0_32, %c0_33, %c0_34] : memref<2x32x160xbf16, #tpu.memory_space<vmem>>, vector<1x32x160xbf16>
    %87 = vector.shape_cast %86 : vector<1x32x160xbf16> to vector<32x160xbf16>
    %cst_35 = arith.constant dense<0.000000e+00> : vector<32x256xf32>
    %88 = tpu.matmul %87, %85, %cst_35 {dimension_numbers = #tpu.dot_dimension_numbers<[1], [0], [0], [1], [0, 0, 1, 1], [], []>} : vector<32x160xbf16>, vector<160x256xbf16>, vector<32x256xf32> -> vector<32x256xf32>
    %c0_36 = arith.constant 0 : index
    %c0_37 = arith.constant 0 : index
    %c0_38 = arith.constant 0 : index
    %89 = vector.load %arg6[%c0_36, %c0_37, %c0_38] : memref<2x32x1xf32, #tpu.memory_space<vmem>>, vector<1x32x1xf32>
    %90 = vector.shape_cast %89 : vector<1x32x1xf32> to vector<32x1xf32>
    %91 = vector.broadcast %90 : vector<32x1xf32> to vector<32x256xf32>
    %92 = arith.addf %88, %91 : vector<32x256xf32>
    %93 = vector.extract_strided_slice %92 {offsets = [0, 0], sizes = [32, 128], strides = [1, 1]} : vector<32x256xf32> to vector<32x128xf32>
    %cst_39 = arith.constant 0.000000e+00 : f32
    %94 = vector.broadcast %cst_39 : f32 to vector<32x128xf32>
    %95 = arith.maximumf %93, %94 : vector<32x128xf32>
    %96 = arith.addf %95, %55 : vector<32x128xf32>
    %97 = vector.extract_strided_slice %92 {offsets = [0, 128], sizes = [32, 128], strides = [1, 1]} : vector<32x256xf32> to vector<32x128xf32>
    %cst_40 = arith.constant 0.000000e+00 : f32
    %98 = vector.broadcast %cst_40 : f32 to vector<32x128xf32>
    %99 = arith.maximumf %97, %98 : vector<32x128xf32>
    %100 = arith.addf %99, %56 : vector<32x128xf32>
    %101 = vector.shape_cast %96 : vector<32x128xf32> to vector<1x32x128xf32>
    %cst_41 = arith.constant dense<0.000000e+00> : vector<1xf32>
    %102 = vector.multi_reduction <add>, %101, %cst_41 [1, 2] : vector<1x32x128xf32> to vector<1xf32>
    %103 = vector.shape_cast %102 : vector<1xf32> to vector<1x1x1xf32>
    %104 = vector.extract %103[0, 0, 0] : f32 from vector<1x1x1xf32>
    %cst_42 = arith.constant 2.44140625E-4 : f32
    %105 = arith.mulf %104, %cst_42 : f32
    %106 = arith.mulf %96, %96 : vector<32x128xf32>
    %107 = vector.shape_cast %106 : vector<32x128xf32> to vector<1x32x128xf32>
    %cst_43 = arith.constant dense<0.000000e+00> : vector<1xf32>
    %108 = vector.multi_reduction <add>, %107, %cst_43 [1, 2] : vector<1x32x128xf32> to vector<1xf32>
    %109 = vector.shape_cast %108 : vector<1xf32> to vector<1x1x1xf32>
    %110 = vector.extract %109[0, 0, 0] : f32 from vector<1x1x1xf32>
    %cst_44 = arith.constant 2.44140625E-4 : f32
    %111 = arith.mulf %110, %cst_44 : f32
    %112 = arith.mulf %105, %105 : f32
    %113 = arith.subf %111, %112 : f32
    %114 = vector.broadcast %105 : f32 to vector<32x128xf32>
    %115 = arith.subf %96, %114 : vector<32x128xf32>
    %cst_45 = arith.constant 9.99999974E-6 : f32
    %116 = arith.addf %113, %cst_45 : f32
    %117 = math.rsqrt %116 : f32
    %118 = vector.broadcast %117 : f32 to vector<32x128xf32>
    %119 = arith.mulf %115, %118 : vector<32x128xf32>
    %120 = vector.shape_cast %100 : vector<32x128xf32> to vector<1x32x128xf32>
    %cst_46 = arith.constant dense<0.000000e+00> : vector<1xf32>
    %121 = vector.multi_reduction <add>, %120, %cst_46 [1, 2] : vector<1x32x128xf32> to vector<1xf32>
    %122 = vector.shape_cast %121 : vector<1xf32> to vector<1x1x1xf32>
    %123 = vector.extract %122[0, 0, 0] : f32 from vector<1x1x1xf32>
    %cst_47 = arith.constant 2.44140625E-4 : f32
    %124 = arith.mulf %123, %cst_47 : f32
    %125 = arith.mulf %100, %100 : vector<32x128xf32>
    %126 = vector.shape_cast %125 : vector<32x128xf32> to vector<1x32x128xf32>
    %cst_48 = arith.constant dense<0.000000e+00> : vector<1xf32>
    %127 = vector.multi_reduction <add>, %126, %cst_48 [1, 2] : vector<1x32x128xf32> to vector<1xf32>
    %128 = vector.shape_cast %127 : vector<1xf32> to vector<1x1x1xf32>
    %129 = vector.extract %128[0, 0, 0] : f32 from vector<1x1x1xf32>
    %cst_49 = arith.constant 2.44140625E-4 : f32
    %130 = arith.mulf %129, %cst_49 : f32
    %131 = arith.mulf %124, %124 : f32
    %132 = arith.subf %130, %131 : f32
    %133 = vector.broadcast %124 : f32 to vector<32x128xf32>
    %134 = arith.subf %100, %133 : vector<32x128xf32>
    %cst_50 = arith.constant 9.99999974E-6 : f32
    %135 = arith.addf %132, %cst_50 : f32
    %136 = math.rsqrt %135 : f32
    %137 = vector.broadcast %136 : f32 to vector<32x128xf32>
    %138 = arith.mulf %134, %137 : vector<32x128xf32>
    %139 = tpu.concatenate %119, %138 in 0 : vector<32x128xf32>, vector<32x128xf32> -> vector<64x128xf32>
    %140 = arith.truncf %139 : vector<64x128xf32> to vector<64x128xbf16>
    %c1_51 = arith.constant 1 : index
    %c0_52 = arith.constant 0 : index
    %c0_53 = arith.constant 0 : index
    %141 = vector.load %arg3[%c1_51, %c0_52, %c0_53] : memref<4x128x128xbf16, #tpu.memory_space<vmem>>, vector<1x128x128xbf16>
    %142 = vector.shape_cast %141 : vector<1x128x128xbf16> to vector<128x128xbf16>
    %cst_54 = arith.constant dense<0.000000e+00> : vector<64x128xf32>
    %143 = tpu.matmul %140, %142, %cst_54 {dimension_numbers = #tpu.dot_dimension_numbers<[1], [0], [0], [1], [0, 0, 1, 1], [], []>} : vector<64x128xbf16>, vector<128x128xbf16>, vector<64x128xf32> -> vector<64x128xf32>
    %c1_55 = arith.constant 1 : index
    %c0_56 = arith.constant 0 : index
    %c0_57 = arith.constant 0 : index
    %144 = vector.load %arg4[%c1_55, %c0_56, %c0_57] : memref<4x1x128xf32, #tpu.memory_space<vmem>>, vector<1x1x128xf32>
    %145 = vector.shape_cast %144 : vector<1x1x128xf32> to vector<1x128xf32>
    %146 = vector.broadcast %145 : vector<1x128xf32> to vector<64x128xf32>
    %147 = arith.addf %143, %146 : vector<64x128xf32>
    %148 = vector.extract_strided_slice %147 {offsets = [0, 0], sizes = [32, 128], strides = [1, 1]} : vector<64x128xf32> to vector<32x128xf32>
    %149 = vector.extract_strided_slice %147 {offsets = [32, 0], sizes = [32, 128], strides = [1, 1]} : vector<64x128xf32> to vector<32x128xf32>
    %150 = arith.truncf %148 : vector<32x128xf32> to vector<32x128xbf16>
    %cst_58 = arith.constant 0.000000e+00 : bf16
    %151 = vector.broadcast %cst_58 : bf16 to vector<32x2xbf16>
    %152 = vector.extract_strided_slice %150 {offsets = [0, 0], sizes = [32, 126], strides = [1, 1]} : vector<32x128xbf16> to vector<32x126xbf16>
    %153 = tpu.concatenate %151, %152 in 1 : vector<32x2xbf16>, vector<32x126xbf16> -> vector<32x128xbf16>
    %cst_59 = arith.constant 0.000000e+00 : bf16
    %154 = vector.broadcast %cst_59 : bf16 to vector<32x1xbf16>
    %155 = vector.extract_strided_slice %150 {offsets = [0, 0], sizes = [32, 127], strides = [1, 1]} : vector<32x128xbf16> to vector<32x127xbf16>
    %156 = tpu.concatenate %154, %155 in 1 : vector<32x1xbf16>, vector<32x127xbf16> -> vector<32x128xbf16>
    %157 = vector.extract_strided_slice %150 {offsets = [0, 1], sizes = [32, 127], strides = [1, 1]} : vector<32x128xbf16> to vector<32x127xbf16>
    %cst_60 = arith.constant 0.000000e+00 : bf16
    %158 = vector.broadcast %cst_60 : bf16 to vector<32x1xbf16>
    %159 = tpu.concatenate %157, %158 in 1 : vector<32x127xbf16>, vector<32x1xbf16> -> vector<32x128xbf16>
    %160 = vector.extract_strided_slice %150 {offsets = [0, 2], sizes = [32, 126], strides = [1, 1]} : vector<32x128xbf16> to vector<32x126xbf16>
    %cst_61 = arith.constant 0.000000e+00 : bf16
    %161 = vector.broadcast %cst_61 : bf16 to vector<32x2xbf16>
    %162 = tpu.concatenate %160, %161 in 1 : vector<32x126xbf16>, vector<32x2xbf16> -> vector<32x128xbf16>
    %163 = tpu.concatenate %153, %156, %150, %159, %162 in 0 : vector<32x128xbf16>, vector<32x128xbf16>, vector<32x128xbf16>, vector<32x128xbf16>, vector<32x128xbf16> -> vector<160x128xbf16>
    %164 = arith.truncf %149 : vector<32x128xf32> to vector<32x128xbf16>
    %cst_62 = arith.constant 0.000000e+00 : bf16
    %165 = vector.broadcast %cst_62 : bf16 to vector<32x2xbf16>
    %166 = vector.extract_strided_slice %164 {offsets = [0, 0], sizes = [32, 126], strides = [1, 1]} : vector<32x128xbf16> to vector<32x126xbf16>
    %167 = tpu.concatenate %165, %166 in 1 : vector<32x2xbf16>, vector<32x126xbf16> -> vector<32x128xbf16>
    %cst_63 = arith.constant 0.000000e+00 : bf16
    %168 = vector.broadcast %cst_63 : bf16 to vector<32x1xbf16>
    %169 = vector.extract_strided_slice %164 {offsets = [0, 0], sizes = [32, 127], strides = [1, 1]} : vector<32x128xbf16> to vector<32x127xbf16>
    %170 = tpu.concatenate %168, %169 in 1 : vector<32x1xbf16>, vector<32x127xbf16> -> vector<32x128xbf16>
    %171 = vector.extract_strided_slice %164 {offsets = [0, 1], sizes = [32, 127], strides = [1, 1]} : vector<32x128xbf16> to vector<32x127xbf16>
    %cst_64 = arith.constant 0.000000e+00 : bf16
    %172 = vector.broadcast %cst_64 : bf16 to vector<32x1xbf16>
    %173 = tpu.concatenate %171, %172 in 1 : vector<32x127xbf16>, vector<32x1xbf16> -> vector<32x128xbf16>
    %174 = vector.extract_strided_slice %164 {offsets = [0, 2], sizes = [32, 126], strides = [1, 1]} : vector<32x128xbf16> to vector<32x126xbf16>
    %cst_65 = arith.constant 0.000000e+00 : bf16
    %175 = vector.broadcast %cst_65 : bf16 to vector<32x2xbf16>
    %176 = tpu.concatenate %174, %175 in 1 : vector<32x126xbf16>, vector<32x2xbf16> -> vector<32x128xbf16>
    %177 = tpu.concatenate %167, %170, %164, %173, %176 in 0 : vector<32x128xbf16>, vector<32x128xbf16>, vector<32x128xbf16>, vector<32x128xbf16>, vector<32x128xbf16> -> vector<160x128xbf16>
    %178 = tpu.concatenate %163, %177 in 1 : vector<160x128xbf16>, vector<160x128xbf16> -> vector<160x256xbf16>
    %c1_66 = arith.constant 1 : index
    %c0_67 = arith.constant 0 : index
    %c0_68 = arith.constant 0 : index
    %179 = vector.load %arg5[%c1_66, %c0_67, %c0_68] : memref<2x32x160xbf16, #tpu.memory_space<vmem>>, vector<1x32x160xbf16>
    %180 = vector.shape_cast %179 : vector<1x32x160xbf16> to vector<32x160xbf16>
    %cst_69 = arith.constant dense<0.000000e+00> : vector<32x256xf32>
    %181 = tpu.matmul %180, %178, %cst_69 {dimension_numbers = #tpu.dot_dimension_numbers<[1], [0], [0], [1], [0, 0, 1, 1], [], []>} : vector<32x160xbf16>, vector<160x256xbf16>, vector<32x256xf32> -> vector<32x256xf32>
    %c1_70 = arith.constant 1 : index
    %c0_71 = arith.constant 0 : index
    %c0_72 = arith.constant 0 : index
    %182 = vector.load %arg6[%c1_70, %c0_71, %c0_72] : memref<2x32x1xf32, #tpu.memory_space<vmem>>, vector<1x32x1xf32>
    %183 = vector.shape_cast %182 : vector<1x32x1xf32> to vector<32x1xf32>
    %184 = vector.broadcast %183 : vector<32x1xf32> to vector<32x256xf32>
    %185 = arith.addf %181, %184 : vector<32x256xf32>
    %186 = vector.extract_strided_slice %185 {offsets = [0, 0], sizes = [32, 128], strides = [1, 1]} : vector<32x256xf32> to vector<32x128xf32>
    %cst_73 = arith.constant 0.000000e+00 : f32
    %187 = vector.broadcast %cst_73 : f32 to vector<32x128xf32>
    %188 = arith.maximumf %186, %187 : vector<32x128xf32>
    %189 = arith.addf %188, %96 : vector<32x128xf32>
    %190 = vector.extract_strided_slice %185 {offsets = [0, 128], sizes = [32, 128], strides = [1, 1]} : vector<32x256xf32> to vector<32x128xf32>
    %cst_74 = arith.constant 0.000000e+00 : f32
    %191 = vector.broadcast %cst_74 : f32 to vector<32x128xf32>
    %192 = arith.maximumf %190, %191 : vector<32x128xf32>
    %193 = arith.addf %192, %100 : vector<32x128xf32>
    %194 = vector.shape_cast %189 : vector<32x128xf32> to vector<1x32x128xf32>
    %cst_75 = arith.constant dense<0.000000e+00> : vector<1xf32>
    %195 = vector.multi_reduction <add>, %194, %cst_75 [1, 2] : vector<1x32x128xf32> to vector<1xf32>
    %196 = vector.shape_cast %195 : vector<1xf32> to vector<1x1x1xf32>
    %197 = vector.extract %196[0, 0, 0] : f32 from vector<1x1x1xf32>
    %cst_76 = arith.constant 2.44140625E-4 : f32
    %198 = arith.mulf %197, %cst_76 : f32
    %199 = arith.mulf %189, %189 : vector<32x128xf32>
    %200 = vector.shape_cast %199 : vector<32x128xf32> to vector<1x32x128xf32>
    %cst_77 = arith.constant dense<0.000000e+00> : vector<1xf32>
    %201 = vector.multi_reduction <add>, %200, %cst_77 [1, 2] : vector<1x32x128xf32> to vector<1xf32>
    %202 = vector.shape_cast %201 : vector<1xf32> to vector<1x1x1xf32>
    %203 = vector.extract %202[0, 0, 0] : f32 from vector<1x1x1xf32>
    %cst_78 = arith.constant 2.44140625E-4 : f32
    %204 = arith.mulf %203, %cst_78 : f32
    %205 = arith.mulf %198, %198 : f32
    %206 = arith.subf %204, %205 : f32
    %207 = vector.broadcast %198 : f32 to vector<32x128xf32>
    %208 = arith.subf %189, %207 : vector<32x128xf32>
    %cst_79 = arith.constant 9.99999974E-6 : f32
    %209 = arith.addf %206, %cst_79 : f32
    %210 = math.rsqrt %209 : f32
    %211 = vector.broadcast %210 : f32 to vector<32x128xf32>
    %212 = arith.mulf %208, %211 : vector<32x128xf32>
    %213 = vector.shape_cast %193 : vector<32x128xf32> to vector<1x32x128xf32>
    %cst_80 = arith.constant dense<0.000000e+00> : vector<1xf32>
    %214 = vector.multi_reduction <add>, %213, %cst_80 [1, 2] : vector<1x32x128xf32> to vector<1xf32>
    %215 = vector.shape_cast %214 : vector<1xf32> to vector<1x1x1xf32>
    %216 = vector.extract %215[0, 0, 0] : f32 from vector<1x1x1xf32>
    %cst_81 = arith.constant 2.44140625E-4 : f32
    %217 = arith.mulf %216, %cst_81 : f32
    %218 = arith.mulf %193, %193 : vector<32x128xf32>
    %219 = vector.shape_cast %218 : vector<32x128xf32> to vector<1x32x128xf32>
    %cst_82 = arith.constant dense<0.000000e+00> : vector<1xf32>
    %220 = vector.multi_reduction <add>, %219, %cst_82 [1, 2] : vector<1x32x128xf32> to vector<1xf32>
    %221 = vector.shape_cast %220 : vector<1xf32> to vector<1x1x1xf32>
    %222 = vector.extract %221[0, 0, 0] : f32 from vector<1x1x1xf32>
    %cst_83 = arith.constant 2.44140625E-4 : f32
    %223 = arith.mulf %222, %cst_83 : f32
    %224 = arith.mulf %217, %217 : f32
    %225 = arith.subf %223, %224 : f32
    %226 = vector.broadcast %217 : f32 to vector<32x128xf32>
    %227 = arith.subf %193, %226 : vector<32x128xf32>
    %cst_84 = arith.constant 9.99999974E-6 : f32
    %228 = arith.addf %225, %cst_84 : f32
    %229 = math.rsqrt %228 : f32
    %230 = vector.broadcast %229 : f32 to vector<32x128xf32>
    %231 = arith.mulf %227, %230 : vector<32x128xf32>
    %232 = tpu.concatenate %212, %231 in 0 : vector<32x128xf32>, vector<32x128xf32> -> vector<64x128xf32>
    %233 = arith.truncf %232 : vector<64x128xf32> to vector<64x128xbf16>
    %c2 = arith.constant 2 : index
    %c0_85 = arith.constant 0 : index
    %c0_86 = arith.constant 0 : index
    %234 = vector.load %arg3[%c2, %c0_85, %c0_86] : memref<4x128x128xbf16, #tpu.memory_space<vmem>>, vector<1x128x128xbf16>
    %235 = vector.shape_cast %234 : vector<1x128x128xbf16> to vector<128x128xbf16>
    %cst_87 = arith.constant dense<0.000000e+00> : vector<64x128xf32>
    %236 = tpu.matmul %233, %235, %cst_87 {dimension_numbers = #tpu.dot_dimension_numbers<[1], [0], [0], [1], [0, 0, 1, 1], [], []>} : vector<64x128xbf16>, vector<128x128xbf16>, vector<64x128xf32> -> vector<64x128xf32>
    %c2_88 = arith.constant 2 : index
    %c0_89 = arith.constant 0 : index
    %c0_90 = arith.constant 0 : index
    %237 = vector.load %arg4[%c2_88, %c0_89, %c0_90] : memref<4x1x128xf32, #tpu.memory_space<vmem>>, vector<1x1x128xf32>
    %238 = vector.shape_cast %237 : vector<1x1x128xf32> to vector<1x128xf32>
    %239 = vector.broadcast %238 : vector<1x128xf32> to vector<64x128xf32>
    %240 = arith.addf %236, %239 : vector<64x128xf32>
    %241 = vector.extract_strided_slice %240 {offsets = [0, 0], sizes = [32, 128], strides = [1, 1]} : vector<64x128xf32> to vector<32x128xf32>
    %242 = vector.extract_strided_slice %240 {offsets = [32, 0], sizes = [32, 128], strides = [1, 1]} : vector<64x128xf32> to vector<32x128xf32>
    %243 = arith.truncf %241 : vector<32x128xf32> to vector<32x128xbf16>
    %244 = arith.truncf %242 : vector<32x128xf32> to vector<32x128xbf16>
    %245 = tpu.concatenate %243, %244 in 1 : vector<32x128xbf16>, vector<32x128xbf16> -> vector<32x256xbf16>
    %c0_91 = arith.constant 0 : index
    %c0_92 = arith.constant 0 : index
    %246 = vector.load %arg7[%c0_91, %c0_92] : memref<32x64xbf16, #tpu.memory_space<vmem>>, vector<32x64xbf16>
    %cst_93 = arith.constant dense<0.000000e+00> : vector<64x256xf32>
    %247 = tpu.matmul %246, %245, %cst_93 {dimension_numbers = #tpu.dot_dimension_numbers<[0], [0], [1], [1], [0, 1, 1, 1], [], []>} : vector<32x64xbf16>, vector<32x256xbf16>, vector<64x256xf32> -> vector<64x256xf32>
    %248 = vector.extract_strided_slice %247 {offsets = [0, 0], sizes = [64, 128], strides = [1, 1]} : vector<64x256xf32> to vector<64x128xf32>
    %249 = vector.extract_strided_slice %248 {offsets = [0, 0], sizes = [16, 128], strides = [1, 1]} : vector<64x128xf32> to vector<16x128xf32>
    %250 = arith.truncf %249 : vector<16x128xf32> to vector<16x128xbf16>
    %251 = vector.extract_strided_slice %248 {offsets = [16, 0], sizes = [16, 128], strides = [1, 1]} : vector<64x128xf32> to vector<16x128xf32>
    %252 = arith.truncf %251 : vector<16x128xf32> to vector<16x128xbf16>
    %253 = vector.extract_strided_slice %248 {offsets = [32, 0], sizes = [32, 128], strides = [1, 1]} : vector<64x128xf32> to vector<32x128xf32>
    %cst_94 = arith.constant dense<0.000000e+00> : vector<128x128xf32>
    %254 = tpu.matmul %250, %252, %cst_94 {dimension_numbers = #tpu.dot_dimension_numbers<[0], [0], [1], [1], [0, 1, 1, 1], [], []>} : vector<16x128xbf16>, vector<16x128xbf16>, vector<128x128xf32> -> vector<128x128xf32>
    %cst_95 = arith.constant dense<0xFF800000> : vector<128xf32>
    %255 = vector.multi_reduction <maximumf>, %254, %cst_95 [1] : vector<128x128xf32> to vector<128xf32>
    %256 = vector.shape_cast %255 : vector<128xf32> to vector<128x1xf32>
    %257 = vector.broadcast %256 : vector<128x1xf32> to vector<128x128xf32>
    %258 = arith.subf %254, %257 : vector<128x128xf32>
    %259 = math.exp %258 : vector<128x128xf32>
    %cst_96 = arith.constant dense<0.000000e+00> : vector<128xf32>
    %260 = vector.multi_reduction <add>, %259, %cst_96 [1] : vector<128x128xf32> to vector<128xf32>
    %261 = vector.shape_cast %260 : vector<128xf32> to vector<128x1xf32>
    %262 = tpu.reciprocal %261 {approx = true} : vector<128x1xf32> -> vector<128x1xf32>
    %263 = vector.broadcast %262 : vector<128x1xf32> to vector<128x128xf32>
    %264 = arith.mulf %259, %263 : vector<128x128xf32>
    %265 = arith.truncf %253 : vector<32x128xf32> to vector<32x128xbf16>
    %266 = arith.truncf %264 : vector<128x128xf32> to vector<128x128xbf16>
    %cst_97 = arith.constant dense<0.000000e+00> : vector<32x128xf32>
    %267 = tpu.matmul %265, %266, %cst_97 {dimension_numbers = #tpu.dot_dimension_numbers<[1], [1], [0], [0], [0, 0, 1, 0], [], []>} : vector<32x128xbf16>, vector<128x128xbf16>, vector<32x128xf32> -> vector<32x128xf32>
    %268 = arith.addf %267, %189 : vector<32x128xf32>
    %269 = vector.extract_strided_slice %247 {offsets = [0, 128], sizes = [64, 128], strides = [1, 1]} : vector<64x256xf32> to vector<64x128xf32>
    %270 = vector.extract_strided_slice %269 {offsets = [0, 0], sizes = [16, 128], strides = [1, 1]} : vector<64x128xf32> to vector<16x128xf32>
    %271 = arith.truncf %270 : vector<16x128xf32> to vector<16x128xbf16>
    %272 = vector.extract_strided_slice %269 {offsets = [16, 0], sizes = [16, 128], strides = [1, 1]} : vector<64x128xf32> to vector<16x128xf32>
    %273 = arith.truncf %272 : vector<16x128xf32> to vector<16x128xbf16>
    %274 = vector.extract_strided_slice %269 {offsets = [32, 0], sizes = [32, 128], strides = [1, 1]} : vector<64x128xf32> to vector<32x128xf32>
    %cst_98 = arith.constant dense<0.000000e+00> : vector<128x128xf32>
    %275 = tpu.matmul %271, %273, %cst_98 {dimension_numbers = #tpu.dot_dimension_numbers<[0], [0], [1], [1], [0, 1, 1, 1], [], []>} : vector<16x128xbf16>, vector<16x128xbf16>, vector<128x128xf32> -> vector<128x128xf32>
    %cst_99 = arith.constant dense<0xFF800000> : vector<128xf32>
    %276 = vector.multi_reduction <maximumf>, %275, %cst_99 [1] : vector<128x128xf32> to vector<128xf32>
    %277 = vector.shape_cast %276 : vector<128xf32> to vector<128x1xf32>
    %278 = vector.broadcast %277 : vector<128x1xf32> to vector<128x128xf32>
    %279 = arith.subf %275, %278 : vector<128x128xf32>
    %280 = math.exp %279 : vector<128x128xf32>
    %cst_100 = arith.constant dense<0.000000e+00> : vector<128xf32>
    %281 = vector.multi_reduction <add>, %280, %cst_100 [1] : vector<128x128xf32> to vector<128xf32>
    %282 = vector.shape_cast %281 : vector<128xf32> to vector<128x1xf32>
    %283 = tpu.reciprocal %282 {approx = true} : vector<128x1xf32> -> vector<128x1xf32>
    %284 = vector.broadcast %283 : vector<128x1xf32> to vector<128x128xf32>
    %285 = arith.mulf %280, %284 : vector<128x128xf32>
    %286 = arith.truncf %274 : vector<32x128xf32> to vector<32x128xbf16>
    %287 = arith.truncf %285 : vector<128x128xf32> to vector<128x128xbf16>
    %cst_101 = arith.constant dense<0.000000e+00> : vector<32x128xf32>
    %288 = tpu.matmul %286, %287, %cst_101 {dimension_numbers = #tpu.dot_dimension_numbers<[1], [1], [0], [0], [0, 0, 1, 0], [], []>} : vector<32x128xbf16>, vector<128x128xbf16>, vector<32x128xf32> -> vector<32x128xf32>
    %289 = arith.addf %288, %193 : vector<32x128xf32>
    %290 = vector.shape_cast %268 : vector<32x128xf32> to vector<1x32x128xf32>
    %cst_102 = arith.constant dense<0.000000e+00> : vector<1xf32>
    %291 = vector.multi_reduction <add>, %290, %cst_102 [1, 2] : vector<1x32x128xf32> to vector<1xf32>
    %292 = vector.shape_cast %291 : vector<1xf32> to vector<1x1x1xf32>
    %293 = vector.extract %292[0, 0, 0] : f32 from vector<1x1x1xf32>
    %cst_103 = arith.constant 2.44140625E-4 : f32
    %294 = arith.mulf %293, %cst_103 : f32
    %295 = arith.mulf %268, %268 : vector<32x128xf32>
    %296 = vector.shape_cast %295 : vector<32x128xf32> to vector<1x32x128xf32>
    %cst_104 = arith.constant dense<0.000000e+00> : vector<1xf32>
    %297 = vector.multi_reduction <add>, %296, %cst_104 [1, 2] : vector<1x32x128xf32> to vector<1xf32>
    %298 = vector.shape_cast %297 : vector<1xf32> to vector<1x1x1xf32>
    %299 = vector.extract %298[0, 0, 0] : f32 from vector<1x1x1xf32>
    %cst_105 = arith.constant 2.44140625E-4 : f32
    %300 = arith.mulf %299, %cst_105 : f32
    %301 = arith.mulf %294, %294 : f32
    %302 = arith.subf %300, %301 : f32
    %303 = vector.broadcast %294 : f32 to vector<32x128xf32>
    %304 = arith.subf %268, %303 : vector<32x128xf32>
    %cst_106 = arith.constant 9.99999974E-6 : f32
    %305 = arith.addf %302, %cst_106 : f32
    %306 = math.rsqrt %305 : f32
    %307 = vector.broadcast %306 : f32 to vector<32x128xf32>
    %308 = arith.mulf %304, %307 : vector<32x128xf32>
    %309 = vector.shape_cast %289 : vector<32x128xf32> to vector<1x32x128xf32>
    %cst_107 = arith.constant dense<0.000000e+00> : vector<1xf32>
    %310 = vector.multi_reduction <add>, %309, %cst_107 [1, 2] : vector<1x32x128xf32> to vector<1xf32>
    %311 = vector.shape_cast %310 : vector<1xf32> to vector<1x1x1xf32>
    %312 = vector.extract %311[0, 0, 0] : f32 from vector<1x1x1xf32>
    %cst_108 = arith.constant 2.44140625E-4 : f32
    %313 = arith.mulf %312, %cst_108 : f32
    %314 = arith.mulf %289, %289 : vector<32x128xf32>
    %315 = vector.shape_cast %314 : vector<32x128xf32> to vector<1x32x128xf32>
    %cst_109 = arith.constant dense<0.000000e+00> : vector<1xf32>
    %316 = vector.multi_reduction <add>, %315, %cst_109 [1, 2] : vector<1x32x128xf32> to vector<1xf32>
    %317 = vector.shape_cast %316 : vector<1xf32> to vector<1x1x1xf32>
    %318 = vector.extract %317[0, 0, 0] : f32 from vector<1x1x1xf32>
    %cst_110 = arith.constant 2.44140625E-4 : f32
    %319 = arith.mulf %318, %cst_110 : f32
    %320 = arith.mulf %313, %313 : f32
    %321 = arith.subf %319, %320 : f32
    %322 = vector.broadcast %313 : f32 to vector<32x128xf32>
    %323 = arith.subf %289, %322 : vector<32x128xf32>
    %cst_111 = arith.constant 9.99999974E-6 : f32
    %324 = arith.addf %321, %cst_111 : f32
    %325 = math.rsqrt %324 : f32
    %326 = vector.broadcast %325 : f32 to vector<32x128xf32>
    %327 = arith.mulf %323, %326 : vector<32x128xf32>
    %328 = tpu.concatenate %308, %327 in 0 : vector<32x128xf32>, vector<32x128xf32> -> vector<64x128xf32>
    %329 = arith.truncf %328 : vector<64x128xf32> to vector<64x128xbf16>
    %c3 = arith.constant 3 : index
    %c0_112 = arith.constant 0 : index
    %c0_113 = arith.constant 0 : index
    %330 = vector.load %arg3[%c3, %c0_112, %c0_113] : memref<4x128x128xbf16, #tpu.memory_space<vmem>>, vector<1x128x128xbf16>
    %331 = vector.shape_cast %330 : vector<1x128x128xbf16> to vector<128x128xbf16>
    %cst_114 = arith.constant dense<0.000000e+00> : vector<64x128xf32>
    %332 = tpu.matmul %329, %331, %cst_114 {dimension_numbers = #tpu.dot_dimension_numbers<[1], [0], [0], [1], [0, 0, 1, 1], [], []>} : vector<64x128xbf16>, vector<128x128xbf16>, vector<64x128xf32> -> vector<64x128xf32>
    %c3_115 = arith.constant 3 : index
    %c0_116 = arith.constant 0 : index
    %c0_117 = arith.constant 0 : index
    %333 = vector.load %arg4[%c3_115, %c0_116, %c0_117] : memref<4x1x128xf32, #tpu.memory_space<vmem>>, vector<1x1x128xf32>
    %334 = vector.shape_cast %333 : vector<1x1x128xf32> to vector<1x128xf32>
    %335 = vector.broadcast %334 : vector<1x128xf32> to vector<64x128xf32>
    %336 = arith.addf %332, %335 : vector<64x128xf32>
    %337 = vector.extract_strided_slice %336 {offsets = [0, 0], sizes = [32, 128], strides = [1, 1]} : vector<64x128xf32> to vector<32x128xf32>
    %338 = vector.extract_strided_slice %336 {offsets = [32, 0], sizes = [32, 128], strides = [1, 1]} : vector<64x128xf32> to vector<32x128xf32>
    %c0_118 = arith.constant 0 : index
    %c0_119 = arith.constant 0 : index
    %339 = vector.load %arg8[%c0_118, %c0_119] : memref<32x32xbf16, #tpu.memory_space<vmem>>, vector<32x32xbf16>
    %340 = arith.truncf %337 : vector<32x128xf32> to vector<32x128xbf16>
    %341 = arith.truncf %338 : vector<32x128xf32> to vector<32x128xbf16>
    %342 = tpu.concatenate %340, %341 in 1 : vector<32x128xbf16>, vector<32x128xbf16> -> vector<32x256xbf16>
    %cst_120 = arith.constant dense<0.000000e+00> : vector<32x256xf32>
    %343 = tpu.matmul %339, %342, %cst_120 {dimension_numbers = #tpu.dot_dimension_numbers<[1], [0], [0], [1], [0, 0, 1, 1], [], []>} : vector<32x32xbf16>, vector<32x256xbf16>, vector<32x256xf32> -> vector<32x256xf32>
    %c0_121 = arith.constant 0 : index
    %c0_122 = arith.constant 0 : index
    %344 = vector.load %arg9[%c0_121, %c0_122] : memref<32x1xf32, #tpu.memory_space<vmem>>, vector<32x1xf32>
    %345 = vector.broadcast %344 : vector<32x1xf32> to vector<32x256xf32>
    %346 = arith.addf %343, %345 : vector<32x256xf32>
    %347 = vector.extract_strided_slice %346 {offsets = [0, 0], sizes = [32, 128], strides = [1, 1]} : vector<32x256xf32> to vector<32x128xf32>
    %cst_123 = arith.constant 0.000000e+00 : f32
    %348 = vector.broadcast %cst_123 : f32 to vector<32x128xf32>
    %349 = arith.maximumf %347, %348 : vector<32x128xf32>
    %350 = arith.addf %349, %268 : vector<32x128xf32>
    %c0_124 = arith.constant 0 : index
    %c0_125 = arith.constant 0 : index
    %c0_126 = arith.constant 0 : index
    %351 = vector.load %arg10[%c0_124, %c0_125, %c0_126] : memref<2x32x128xf32, #tpu.memory_space<vmem>>, vector<1x32x128xf32>
    %352 = vector.shape_cast %351 : vector<1x32x128xf32> to vector<32x128xf32>
    %353 = vector.shape_cast %350 : vector<32x128xf32> to vector<1x32x128xf32>
    tpu.vector_store %arg10[%c0_124, %c0_125, %c0_126], %353 {strides = array<i32>} : memref<2x32x128xf32, #tpu.memory_space<vmem>>, vector<1x32x128xf32>,
    %354 = vector.extract_strided_slice %346 {offsets = [0, 128], sizes = [32, 128], strides = [1, 1]} : vector<32x256xf32> to vector<32x128xf32>
    %cst_127 = arith.constant 0.000000e+00 : f32
    %355 = vector.broadcast %cst_127 : f32 to vector<32x128xf32>
    %356 = arith.maximumf %354, %355 : vector<32x128xf32>
    %357 = arith.addf %356, %289 : vector<32x128xf32>
    %c1_128 = arith.constant 1 : index
    %c0_129 = arith.constant 0 : index
    %c0_130 = arith.constant 0 : index
    %358 = vector.load %arg10[%c1_128, %c0_129, %c0_130] : memref<2x32x128xf32, #tpu.memory_space<vmem>>, vector<1x32x128xf32>
    %359 = vector.shape_cast %358 : vector<1x32x128xf32> to vector<32x128xf32>
    %360 = vector.shape_cast %357 : vector<32x128xf32> to vector<1x32x128xf32>
    tpu.vector_store %arg10[%c1_128, %c0_129, %c0_130], %360 {strides = array<i32>} : memref<2x32x128xf32, #tpu.memory_space<vmem>>, vector<1x32x128xf32>,
    return
  }
  func.func @transform_0(%arg0: i32) -> (i32, i32, i32) {
    %c0_i32 = arith.constant 0 : i32
    %c0_i32_0 = arith.constant 0 : i32
    %c0_i32_1 = arith.constant 0 : i32
    return %arg0, %c0_i32, %c0_i32_0 : i32, i32, i32
  }
  func.func @transform_1(%arg0: i32) -> (i32, i32) {
    %c0_i32 = arith.constant 0 : i32
    %c0_i32_0 = arith.constant 0 : i32
    %c0_i32_1 = arith.constant 0 : i32
    return %c0_i32, %c0_i32_0 : i32, i32
  }
  func.func @transform_2(%arg0: i32) -> (i32, i32, i32) {
    %c0_i32 = arith.constant 0 : i32
    %c0_i32_0 = arith.constant 0 : i32
    %c0_i32_1 = arith.constant 0 : i32
    %c0_i32_2 = arith.constant 0 : i32
    return %c0_i32, %c0_i32_0, %c0_i32_1 : i32, i32, i32
  }
  func.func @transform_3(%arg0: i32) -> (i32, i32, i32) {
    %c0_i32 = arith.constant 0 : i32
    %c0_i32_0 = arith.constant 0 : i32
    %c0_i32_1 = arith.constant 0 : i32
    %c0_i32_2 = arith.constant 0 : i32
    return %c0_i32, %c0_i32_0, %c0_i32_1 : i32, i32, i32
  }
  func.func @transform_4(%arg0: i32) -> (i32, i32, i32) {
    %c0_i32 = arith.constant 0 : i32
    %c0_i32_0 = arith.constant 0 : i32
    %c0_i32_1 = arith.constant 0 : i32
    %c0_i32_2 = arith.constant 0 : i32
    return %c0_i32, %c0_i32_0, %c0_i32_1 : i32, i32, i32
  }
  func.func @transform_5(%arg0: i32) -> (i32, i32, i32) {
    %c0_i32 = arith.constant 0 : i32
    %c0_i32_0 = arith.constant 0 : i32
    %c0_i32_1 = arith.constant 0 : i32
    %c0_i32_2 = arith.constant 0 : i32
    return %c0_i32, %c0_i32_0, %c0_i32_1 : i32, i32, i32
  }
  func.func @transform_6(%arg0: i32) -> (i32, i32) {
    %c0_i32 = arith.constant 0 : i32
    %c0_i32_0 = arith.constant 0 : i32
    %c0_i32_1 = arith.constant 0 : i32
    return %c0_i32, %c0_i32_0 : i32, i32
  }
  func.func @transform_7(%arg0: i32) -> (i32, i32) {
    %c0_i32 = arith.constant 0 : i32
    %c0_i32_0 = arith.constant 0 : i32
    %c0_i32_1 = arith.constant 0 : i32
    return %c0_i32, %c0_i32_0 : i32, i32
  }
  func.func @transform_8(%arg0: i32) -> (i32, i32) {
    %c0_i32 = arith.constant 0 : i32
    %c0_i32_0 = arith.constant 0 : i32
    %c0_i32_1 = arith.constant 0 : i32
    return %c0_i32, %c0_i32_0 : i32, i32
  }
  func.func @transform_9(%arg0: i32) -> (i32, i32, i32) {
    %c0_i32 = arith.constant 0 : i32
    %c0_i32_0 = arith.constant 0 : i32
    %c0_i32_1 = arith.constant 0 : i32
    return %arg0, %c0_i32, %c0_i32_0 : i32, i32, i32
  }
}

</mosaic_0001>

<llo_original>
// kernel: fwd.1
$region0: #{fwd.1}
  #allocation0 [shape = 'u32[]', space=smem, size = 0x4, offset = 0x4, fixed_abs, tag = 'smem constant byte address 0x4 - core index']
  #allocation1 [shape = 'u32[144,128]{1,0:T(1,128)}', space=vmem, size = 0x12000, scoped, tag = 'internal scratch']
  %s0 = inlined_call_operand.hbm [shape: f32[4,32,128], index: 0, kind: input, shape index: {}]
  %s1 = inlined_call_operand.vmem [shape: f32[32,128], index: 1, kind: input, shape index: {}]
  %s2 = inlined_call_operand.hbm [shape: bf16[4,128,128], index: 2, kind: input, shape index: {}]
  %s3 = inlined_call_operand.hbm [shape: f32[4,1,128], index: 3, kind: input, shape index: {}]
  %s4 = inlined_call_operand.vmem [shape: bf16[2,32,160], index: 4, kind: input, shape index: {}]
  %s5 = inlined_call_operand.vmem [shape: f32[2,32,1], index: 5, kind: input, shape index: {}]
  %s6 = inlined_call_operand.vmem [shape: bf16[32,64], index: 6, kind: input, shape index: {}]
  %s7 = inlined_call_operand.hbm [shape: bf16[32,32], index: 7, kind: input, shape index: {}]
  %s8 = inlined_call_operand.vmem [shape: f32[32,1], index: 8, kind: input, shape index: {}]
  %s9 = inlined_call_operand.hbm [shape: f32[4,32,128], index: 9, kind: output, shape index: {}]
  %s10 = sld [smem:[#allocation0]]
  $region85: #{fwd.1} parent=0
    _
  %s12 = ssub.s32 1, %s10
  %s13 = scalar_select 0, %s12, %s10
  $region1: #{fwd.1} parent=0
    #allocation2 [shape = 'u8[65536]{0}', space=vmem, size = 0x10000, scoped, tag = 'input window, operand 0']
    #allocation3 [shape = 's32[2]{0}', space=sflag, size = 0x8, scoped, tag = 'scoped memory for fwd.1']
    #allocation4 [shape = 's32[2]{0}', space=sflag, size = 0x8, scoped, tag = 'scoped memory for fwd.1']
    #allocation5 [shape = 'u8[131072]{0}', space=vmem, size = 0x20000, scoped, tag = 'input window, operand 2, single buffered']
    #allocation6 [shape = 's32[1]{0}', space=sflag, size = 0x4, scoped, tag = 'scoped memory for fwd.1']
    #allocation7 [shape = 'u8[2048]{0}', space=vmem, size = 0x800, scoped, tag = 'input window, operand 3, single buffered']
    #allocation8 [shape = 'u8[8192]{0}', space=vmem, size = 0x2000, scoped, tag = 'input window, operand 7, single buffered']
    #allocation9 [shape = 's32[1]{0}', space=sflag, size = 0x4, scoped, tag = 'scoped memory for fwd.1']
    #allocation10 [shape = 'u8[65536]{0}', space=vmem, size = 0x10000, scoped, tag = 'output window, operand 0']
    %14 = vsyncpa [#allocation3], 0
    %s15 = scalar_lea.sflag [#allocation3], 1
    %16 = vsyncpa %s15, 0
    %17 = vsyncpa [#allocation6], 0
    %18 = vsyncpa [#allocation9], 0
    %19 = vsyncpa [#allocation4], 0
    %s20 = scalar_lea.sflag [#allocation4], 1
    %21 = vsyncpa %s20, 0
    loop: start=0, step=1, limit=4
    $region2: #{fwd.1} parent=1 // loop_pre_header
      _
    $region3: #{fwd.1} parent=1 // loop_header
      %s23 = sphi 0, %s27
      %p24 = scmp.ge.s32.totalorder %s23, 4
      %s33 = sphi 0, %s35
      %s36 = sphi 0, %s33
      %s37 = sphi 0, %s36
      %s53 = sphi 0, %s37
      %s57 = sphi 0, %s57
      %s59 = sphi 0, %s57
      %s60 = sphi 0, %s59
      %s74 = sphi 0, %s60
      %s78 = sphi 0, %s78
      %s80 = sphi 0, %s78
      %s81 = sphi 0, %s80
      %s95 = sphi 0, %s81
      %s99 = sphi 0, %s99
      %s101 = sphi 0, %s99
      %s102 = sphi 0, %s101
      %s116 = sphi 0, %s102
      %s120 = sphi 0, %s120
      %s122 = sphi 0, %s120
      %s123 = sphi 0, %s122
      %s137 = sphi 0, %s123
      %s141 = sphi 0, %s141
      %s143 = sphi 0, %s141
      %s144 = sphi 0, %s143
      %s158 = sphi 0, %s144
      %s162 = sphi 0, %s162
      %s164 = sphi 0, %s162
      %s165 = sphi 0, %s164
      %s179 = sphi 0, %s165
      %s183 = sphi 0, %s183
      %s185 = sphi 0, %s183
      %s186 = sphi 0, %s185
      %s200 = sphi 0, %s186
      %s204 = sphi 0, %s204
      %s206 = sphi 0, %s204
      %s207 = sphi 0, %s206
      %s221 = sphi 0, %s207
      %s227 = sphi 0, %s229
      %s230 = sphi 0, %s227
      %s231 = sphi 0, %s230
      %s247 = sphi 0, %s231
    $region4: #{fwd.1} parent=1 // loop_header_branch
      %26 = sbr.rel (%p24) target = $region8
    $region5: #{fwd.1} parent=1 // loop_body
      %s28 = ssub.s32 %s23, 1
      %s29 = ssub.s32 %s23, 2
      %s30 = sadd.s32 %s23, 1
      %s31 = ssub.s32 %s23, %s30
      %p32 = scmp.eq.s32.totalorder %s31, 0
      %s34 = sadd.s32 %s33, 1
      %s35 = scalar_select %p32, %s33, %s34
      %p38 = pneg %p32
      %p39 = scmp.eq.s32.totalorder %s23, 1
      %p40 = por %p38, %p39
      %p41 = scmp.ne.s32.totalorder %s33, %s36
      %p42 = scmp.eq.s32.totalorder %s23, 0
      %p43 = por %p41, %p42
      %p44 = scmp.ne.s32.totalorder %s33, %s36
      %p45 = scmp.eq.s32.totalorder %s28, 1
      %p46 = por %p44, %p45
      %p47 = scmp.ne.s32.totalorder %s36, %s37
      %p48 = scmp.eq.s32.totalorder %s28, 0
      %p49 = por %p47, %p48
      %p50 = scmp.ne.s32.totalorder %s36, %s37
      %p51 = scmp.eq.s32.totalorder %s29, 1
      %p52 = por %p50, %p51
      %p54 = scmp.ne.s32.totalorder %s37, %s53
      %p55 = scmp.eq.s32.totalorder %s29, 0
      %p56 = por %p54, %p55
      %s58 = sadd.s32 %s57, 1
      %p61 = scmp.eq.s32.totalorder %s23, 1
      %p62 = scmp.ne.s32.totalorder %s57, %s59
      %p63 = scmp.eq.s32.totalorder %s23, 0
      %p64 = por %p62, %p63
      %p65 = scmp.ne.s32.totalorder %s57, %s59
      %p66 = scmp.eq.s32.totalorder %s28, 1
      %p67 = por %p65, %p66
      %p68 = scmp.ne.s32.totalorder %s59, %s60
      %p69 = scmp.eq.s32.totalorder %s28, 0
      %p70 = por %p68, %p69
      %p71 = scmp.ne.s32.totalorder %s59, %s60
      %p72 = scmp.eq.s32.totalorder %s29, 1
      %p73 = por %p71, %p72
      %p75 = scmp.ne.s32.totalorder %s60, %s74
      %p76 = scmp.eq.s32.totalorder %s29, 0
      %p77 = por %p75, %p76
      %s79 = sadd.s32 %s78, 1
      %p82 = scmp.eq.s32.totalorder %s23, 1
      %p83 = scmp.ne.s32.totalorder %s78, %s80
      %p84 = scmp.eq.s32.totalorder %s23, 0
      %p85 = por %p83, %p84
      %p86 = scmp.ne.s32.totalorder %s78, %s80
      %p87 = scmp.eq.s32.totalorder %s28, 1
      %p88 = por %p86, %p87
      %p89 = scmp.ne.s32.totalorder %s80, %s81
      %p90 = scmp.eq.s32.totalorder %s28, 0
      %p91 = por %p89, %p90
      %p92 = scmp.ne.s32.totalorder %s80, %s81
      %p93 = scmp.eq.s32.totalorder %s29, 1
      %p94 = por %p92, %p93
      %p96 = scmp.ne.s32.totalorder %s81, %s95
      %p97 = scmp.eq.s32.totalorder %s29, 0
      %p98 = por %p96, %p97
      %s100 = sadd.s32 %s99, 1
      %p103 = scmp.eq.s32.totalorder %s23, 1
      %p104 = scmp.ne.s32.totalorder %s99, %s101
      %p105 = scmp.eq.s32.totalorder %s23, 0
      %p106 = por %p104, %p105
      %p107 = scmp.ne.s32.totalorder %s99, %s101
      %p108 = scmp.eq.s32.totalorder %s28, 1
      %p109 = por %p107, %p108
      %p110 = scmp.ne.s32.totalorder %s101, %s102
      %p111 = scmp.eq.s32.totalorder %s28, 0
      %p112 = por %p110, %p111
      %p113 = scmp.ne.s32.totalorder %s101, %s102
      %p114 = scmp.eq.s32.totalorder %s29, 1
      %p115 = por %p113, %p114
      %p117 = scmp.ne.s32.totalorder %s102, %s116
      %p118 = scmp.eq.s32.totalorder %s29, 0
      %p119 = por %p117, %p118
      %s121 = sadd.s32 %s120, 1
      %p124 = scmp.eq.s32.totalorder %s23, 1
      %p125 = scmp.ne.s32.totalorder %s120, %s122
      %p126 = scmp.eq.s32.totalorder %s23, 0
      %p127 = por %p125, %p126
      %p128 = scmp.ne.s32.totalorder %s120, %s122
      %p129 = scmp.eq.s32.totalorder %s28, 1
      %p130 = por %p128, %p129
      %p131 = scmp.ne.s32.totalorder %s122, %s123
      %p132 = scmp.eq.s32.totalorder %s28, 0
      %p133 = por %p131, %p132
      %p134 = scmp.ne.s32.totalorder %s122, %s123
      %p135 = scmp.eq.s32.totalorder %s29, 1
      %p136 = por %p134, %p135
      %p138 = scmp.ne.s32.totalorder %s123, %s137
      %p139 = scmp.eq.s32.totalorder %s29, 0
      %p140 = por %p138, %p139
      %s142 = sadd.s32 %s141, 1
      %p145 = scmp.eq.s32.totalorder %s23, 1
      %p146 = scmp.ne.s32.totalorder %s141, %s143
      %p147 = scmp.eq.s32.totalorder %s23, 0
      %p148 = por %p146, %p147
      %p149 = scmp.ne.s32.totalorder %s141, %s143
      %p150 = scmp.eq.s32.totalorder %s28, 1
      %p151 = por %p149, %p150
      %p152 = scmp.ne.s32.totalorder %s143, %s144
      %p153 = scmp.eq.s32.totalorder %s28, 0
      %p154 = por %p152, %p153
      %p155 = scmp.ne.s32.totalorder %s143, %s144
      %p156 = scmp.eq.s32.totalorder %s29, 1
      %p157 = por %p155, %p156
      %p159 = scmp.ne.s32.totalorder %s144, %s158
      %p160 = scmp.eq.s32.totalorder %s29, 0
      %p161 = por %p159, %p160
      %s163 = sadd.s32 %s162, 1
      %p166 = scmp.eq.s32.totalorder %s23, 1
      %p167 = scmp.ne.s32.totalorder %s162, %s164
      %p168 = scmp.eq.s32.totalorder %s23, 0
      %p169 = por %p167, %p168
      %p170 = scmp.ne.s32.totalorder %s162, %s164
      %p171 = scmp.eq.s32.totalorder %s28, 1
      %p172 = por %p170, %p171
      %p173 = scmp.ne.s32.totalorder %s164, %s165
      %p174 = scmp.eq.s32.totalorder %s28, 0
      %p175 = por %p173, %p174
      %p176 = scmp.ne.s32.totalorder %s164, %s165
      %p177 = scmp.eq.s32.totalorder %s29, 1
      %p178 = por %p176, %p177
      %p180 = scmp.ne.s32.totalorder %s165, %s179
      %p181 = scmp.eq.s32.totalorder %s29, 0
      %p182 = por %p180, %p181
      %s184 = sadd.s32 %s183, 1
      %p187 = scmp.eq.s32.totalorder %s23, 1
      %p188 = scmp.ne.s32.totalorder %s183, %s185
      %p189 = scmp.eq.s32.totalorder %s23, 0
      %p190 = por %p188, %p189
      %p191 = scmp.ne.s32.totalorder %s183, %s185
      %p192 = scmp.eq.s32.totalorder %s28, 1
      %p193 = por %p191, %p192
      %p194 = scmp.ne.s32.totalorder %s185, %s186
      %p195 = scmp.eq.s32.totalorder %s28, 0
      %p196 = por %p194, %p195
      %p197 = scmp.ne.s32.totalorder %s185, %s186
      %p198 = scmp.eq.s32.totalorder %s29, 1
      %p199 = por %p197, %p198
      %p201 = scmp.ne.s32.totalorder %s186, %s200
      %p202 = scmp.eq.s32.totalorder %s29, 0
      %p203 = por %p201, %p202
      %s205 = sadd.s32 %s204, 1
      %p208 = scmp.eq.s32.totalorder %s23, 1
      %p209 = scmp.ne.s32.totalorder %s204, %s206
      %p210 = scmp.eq.s32.totalorder %s23, 0
      %p211 = por %p209, %p210
      %p212 = scmp.ne.s32.totalorder %s204, %s206
      %p213 = scmp.eq.s32.totalorder %s28, 1
      %p214 = por %p212, %p213
      %p215 = scmp.ne.s32.totalorder %s206, %s207
      %p216 = scmp.eq.s32.totalorder %s28, 0
      %p217 = por %p215, %p216
      %p218 = scmp.ne.s32.totalorder %s206, %s207
      %p219 = scmp.eq.s32.totalorder %s29, 1
      %p220 = por %p218, %p219
      %p222 = scmp.ne.s32.totalorder %s207, %s221
      %p223 = scmp.eq.s32.totalorder %s29, 0
      %p224 = por %p222, %p223
      %s225 = ssub.s32 %s23, %s30
      %p226 = scmp.eq.s32.totalorder %s225, 0
      %s228 = sadd.s32 %s227, 1
      %s229 = scalar_select %p226, %s227, %s228
      %p232 = pneg %p226
      %p233 = scmp.eq.s32.totalorder %s23, 1
      %p234 = por %p232, %p233
      %p235 = scmp.ne.s32.totalorder %s227, %s230
      %p236 = scmp.eq.s32.totalorder %s23, 0
      %p237 = por %p235, %p236
      %p238 = scmp.ne.s32.totalorder %s227, %s230
      %p239 = scmp.eq.s32.totalorder %s28, 1
      %p240 = por %p238, %p239
      %p241 = scmp.ne.s32.totalorder %s230, %s231
      %p242 = scmp.eq.s32.totalorder %s28, 0
      %p243 = por %p241, %p242
      %p244 = scmp.ne.s32.totalorder %s230, %s231
      %p245 = scmp.eq.s32.totalorder %s29, 1
      %p246 = por %p244, %p245
      %p248 = scmp.ne.s32.totalorder %s231, %s247
      %p249 = scmp.eq.s32.totalorder %s29, 0
      %p250 = por %p248, %p249
      %p251 = scmp.le.s32.totalorder 1, %s23
      %p252 = scmp.lt.s32.totalorder %s23, 3
      %p253 = pnand %p251, %p252
      %p254 = pneg %p253
      // Predicated region
      $region9: #{fwd.1} parent=5 // pred_check
        _
      $region10: #{fwd.1} parent=5 // pred_check_branch
        %256 = sbr.rel (%p253) target = $region12
      $region11: #{fwd.1} parent=5 // pred_region
        %s257 = ssub.s32 %s23, 1
        // Predicated region
        $region13: #{fwd.1} parent=11 // pred_check
          %p258 = pneg %p70
        $region14: #{fwd.1} parent=11 // pred_check_branch
          %260 = sbr.rel (%p258) target = $region16
        $region15: #{fwd.1} parent=11 // pred_region
          _
        $region16: #{fwd.1} parent=11 // pred_fallthru
          _
        // Predicated region
        $region17: #{fwd.1} parent=11 // pred_check
          %p261 = pneg %p91
        $region18: #{fwd.1} parent=11 // pred_check_branch
          %263 = sbr.rel (%p261) target = $region20
        $region19: #{fwd.1} parent=11 // pred_region
          %s265 = ssub.s32 4096, 4096
          %266 = vsyncadd [#allocation6], %s265
          %s267 = sshll.u32 [#allocation5], 4
          %s268 = int_to_ptr.vmem [resolvable:$true] %s267
          %273 = dma.hbm_to_vmem [thread:$0]  %s2, 4096, %s268, [#allocation6], 64, 64, 4
        $region20: #{fwd.1} parent=11 // pred_fallthru
          _
        // Predicated region
        $region21: #{fwd.1} parent=11 // pred_check
          %p274 = pneg %p112
        $region22: #{fwd.1} parent=11 // pred_check_branch
          %276 = sbr.rel (%p274) target = $region24
        $region23: #{fwd.1} parent=11 // pred_region
          %s278 = ssub.s32 64, 64
          %279 = vsyncadd [#allocation6], %s278
          %s280 = sshll.u32 [#allocation7], 4
          %s281 = int_to_ptr.vmem [resolvable:$true] %s280
          %286 = dma.hbm_to_vmem [thread:$0]  %s3, 64, %s281, [#allocation6], 16, 16, 1
        $region24: #{fwd.1} parent=11 // pred_fallthru
          _
        // Predicated region
        $region25: #{fwd.1} parent=11 // pred_check
          %p287 = pneg %p133
        $region26: #{fwd.1} parent=11 // pred_check_branch
          %289 = sbr.rel (%p287) target = $region28
        $region27: #{fwd.1} parent=11 // pred_region
          _
        $region28: #{fwd.1} parent=11 // pred_fallthru
          _
        // Predicated region
        $region29: #{fwd.1} parent=11 // pred_check
          %p290 = pneg %p154
        $region30: #{fwd.1} parent=11 // pred_check_branch
          %292 = sbr.rel (%p290) target = $region32
        $region31: #{fwd.1} parent=11 // pred_region
          _
        $region32: #{fwd.1} parent=11 // pred_fallthru
          _
        // Predicated region
        $region33: #{fwd.1} parent=11 // pred_check
          %p293 = pneg %p175
        $region34: #{fwd.1} parent=11 // pred_check_branch
          %295 = sbr.rel (%p293) target = $region36
        $region35: #{fwd.1} parent=11 // pred_region
          _
        $region36: #{fwd.1} parent=11 // pred_fallthru
          _
        // Predicated region
        $region37: #{fwd.1} parent=11 // pred_check
          %p296 = pneg %p196
        $region38: #{fwd.1} parent=11 // pred_check_branch
          %298 = sbr.rel (%p296) target = $region40
        $region39: #{fwd.1} parent=11 // pred_region
          %s300 = ssub.s32 256, 256
          %301 = vsyncadd [#allocation9], %s300
          %s302 = sshll.u32 [#allocation8], 4
          %s303 = int_to_ptr.vmem [resolvable:$true] %s302
          %308 = dma.hbm_to_vmem [thread:$0]  %s7, 256, %s303, [#allocation9], 64, 64, 4
        $region40: #{fwd.1} parent=11 // pred_fallthru
          _
        // Predicated region
        $region41: #{fwd.1} parent=11 // pred_check
          %p309 = pneg %p217
        $region42: #{fwd.1} parent=11 // pred_check_branch
          %311 = sbr.rel (%p309) target = $region44
        $region43: #{fwd.1} parent=11 // pred_region
          _
        $region44: #{fwd.1} parent=11 // pred_fallthru
          _
      $region12: #{fwd.1} parent=5 // pred_fallthru
        _
      %p312 = scmp.lt.s32.totalorder %s23, 2
      // Predicated region
      $region45: #{fwd.1} parent=5 // pred_check
        %p313 = pneg %p312
      $region46: #{fwd.1} parent=5 // pred_check_branch
        %315 = sbr.rel (%p313) target = $region48
      $region47: #{fwd.1} parent=5 // pred_region
        // Predicated region
        $region49: #{fwd.1} parent=47 // pred_check
          %p316 = pneg %p43
        $region50: #{fwd.1} parent=47 // pred_check_branch
          %318 = sbr.rel (%p316) target = $region52
        $region51: #{fwd.1} parent=47 // pred_region
          %s319 = sand.u32 %s33, 1
          %s320 = scalar_lea.sflag [#allocation3], %s319
          %s321 = sand.u32 %s33, 1
          %s322 = smul.addr %s321, 64
          %s323 = scalar_lea.vmem [#allocation2], %s322
          %s324 = smul.u32 2, %s23
          %s326 = ssub.s32 1024, 1024
          %327 = vsyncadd %s320, %s326
          %s328 = smul.addr %s324, 4
          %s329 = smul.addr %s328, 128
          %s330 = scalar_lea.hbm %s0, %s329
          %s331 = sshll.u32 %s323, 4
          %s332 = int_to_ptr.vmem [resolvable:$true] %s331
          %337 = dma.hbm_to_vmem [thread:$0]  %s330, 1024, %s332, %s320, 128, 128, 8
        $region52: #{fwd.1} parent=47 // pred_fallthru
          _
      $region48: #{fwd.1} parent=5 // pred_fallthru
        _
      %p338 = scmp.le.s32.totalorder 1, %s23
      %p339 = scmp.lt.s32.totalorder %s23, 3
      %p340 = pnand %p338, %p339
      %p341 = pneg %p340
      // Predicated region
      $region53: #{fwd.1} parent=5 // pred_check
        _
      $region54: #{fwd.1} parent=5 // pred_check_branch
        %343 = sbr.rel (%p340) target = $region56
      $region55: #{fwd.1} parent=5 // pred_region
        %s344 = ssub.s32 %s23, 1
        %s345 = sand.u32 %s36, 1
        %s346 = scalar_lea.sflag [#allocation3], %s345
        %s347 = sand.u32 %s36, 1
        %s348 = smul.addr %s347, 64
        %s349 = scalar_lea.vmem [#allocation2], %s348
        // Predicated region
        $region57: #{fwd.1} parent=55 // pred_check
          %p350 = pneg %p49
        $region58: #{fwd.1} parent=55 // pred_check_branch
          %352 = sbr.rel (%p350) target = $region60
        $region59: #{fwd.1} parent=55 // pred_region
          %353 = dma.done %s346, 1024
        $region60: #{fwd.1} parent=55 // pred_fallthru
          _
        // Predicated region
        $region61: #{fwd.1} parent=55 // pred_check
          %p354 = pneg %p91
        $region62: #{fwd.1} parent=55 // pred_check_branch
          %356 = sbr.rel (%p354) target = $region64
        $region63: #{fwd.1} parent=55 // pred_region
          %357 = dma.done [#allocation6], 4096
        $region64: #{fwd.1} parent=55 // pred_fallthru
          _
        // Predicated region
        $region65: #{fwd.1} parent=55 // pred_check
          %p358 = pneg %p112
        $region66: #{fwd.1} parent=55 // pred_check_branch
          %360 = sbr.rel (%p358) target = $region68
        $region67: #{fwd.1} parent=55 // pred_region
          %361 = dma.done [#allocation6], 64
        $region68: #{fwd.1} parent=55 // pred_fallthru
          _
        // Predicated region
        $region69: #{fwd.1} parent=55 // pred_check
          %p362 = pneg %p196
        $region70: #{fwd.1} parent=55 // pred_check_branch
          %364 = sbr.rel (%p362) target = $region72
        $region71: #{fwd.1} parent=55 // pred_region
          %365 = dma.done [#allocation9], 256
        $region72: #{fwd.1} parent=55 // pred_fallthru
          _
        %s366 = sand.u32 %s36, 1
        %s367 = scalar_lea.sflag [#allocation3], %s366
        %s368 = sand.u32 %s36, 1
        %s369 = smul.addr %s368, 64
        %s370 = scalar_lea.vmem [#allocation2], %s369
        %p371 = pneg %p49
        %p372 = pneg %p46
        %p373 = pneg %p70
        %p374 = pneg %p67
        %p375 = pneg %p91
        %p376 = pneg %p88
        %p377 = pneg %p112
        %p378 = pneg %p109
        %p379 = pneg %p133
        %p380 = pneg %p130
        %p381 = pneg %p154
        %p382 = pneg %p151
        %p383 = pneg %p175
        %p384 = pneg %p172
        %p385 = pneg %p196
        %p386 = pneg %p193
        %p387 = pneg %p217
        %p388 = pneg %p214
        %p389 = pneg %p243
        %p390 = pneg %p240
        %s391 = sand.u32 %s230, 1
        %s392 = scalar_lea.sflag [#allocation4], %s391
        %s393 = sand.u32 %s230, 1
        %s394 = smul.addr %s393, 64
        %s395 = scalar_lea.vmem [#allocation10], %s394
        %s396 = smul.u32 2, %s28
        %s397 = smul.u32 2, %s28
        %v399 = vld [vmem:[%s349] sm:$0xff]
        %v400 = vld [vmem:[%s349 + $0x8] sm:$0xff]
        %v401 = vld [vmem:[%s349 + $0x10] sm:$0xff]
        %v402 = vld [vmem:[%s349 + $0x18] sm:$0xff]
        %v403 = vld [vmem:[%s1] sm:$0xff]
        %v404 = vld [vmem:[%s1 + $0x8] sm:$0xff]
        %v405 = vld [vmem:[%s1 + $0x10] sm:$0xff]
        %v406 = vld [vmem:[%s1 + $0x18] sm:$0xff]
        %v407 = vadd.f32 %v399, %v403
        %v408 = vadd.f32 %v400, %v404
        %v409 = vadd.f32 %v401, %v405
        %v410 = vadd.f32 %v402, %v406
        %s411 = scalar_lea.vmem %s349, 32 [#allocation2]
        %v412 = vld [vmem:[%s411] sm:$0xff]
        %v413 = vld [vmem:[%s411 + $0x8] sm:$0xff]
        %v414 = vld [vmem:[%s411 + $0x10] sm:$0xff]
        %v415 = vld [vmem:[%s411 + $0x18] sm:$0xff]
        %v416 = vadd.f32 %v412, %v403
        %v417 = vadd.f32 %v413, %v404
        %v418 = vadd.f32 %v414, %v405
        %v419 = vadd.f32 %v415, %v406
        %v420 = vadd.f32 %v407, %v408
        %v421 = vadd.f32 %v420, %v409
        %v422 = vadd.f32 %v421, %v410
        %423 = vadd.xlane.f32.xlu0 %v422
        %v424 = vpop.xlane.xlu0 %423
        %v425 = vrot.slane %v424, 4
        %v426 = vadd.f32 %v424, %v425
        %v427 = vrot.slane %v426, 2
        %v428 = vadd.f32 %v426, %v427
        %v429 = vrot.slane %v428, 1
        %v430 = vadd.f32 %v428, %v429
        %s431 = vtos %v430
        %s432 = smul.f32 %s431, 0.00024414063
        %v433 = vmul.f32 %v407, %v407
        %v434 = vmul.f32 %v408, %v408
        %v435 = vmul.f32 %v409, %v409
        %v436 = vmul.f32 %v410, %v410
        %v437 = vadd.f32 %v433, %v434
        %v438 = vadd.f32 %v437, %v435
        %v439 = vadd.f32 %v438, %v436
        %440 = vadd.xlane.f32.xlu0 %v439
        %v441 = vpop.xlane.xlu0 %440
        %v442 = vrot.slane %v441, 4
        %v443 = vadd.f32 %v441, %v442
        %v444 = vrot.slane %v443, 2
        %v445 = vadd.f32 %v443, %v444
        %v446 = vrot.slane %v445, 1
        %v447 = vadd.f32 %v445, %v446
        %s448 = vtos %v447
        %s449 = smul.f32 %s448, 0.00024414063
        %s450 = smul.f32 %s432, %s432
        %s451 = ssub.f32 %s449, %s450
        %v452 = vstv %s432
        %v453 = vsub.f32 %v407, %v452
        %v454 = vsub.f32 %v408, %v452
        %v455 = vsub.f32 %v409, %v452
        %v456 = vsub.f32 %v410, %v452
        %s457 = sadd.f32 %s451, 1e-05
        %v458 = vstv %s457
        %v459 = vrsqrt.pop %v458
        %s460 = vtos %v459
        %v461 = vstv %s460
        %v462 = vmul.f32 %v453, %v461
        %v463 = vmul.f32 %v454, %v461
        %v464 = vmul.f32 %v455, %v461
        %v465 = vmul.f32 %v456, %v461
        %v466 = vadd.f32 %v416, %v417
        %v467 = vadd.f32 %v466, %v418
        %v468 = vadd.f32 %v467, %v419
        %469 = vadd.xlane.f32.xlu0 %v468
        %v470 = vpop.xlane.xlu0 %469
        %v471 = vrot.slane %v470, 4
        %v472 = vadd.f32 %v470, %v471
        %v473 = vrot.slane %v472, 2
        %v474 = vadd.f32 %v472, %v473
        %v475 = vrot.slane %v474, 1
        %v476 = vadd.f32 %v474, %v475
        %s477 = vtos %v476
        %s478 = smul.f32 %s477, 0.00024414063
        %v479 = vmul.f32 %v416, %v416
        %v480 = vmul.f32 %v417, %v417
        %v481 = vmul.f32 %v418, %v418
        %v482 = vmul.f32 %v419, %v419
        %v483 = vadd.f32 %v479, %v480
        %v484 = vadd.f32 %v483, %v481
        %v485 = vadd.f32 %v484, %v482
        %486 = vadd.xlane.f32.xlu0 %v485
        %v487 = vpop.xlane.xlu0 %486
        %v488 = vrot.slane %v487, 4
        %v489 = vadd.f32 %v487, %v488
        %v490 = vrot.slane %v489, 2
        %v491 = vadd.f32 %v489, %v490
        %v492 = vrot.slane %v491, 1
        %v493 = vadd.f32 %v491, %v492
        %s494 = vtos %v493
        %s495 = smul.f32 %s494, 0.00024414063
        %s496 = smul.f32 %s478, %s478
        %s497 = ssub.f32 %s495, %s496
        %v498 = vstv %s478
        %v499 = vsub.f32 %v416, %v498
        %v500 = vsub.f32 %v417, %v498
        %v501 = vsub.f32 %v418, %v498
        %v502 = vsub.f32 %v419, %v498
        %s503 = sadd.f32 %s497, 1e-05
        %v504 = vstv %s503
        %v505 = vrsqrt.pop %v504
        %s506 = vtos %v505
        %v507 = vstv %s506
        %v508 = vmul.f32 %v499, %v507
        %v509 = vmul.f32 %v500, %v507
        %v510 = vmul.f32 %v501, %v507
        %v511 = vmul.f32 %v502, %v507
        %v512 = vpack.c.bf16 %v463, %v462
        %v513 = vpack.c.bf16 %v465, %v464
        %v514 = vpack.c.bf16 %v509, %v508
        %v515 = vpack.c.bf16 %v511, %v510
        %v516 = vld [vmem:[#allocation5] sm:$0xf]
        %v517 = vld [vmem:[#allocation5 + $0x4] sm:$0xf]
        %v518 = vld [vmem:[#allocation5 + $0x8] sm:$0xf]
        %v519 = vld [vmem:[#allocation5 + $0xc] sm:$0xf]
        %v520 = vld [vmem:[#allocation5 + $0x10] sm:$0xf]
        %v521 = vld [vmem:[#allocation5 + $0x14] sm:$0xf]
        %v522 = vld [vmem:[#allocation5 + $0x18] sm:$0xf]
        %v523 = vld [vmem:[#allocation5 + $0x1c] sm:$0xf]
        %v524 = vld [vmem:[#allocation5 + $0x20] sm:$0xf]
        %v525 = vld [vmem:[#allocation5 + $0x24] sm:$0xf]
        %v526 = vld [vmem:[#allocation5 + $0x28] sm:$0xf]
        %v527 = vld [vmem:[#allocation5 + $0x2c] sm:$0xf]
        %v528 = vld [vmem:[#allocation5 + $0x30] sm:$0xf]
        %v529 = vld [vmem:[#allocation5 + $0x34] sm:$0xf]
        %v530 = vld [vmem:[#allocation5 + $0x38] sm:$0xf]
        %v531 = vld [vmem:[#allocation5 + $0x3c] sm:$0xf]
        %v532 = vld [vmem:[#allocation7] sm:$0x1]
        %v534 = vlaneseq
        %v535 = vshrl.u32 %v534, 7
        %v536 = vsub.s32 0, %v535
        %v537 = vrot.slane %v532, %v536
        %v555 = vunpack.c.l.b16 %v516
        %v556 = vunpack.c.l.b16 %v517
        %v557 = vunpack.c.l.b16 %v518
        %v558 = vunpack.c.l.b16 %v519
        %v559 = vunpack.c.l.b16 %v520
        %v560 = vunpack.c.l.b16 %v521
        %v561 = vunpack.c.l.b16 %v522
        %v562 = vunpack.c.l.b16 %v523
        %v563 = vunpack.c.l.b16 %v524
        %v564 = vunpack.c.l.b16 %v525
        %v565 = vunpack.c.l.b16 %v526
        %v566 = vunpack.c.l.b16 %v527
        %v567 = vunpack.c.l.b16 %v528
        %v568 = vunpack.c.l.b16 %v529
        %v569 = vunpack.c.l.b16 %v530
        %v570 = vunpack.c.l.b16 %v531
        %v571 = vpack.c.b16 %v556, %v555
        %v572 = vpack.c.b16 %v558, %v557
        %v573 = vpack.c.b16 %v560, %v559
        %v574 = vpack.c.b16 %v562, %v561
        %v575 = vpack.c.b16 %v564, %v563
        %v576 = vpack.c.b16 %v566, %v565
        %v577 = vpack.c.b16 %v568, %v567
        %v578 = vpack.c.b16 %v570, %v569
        %587 = vmatprep.subr.bf16.mxu0 0
        %588 = vmatpush1.bf16.msra.mxu0 %v578
        %589 = vmatprep.subr.bf16.mxu0 0
        %590 = vmatpush1.bf16.msra.mxu0 %v577
        %591 = vmatprep.subr.bf16.mxu0 0
        %592 = vmatpush1.bf16.msra.mxu0 %v576
        %593 = vmatprep.subr.bf16.mxu0 0
        %594 = vmatpush1.bf16.msra.mxu0 %v575
        %595 = vmatprep.subr.bf16.mxu0 0
        %596 = vmatpush1.bf16.msra.mxu0 %v574
        %597 = vmatprep.subr.bf16.mxu0 0
        %598 = vmatpush1.bf16.msra.mxu0 %v573
        %599 = vmatprep.subr.bf16.mxu0 0
        %600 = vmatpush1.bf16.msra.mxu0 %v572
        %601 = vmatprep.subr.bf16.mxu0 0
        %602 = vmatpush1.bf16.msra.mxu0 %v571
        %603 = vmatprep.subr.bf16.mxu0 0
        %604 = vmatpush2.bf16.msra.mxu0 0
        %605 = vmatprep.subr.bf16.mxu0 0
        %606 = vmatpush2.bf16.msra.mxu0 0
        %607 = vmatprep.subr.bf16.mxu0 0
        %608 = vmatpush2.bf16.msra.mxu0 0
        %609 = vmatprep.subr.bf16.mxu0 0
        %610 = vmatpush2.bf16.msra.mxu0 0
        %611 = vmatprep.subr.bf16.mxu0 0
        %612 = vmatpush2.bf16.msra.mxu0 0
        %613 = vmatprep.subr.bf16.mxu0 0
        %614 = vmatpush2.bf16.msra.mxu0 0
        %615 = vmatprep.subr.bf16.mxu0 0
        %616 = vmatpush2.bf16.msra.mxu0 0
        %617 = vmatprep.subr.bf16.mxu0 0
        %618 = vmatpush2.bf16.msra.mxu0 0
        %619 = vmatprep.mubr.bf16.mxu0 0
        %620 = vmatmul.mubr.bf16.gmra.mxu0 %v512
        %v621 = vpop.f32.mrf.mxu0
        %v622 = vadd.f32 %v537, %v621
        %v623 = vpop.f32.mrf.mxu0
        %v624 = vpop.f32.mrf.mxu0
        %v625 = vadd.f32 %v537, %v624
        %v626 = vpop.f32.mrf.mxu0
        %627 = vmatprep.mubr.bf16.mxu0 0
        %628 = vmatmul.mubr.bf16.gmra.mxu0 %v513
        %v629 = vpop.f32.mrf.mxu0
        %v630 = vadd.f32 %v537, %v629
        %v631 = vpop.f32.mrf.mxu0
        %v632 = vpop.f32.mrf.mxu0
        %v633 = vadd.f32 %v537, %v632
        %v634 = vpop.f32.mrf.mxu0
        %635 = vmatprep.mubr.bf16.mxu0 0
        %636 = vmatmul.mubr.bf16.gmra.mxu0 %v514
        %v637 = vpop.f32.mrf.mxu0
        %v638 = vadd.f32 %v537, %v637
        %v639 = vpop.f32.mrf.mxu0
        %v640 = vpop.f32.mrf.mxu0
        %v641 = vadd.f32 %v537, %v640
        %v642 = vpop.f32.mrf.mxu0
        %643 = vmatprep.mubr.bf16.mxu0 0
        %644 = vmatmul.mubr.bf16.gmra.mxu0 %v515
        %v645 = vpop.f32.mrf.mxu0
        %v646 = vadd.f32 %v537, %v645
        %v647 = vpop.f32.mrf.mxu0
        %v648 = vpop.f32.mrf.mxu0
        %v649 = vadd.f32 %v537, %v648
        %v650 = vpop.f32.mrf.mxu0
        %651 = vdwg.mxu0
        %v652 = vpack.c.bf16 %v408, %v407
        %v653 = vpack.c.bf16 %v410, %v409
        %656 = vrot.lane.b32.xlu0 %v652, 2
        %v657 = vpop.permute.xlu0 %656
        %658 = vrot.lane.b32.xlu0 %v653, 2
        %v659 = vpop.permute.xlu0 %658
        %vm660 = vcmask 15360
        %v663 = vsel %vm660, 0, %v657
        %v666 = vsel %vm660, 0, %v659
        %668 = vrot.lane.b32.xlu0 %v652, 1
        %v669 = vpop.permute.xlu0 %668
        %670 = vrot.lane.b32.xlu0 %v653, 1
        %v671 = vpop.permute.xlu0 %670
        %vm672 = vcmask 7168
        %v674 = vsel %vm672, 0, %v669
        %v677 = vsel %vm672, 0, %v671
        %679 = vrot.lane.b32.xlu0 %v652, 127
        %v680 = vpop.permute.xlu0 %679
        %681 = vrot.lane.b32.xlu0 %v653, 127
        %v682 = vpop.permute.xlu0 %681
        %vm683 = vcmask 1039360
        %v685 = vsel %vm683, %v680, 0
        %v688 = vsel %vm683, %v682, 0
        %690 = vrot.lane.b32.xlu0 %v652, 126
        %v691 = vpop.permute.xlu0 %690
        %692 = vrot.lane.b32.xlu0 %v653, 126
        %v693 = vpop.permute.xlu0 %692
        %vm694 = vcmask 1031168
        %v696 = vsel %vm694, %v691, 0
        %v699 = vsel %vm694, %v693, 0
        %v701 = vpack.c.bf16 %v417, %v416
        %v702 = vpack.c.bf16 %v419, %v418
        %705 = vrot.lane.b32.xlu0 %v701, 2
        %v706 = vpop.permute.xlu0 %705
        %707 = vrot.lane.b32.xlu0 %v702, 2
        %v708 = vpop.permute.xlu0 %707
        %v710 = vsel %vm660, 0, %v706
        %v713 = vsel %vm660, 0, %v708
        %715 = vrot.lane.b32.xlu0 %v701, 1
        %v716 = vpop.permute.xlu0 %715
        %717 = vrot.lane.b32.xlu0 %v702, 1
        %v718 = vpop.permute.xlu0 %717
        %v720 = vsel %vm672, 0, %v716
        %v723 = vsel %vm672, 0, %v718
        %725 = vrot.lane.b32.xlu0 %v701, 127
        %v726 = vpop.permute.xlu0 %725
        %727 = vrot.lane.b32.xlu0 %v702, 127
        %v728 = vpop.permute.xlu0 %727
        %v730 = vsel %vm683, %v726, 0
        %v733 = vsel %vm683, %v728, 0
        %735 = vrot.lane.b32.xlu0 %v701, 126
        %v736 = vpop.permute.xlu0 %735
        %737 = vrot.lane.b32.xlu0 %v702, 126
        %v738 = vpop.permute.xlu0 %737
        %v740 = vsel %vm694, %v736, 0
        %v743 = vsel %vm694, %v738, 0
        %v745 = vld [vmem:[%s4] sm:$0xff]
        %v746 = vld [vmem:[%s4 + $0x8] sm:$0xff]
        %v747 = vld [vmem:[%s4 + $0x10] sm:$0xff]
        %v748 = vld [vmem:[%s4 + $0x18] sm:$0xff]
        %v749 = vld [vmem:[%s5] sm:$0xff]
        %v750 = vld [vmem:[%s5 + $0x8] sm:$0xff]
        %v751 = vld [vmem:[%s5 + $0x10] sm:$0xff]
        %v752 = vld [vmem:[%s5 + $0x18] sm:$0xff]
        %754 = vset.pattern.permute.xlu0 0
        %755 = vperm.xlu0 %754, %v749
        %v756 = vpop.permute.xlu0 %755
        %759 = vset.pattern.permute.xlu0 0
        %760 = vperm.xlu0 %759, %v750
        %v761 = vpop.permute.xlu0 %760
        %764 = vset.pattern.permute.xlu0 0
        %765 = vperm.xlu0 %764, %v751
        %v766 = vpop.permute.xlu0 %765
        %769 = vset.pattern.permute.xlu0 0
        %770 = vperm.xlu0 %769, %v752
        %v771 = vpop.permute.xlu0 %770
        %v777 = vunpack.c.l.b16 %v745
        %v778 = vunpack.c.h.b16 %v745
        %v779 = vunpack.c.l.b16 %v746
        %v780 = vunpack.c.h.b16 %v746
        %v781 = vunpack.c.l.b16 %v747
        %v782 = vunpack.c.h.b16 %v747
        %v783 = vunpack.c.l.b16 %v748
        %v784 = vunpack.c.h.b16 %v748
        %v785 = vpack.c.b16 %v779, %v777
        %v786 = vpack.c.b16 %v780, %v778
        %v787 = vpack.c.b16 %v783, %v781
        %v788 = vpack.c.b16 %v784, %v782
        %vm791 = vcmask 261120
        %v793 = vsel %vm791, %v786, 0
        %v796 = vsel %vm791, %v788, 0
        %798 = vmatprep.subr.bf16.mxu0 %v733
        %799 = vmatpush1.bf16.msra.mxu0 %v688
        %800 = vmatprep.subr.bf16.mxu0 %v730
        %801 = vmatpush1.bf16.msra.mxu0 %v685
        %802 = vmatprep.subr.bf16.mxu0 %v702
        %803 = vmatpush1.bf16.msra.mxu0 %v653
        %804 = vmatprep.subr.bf16.mxu0 %v701
        %805 = vmatpush1.bf16.msra.mxu0 %v652
        %806 = vmatprep.subr.bf16.mxu0 %v723
        %807 = vmatpush1.bf16.msra.mxu0 %v677
        %808 = vmatprep.subr.bf16.mxu0 %v720
        %809 = vmatpush1.bf16.msra.mxu0 %v674
        %810 = vmatprep.subr.bf16.mxu0 %v713
        %811 = vmatpush1.bf16.msra.mxu0 %v666
        %812 = vmatprep.subr.bf16.mxu0 %v710
        %813 = vmatpush1.bf16.msra.mxu0 %v663
        %814 = vmatprep.subr.bf16.mxu0 0
        %815 = vmatpush2.bf16.msra.mxu0 0
        %816 = vmatprep.subr.bf16.mxu0 0
        %817 = vmatpush2.bf16.msra.mxu0 0
        %818 = vmatprep.subr.bf16.mxu0 0
        %819 = vmatpush2.bf16.msra.mxu0 0
        %820 = vmatprep.subr.bf16.mxu0 0
        %821 = vmatpush2.bf16.msra.mxu0 0
        %822 = vmatprep.subr.bf16.mxu0 0
        %823 = vmatpush2.bf16.msra.mxu0 0
        %824 = vmatprep.subr.bf16.mxu0 0
        %825 = vmatpush2.bf16.msra.mxu0 0
        %826 = vmatprep.subr.bf16.mxu0 %v743
        %827 = vmatpush2.bf16.msra.mxu0 %v699
        %828 = vmatprep.subr.bf16.mxu0 %v740
        %829 = vmatpush2.bf16.msra.mxu0 %v696
        %830 = vmatprep.mubr.bf16.mxu0 %v793
        %831 = vmatmul.mubr.bf16.gmra.mxu0 %v785
        %v832 = vpop.f32.mrf.mxu0
        %v833 = vadd.f32 %v756, %v832
        %v834 = vpop.f32.mrf.mxu0
        %v835 = vadd.f32 %v756, %v834
        %v836 = vpop.f32.mrf.mxu0
        %v837 = vadd.f32 %v761, %v836
        %v838 = vpop.f32.mrf.mxu0
        %v839 = vadd.f32 %v761, %v838
        %840 = vmatprep.mubr.bf16.mxu0 %v796
        %841 = vmatmul.mubr.bf16.gmra.mxu0 %v787
        %v842 = vpop.f32.mrf.mxu0
        %v843 = vadd.f32 %v766, %v842
        %v844 = vpop.f32.mrf.mxu0
        %v845 = vadd.f32 %v766, %v844
        %v846 = vpop.f32.mrf.mxu0
        %v847 = vadd.f32 %v771, %v846
        %v848 = vpop.f32.mrf.mxu0
        %v849 = vadd.f32 %v771, %v848
        %850 = vdwg.mxu0
        %v851 = vmax.f32 %v833, 0.0
        %v852 = vmax.f32 %v837, 0.0
        %v853 = vmax.f32 %v843, 0.0
        %v854 = vmax.f32 %v847, 0.0
        %v855 = vadd.f32 %v851, %v622
        %v856 = vadd.f32 %v852, %v625
        %v857 = vadd.f32 %v853, %v630
        %v858 = vadd.f32 %v854, %v633
        %v859 = vmax.f32 %v835, 0.0
        %v860 = vmax.f32 %v839, 0.0
        %v861 = vmax.f32 %v845, 0.0
        %v862 = vmax.f32 %v849, 0.0
        %v863 = vadd.f32 %v859, %v638
        %v864 = vadd.f32 %v860, %v641
        %v865 = vadd.f32 %v861, %v646
        %v866 = vadd.f32 %v862, %v649
        %v867 = vadd.f32 %v855, %v856
        %v868 = vadd.f32 %v867, %v857
        %v869 = vadd.f32 %v868, %v858
        %870 = vadd.xlane.f32.xlu0 %v869
        %v871 = vpop.xlane.xlu0 %870
        %v872 = vrot.slane %v871, 4
        %v873 = vadd.f32 %v871, %v872
        %v874 = vrot.slane %v873, 2
        %v875 = vadd.f32 %v873, %v874
        %v876 = vrot.slane %v875, 1
        %v877 = vadd.f32 %v875, %v876
        %s878 = vtos %v877
        %s879 = smul.f32 %s878, 0.00024414063
        %v880 = vmul.f32 %v855, %v855
        %v881 = vmul.f32 %v856, %v856
        %v882 = vmul.f32 %v857, %v857
        %v883 = vmul.f32 %v858, %v858
        %v884 = vadd.f32 %v880, %v881
        %v885 = vadd.f32 %v884, %v882
        %v886 = vadd.f32 %v885, %v883
        %887 = vadd.xlane.f32.xlu0 %v886
        %v888 = vpop.xlane.xlu0 %887
        %v889 = vrot.slane %v888, 4
        %v890 = vadd.f32 %v888, %v889
        %v891 = vrot.slane %v890, 2
        %v892 = vadd.f32 %v890, %v891
        %v893 = vrot.slane %v892, 1
        %v894 = vadd.f32 %v892, %v893
        %s895 = vtos %v894
        %s896 = smul.f32 %s895, 0.00024414063
        %s897 = smul.f32 %s879, %s879
        %s898 = ssub.f32 %s896, %s897
        %v899 = vstv %s879
        %v900 = vsub.f32 %v855, %v899
        %v901 = vsub.f32 %v856, %v899
        %v902 = vsub.f32 %v857, %v899
        %v903 = vsub.f32 %v858, %v899
        %s904 = sadd.f32 %s898, 1e-05
        %v905 = vstv %s904
        %v906 = vrsqrt.pop %v905
        %s907 = vtos %v906
        %v908 = vstv %s907
        %v909 = vmul.f32 %v900, %v908
        %v910 = vmul.f32 %v901, %v908
        %v911 = vmul.f32 %v902, %v908
        %v912 = vmul.f32 %v903, %v908
        %v913 = vadd.f32 %v863, %v864
        %v914 = vadd.f32 %v913, %v865
        %v915 = vadd.f32 %v914, %v866
        %916 = vadd.xlane.f32.xlu0 %v915
        %v917 = vpop.xlane.xlu0 %916
        %v918 = vrot.slane %v917, 4
        %v919 = vadd.f32 %v917, %v918
        %v920 = vrot.slane %v919, 2
        %v921 = vadd.f32 %v919, %v920
        %v922 = vrot.slane %v921, 1
        %v923 = vadd.f32 %v921, %v922
        %s924 = vtos %v923
        %s925 = smul.f32 %s924, 0.00024414063
        %v926 = vmul.f32 %v863, %v863
        %v927 = vmul.f32 %v864, %v864
        %v928 = vmul.f32 %v865, %v865
        %v929 = vmul.f32 %v866, %v866
        %v930 = vadd.f32 %v926, %v927
        %v931 = vadd.f32 %v930, %v928
        %v932 = vadd.f32 %v931, %v929
        %933 = vadd.xlane.f32.xlu0 %v932
        %v934 = vpop.xlane.xlu0 %933
        %v935 = vrot.slane %v934, 4
        %v936 = vadd.f32 %v934, %v935
        %v937 = vrot.slane %v936, 2
        %v938 = vadd.f32 %v936, %v937
        %v939 = vrot.slane %v938, 1
        %v940 = vadd.f32 %v938, %v939
        %s941 = vtos %v940
        %s942 = smul.f32 %s941, 0.00024414063
        %s943 = smul.f32 %s925, %s925
        %s944 = ssub.f32 %s942, %s943
        %v945 = vstv %s925
        %v946 = vsub.f32 %v863, %v945
        %v947 = vsub.f32 %v864, %v945
        %v948 = vsub.f32 %v865, %v945
        %v949 = vsub.f32 %v866, %v945
        %s950 = sadd.f32 %s944, 1e-05
        %v951 = vstv %s950
        %v952 = vrsqrt.pop %v951
        %s953 = vtos %v952
        %v954 = vstv %s953
        %v955 = vmul.f32 %v946, %v954
        %v956 = vmul.f32 %v947, %v954
        %v957 = vmul.f32 %v948, %v954
        %v958 = vmul.f32 %v949, %v954
        %v959 = vpack.c.bf16 %v910, %v909
        %v960 = vpack.c.bf16 %v912, %v911
        %v961 = vpack.c.bf16 %v956, %v955
        %v962 = vpack.c.bf16 %v958, %v957
        %s963 = scalar_lea.vmem [#allocation5], 64
        %v964 = vld [vmem:[%s963] sm:$0xf]
        %v965 = vld [vmem:[%s963 + $0x4] sm:$0xf]
        %v966 = vld [vmem:[%s963 + $0x8] sm:$0xf]
        %v967 = vld [vmem:[%s963 + $0xc] sm:$0xf]
        %v968 = vld [vmem:[%s963 + $0x10] sm:$0xf]
        %v969 = vld [vmem:[%s963 + $0x14] sm:$0xf]
        %v970 = vld [vmem:[%s963 + $0x18] sm:$0xf]
        %v971 = vld [vmem:[%s963 + $0x1c] sm:$0xf]
        %v972 = vld [vmem:[%s963 + $0x20] sm:$0xf]
        %v973 = vld [vmem:[%s963 + $0x24] sm:$0xf]
        %v974 = vld [vmem:[%s963 + $0x28] sm:$0xf]
        %v975 = vld [vmem:[%s963 + $0x2c] sm:$0xf]
        %v976 = vld [vmem:[%s963 + $0x30] sm:$0xf]
        %v977 = vld [vmem:[%s963 + $0x34] sm:$0xf]
        %v978 = vld [vmem:[%s963 + $0x38] sm:$0xf]
        %v979 = vld [vmem:[%s963 + $0x3c] sm:$0xf]
        %s980 = scalar_lea.vmem [#allocation7], 1
        %v981 = vld [vmem:[%s980] sm:$0x1]
        %v983 = vlaneseq
        %v984 = vshrl.u32 %v983, 7
        %v985 = vsub.s32 0, %v984
        %v986 = vrot.slane %v981, %v985
        %v1004 = vunpack.c.l.b16 %v964
        %v1005 = vunpack.c.l.b16 %v965
        %v1006 = vunpack.c.l.b16 %v966
        %v1007 = vunpack.c.l.b16 %v967
        %v1008 = vunpack.c.l.b16 %v968
        %v1009 = vunpack.c.l.b16 %v969
        %v1010 = vunpack.c.l.b16 %v970
        %v1011 = vunpack.c.l.b16 %v971
        %v1012 = vunpack.c.l.b16 %v972
        %v1013 = vunpack.c.l.b16 %v973
        %v1014 = vunpack.c.l.b16 %v974
        %v1015 = vunpack.c.l.b16 %v975
        %v1016 = vunpack.c.l.b16 %v976
        %v1017 = vunpack.c.l.b16 %v977
        %v1018 = vunpack.c.l.b16 %v978
        %v1019 = vunpack.c.l.b16 %v979
        %v1020 = vpack.c.b16 %v1005, %v1004
        %v1021 = vpack.c.b16 %v1007, %v1006
        %v1022 = vpack.c.b16 %v1009, %v1008
        %v1023 = vpack.c.b16 %v1011, %v1010
        %v1024 = vpack.c.b16 %v1013, %v1012
        %v1025 = vpack.c.b16 %v1015, %v1014
        %v1026 = vpack.c.b16 %v1017, %v1016
        %v1027 = vpack.c.b16 %v1019, %v1018
        %1036 = vmatprep.subr.bf16.mxu0 0
        %1037 = vmatpush1.bf16.msra.mxu0 %v1027
        %1038 = vmatprep.subr.bf16.mxu0 0
        %1039 = vmatpush1.bf16.msra.mxu0 %v1026
        %1040 = vmatprep.subr.bf16.mxu0 0
        %1041 = vmatpush1.bf16.msra.mxu0 %v1025
        %1042 = vmatprep.subr.bf16.mxu0 0
        %1043 = vmatpush1.bf16.msra.mxu0 %v1024
        %1044 = vmatprep.subr.bf16.mxu0 0
        %1045 = vmatpush1.bf16.msra.mxu0 %v1023
        %1046 = vmatprep.subr.bf16.mxu0 0
        %1047 = vmatpush1.bf16.msra.mxu0 %v1022
        %1048 = vmatprep.subr.bf16.mxu0 0
        %1049 = vmatpush1.bf16.msra.mxu0 %v1021
        %1050 = vmatprep.subr.bf16.mxu0 0
        %1051 = vmatpush1.bf16.msra.mxu0 %v1020
        %1052 = vmatprep.subr.bf16.mxu0 0
        %1053 = vmatpush2.bf16.msra.mxu0 0
        %1054 = vmatprep.subr.bf16.mxu0 0
        %1055 = vmatpush2.bf16.msra.mxu0 0
        %1056 = vmatprep.subr.bf16.mxu0 0
        %1057 = vmatpush2.bf16.msra.mxu0 0
        %1058 = vmatprep.subr.bf16.mxu0 0
        %1059 = vmatpush2.bf16.msra.mxu0 0
        %1060 = vmatprep.subr.bf16.mxu0 0
        %1061 = vmatpush2.bf16.msra.mxu0 0
        %1062 = vmatprep.subr.bf16.mxu0 0
        %1063 = vmatpush2.bf16.msra.mxu0 0
        %1064 = vmatprep.subr.bf16.mxu0 0
        %1065 = vmatpush2.bf16.msra.mxu0 0
        %1066 = vmatprep.subr.bf16.mxu0 0
        %1067 = vmatpush2.bf16.msra.mxu0 0
        %1068 = vmatprep.mubr.bf16.mxu0 0
        %1069 = vmatmul.mubr.bf16.gmra.mxu0 %v959
        %v1070 = vpop.f32.mrf.mxu0
        %v1071 = vadd.f32 %v986, %v1070
        %v1072 = vpop.f32.mrf.mxu0
        %v1073 = vpop.f32.mrf.mxu0
        %v1074 = vadd.f32 %v986, %v1073
        %v1075 = vpop.f32.mrf.mxu0
        %1076 = vmatprep.mubr.bf16.mxu0 0
        %1077 = vmatmul.mubr.bf16.gmra.mxu0 %v960
        %v1078 = vpop.f32.mrf.mxu0
        %v1079 = vadd.f32 %v986, %v1078
        %v1080 = vpop.f32.mrf.mxu0
        %v1081 = vpop.f32.mrf.mxu0
        %v1082 = vadd.f32 %v986, %v1081
        %v1083 = vpop.f32.mrf.mxu0
        %1084 = vmatprep.mubr.bf16.mxu0 0
        %1085 = vmatmul.mubr.bf16.gmra.mxu0 %v961
        %v1086 = vpop.f32.mrf.mxu0
        %v1087 = vadd.f32 %v986, %v1086
        %v1088 = vpop.f32.mrf.mxu0
        %v1089 = vpop.f32.mrf.mxu0
        %v1090 = vadd.f32 %v986, %v1089
        %v1091 = vpop.f32.mrf.mxu0
        %1092 = vmatprep.mubr.bf16.mxu0 0
        %1093 = vmatmul.mubr.bf16.gmra.mxu0 %v962
        %v1094 = vpop.f32.mrf.mxu0
        %v1095 = vadd.f32 %v986, %v1094
        %v1096 = vpop.f32.mrf.mxu0
        %v1097 = vpop.f32.mrf.mxu0
        %v1098 = vadd.f32 %v986, %v1097
        %v1099 = vpop.f32.mrf.mxu0
        %1100 = vdwg.mxu0
        %v1101 = vpack.c.bf16 %v1074, %v1071
        %v1102 = vpack.c.bf16 %v1082, %v1079
        %1105 = vrot.lane.b32.xlu0 %v1101, 2
        %v1106 = vpop.permute.xlu0 %1105
        %1107 = vrot.lane.b32.xlu0 %v1102, 2
        %v1108 = vpop.permute.xlu0 %1107
        %v1110 = vsel %vm660, 0, %v1106
        %v1113 = vsel %vm660, 0, %v1108
        %1115 = vrot.lane.b32.xlu0 %v1101, 1
        %v1116 = vpop.permute.xlu0 %1115
        %1117 = vrot.lane.b32.xlu0 %v1102, 1
        %v1118 = vpop.permute.xlu0 %1117
        %v1120 = vsel %vm672, 0, %v1116
        %v1123 = vsel %vm672, 0, %v1118
        %1125 = vrot.lane.b32.xlu0 %v1101, 127
        %v1126 = vpop.permute.xlu0 %1125
        %1127 = vrot.lane.b32.xlu0 %v1102, 127
        %v1128 = vpop.permute.xlu0 %1127
        %v1130 = vsel %vm683, %v1126, 0
        %v1133 = vsel %vm683, %v1128, 0
        %1135 = vrot.lane.b32.xlu0 %v1101, 126
        %v1136 = vpop.permute.xlu0 %1135
        %1137 = vrot.lane.b32.xlu0 %v1102, 126
        %v1138 = vpop.permute.xlu0 %1137
        %v1140 = vsel %vm694, %v1136, 0
        %v1143 = vsel %vm694, %v1138, 0
        %v1145 = vpack.c.bf16 %v1090, %v1087
        %v1146 = vpack.c.bf16 %v1098, %v1095
        %1149 = vrot.lane.b32.xlu0 %v1145, 2
        %v1150 = vpop.permute.xlu0 %1149
        %1151 = vrot.lane.b32.xlu0 %v1146, 2
        %v1152 = vpop.permute.xlu0 %1151
        %v1154 = vsel %vm660, 0, %v1150
        %v1157 = vsel %vm660, 0, %v1152
        %1159 = vrot.lane.b32.xlu0 %v1145, 1
        %v1160 = vpop.permute.xlu0 %1159
        %1161 = vrot.lane.b32.xlu0 %v1146, 1
        %v1162 = vpop.permute.xlu0 %1161
        %v1164 = vsel %vm672, 0, %v1160
        %v1167 = vsel %vm672, 0, %v1162
        %1169 = vrot.lane.b32.xlu0 %v1145, 127
        %v1170 = vpop.permute.xlu0 %1169
        %1171 = vrot.lane.b32.xlu0 %v1146, 127
        %v1172 = vpop.permute.xlu0 %1171
        %v1174 = vsel %vm683, %v1170, 0
        %v1177 = vsel %vm683, %v1172, 0
        %1179 = vrot.lane.b32.xlu0 %v1145, 126
        %v1180 = vpop.permute.xlu0 %1179
        %1181 = vrot.lane.b32.xlu0 %v1146, 126
        %v1182 = vpop.permute.xlu0 %1181
        %v1184 = vsel %vm694, %v1180, 0
        %v1187 = vsel %vm694, %v1182, 0
        %s1189 = scalar_lea.vmem %s4, 32
        %v1190 = vld [vmem:[%s1189] sm:$0xff]
        %v1191 = vld [vmem:[%s1189 + $0x8] sm:$0xff]
        %v1192 = vld [vmem:[%s1189 + $0x10] sm:$0xff]
        %v1193 = vld [vmem:[%s1189 + $0x18] sm:$0xff]
        %s1194 = scalar_lea.vmem %s5, 32
        %v1195 = vld [vmem:[%s1194] sm:$0xff]
        %v1196 = vld [vmem:[%s1194 + $0x8] sm:$0xff]
        %v1197 = vld [vmem:[%s1194 + $0x10] sm:$0xff]
        %v1198 = vld [vmem:[%s1194 + $0x18] sm:$0xff]
        %1200 = vset.pattern.permute.xlu0 0
        %1201 = vperm.xlu0 %1200, %v1195
        %v1202 = vpop.permute.xlu0 %1201
        %1205 = vset.pattern.permute.xlu0 0
        %1206 = vperm.xlu0 %1205, %v1196
        %v1207 = vpop.permute.xlu0 %1206
        %1210 = vset.pattern.permute.xlu0 0
        %1211 = vperm.xlu0 %1210, %v1197
        %v1212 = vpop.permute.xlu0 %1211
        %1215 = vset.pattern.permute.xlu0 0
        %1216 = vperm.xlu0 %1215, %v1198
        %v1217 = vpop.permute.xlu0 %1216
        %v1223 = vunpack.c.l.b16 %v1190
        %v1224 = vunpack.c.h.b16 %v1190
        %v1225 = vunpack.c.l.b16 %v1191
        %v1226 = vunpack.c.h.b16 %v1191
        %v1227 = vunpack.c.l.b16 %v1192
        %v1228 = vunpack.c.h.b16 %v1192
        %v1229 = vunpack.c.l.b16 %v1193
        %v1230 = vunpack.c.h.b16 %v1193
        %v1231 = vpack.c.b16 %v1225, %v1223
        %v1232 = vpack.c.b16 %v1226, %v1224
        %v1233 = vpack.c.b16 %v1229, %v1227
        %v1234 = vpack.c.b16 %v1230, %v1228
        %v1238 = vsel %vm791, %v1232, 0
        %v1241 = vsel %vm791, %v1234, 0
        %1243 = vmatprep.subr.bf16.mxu0 %v1177
        %1244 = vmatpush1.bf16.msra.mxu0 %v1133
        %1245 = vmatprep.subr.bf16.mxu0 %v1174
        %1246 = vmatpush1.bf16.msra.mxu0 %v1130
        %1247 = vmatprep.subr.bf16.mxu0 %v1146
        %1248 = vmatpush1.bf16.msra.mxu0 %v1102
        %1249 = vmatprep.subr.bf16.mxu0 %v1145
        %1250 = vmatpush1.bf16.msra.mxu0 %v1101
        %1251 = vmatprep.subr.bf16.mxu0 %v1167
        %1252 = vmatpush1.bf16.msra.mxu0 %v1123
        %1253 = vmatprep.subr.bf16.mxu0 %v1164
        %1254 = vmatpush1.bf16.msra.mxu0 %v1120
        %1255 = vmatprep.subr.bf16.mxu0 %v1157
        %1256 = vmatpush1.bf16.msra.mxu0 %v1113
        %1257 = vmatprep.subr.bf16.mxu0 %v1154
        %1258 = vmatpush1.bf16.msra.mxu0 %v1110
        %1259 = vmatprep.subr.bf16.mxu0 0
        %1260 = vmatpush2.bf16.msra.mxu0 0
        %1261 = vmatprep.subr.bf16.mxu0 0
        %1262 = vmatpush2.bf16.msra.mxu0 0
        %1263 = vmatprep.subr.bf16.mxu0 0
        %1264 = vmatpush2.bf16.msra.mxu0 0
        %1265 = vmatprep.subr.bf16.mxu0 0
        %1266 = vmatpush2.bf16.msra.mxu0 0
        %1267 = vmatprep.subr.bf16.mxu0 0
        %1268 = vmatpush2.bf16.msra.mxu0 0
        %1269 = vmatprep.subr.bf16.mxu0 0
        %1270 = vmatpush2.bf16.msra.mxu0 0
        %1271 = vmatprep.subr.bf16.mxu0 %v1187
        %1272 = vmatpush2.bf16.msra.mxu0 %v1143
        %1273 = vmatprep.subr.bf16.mxu0 %v1184
        %1274 = vmatpush2.bf16.msra.mxu0 %v1140
        %1275 = vmatprep.mubr.bf16.mxu0 %v1238
        %1276 = vmatmul.mubr.bf16.gmra.mxu0 %v1231
        %v1277 = vpop.f32.mrf.mxu0
        %v1278 = vadd.f32 %v1202, %v1277
        %v1279 = vpop.f32.mrf.mxu0
        %v1280 = vadd.f32 %v1202, %v1279
        %v1281 = vpop.f32.mrf.mxu0
        %v1282 = vadd.f32 %v1207, %v1281
        %v1283 = vpop.f32.mrf.mxu0
        %v1284 = vadd.f32 %v1207, %v1283
        %1285 = vmatprep.mubr.bf16.mxu0 %v1241
        %1286 = vmatmul.mubr.bf16.gmra.mxu0 %v1233
        %v1287 = vpop.f32.mrf.mxu0
        %v1288 = vadd.f32 %v1212, %v1287
        %v1289 = vpop.f32.mrf.mxu0
        %v1290 = vadd.f32 %v1212, %v1289
        %v1291 = vpop.f32.mrf.mxu0
        %v1292 = vadd.f32 %v1217, %v1291
        %v1293 = vpop.f32.mrf.mxu0
        %v1294 = vadd.f32 %v1217, %v1293
        %1295 = vdwg.mxu0
        %v1296 = vmax.f32 %v1278, 0.0
        %v1297 = vmax.f32 %v1282, 0.0
        %v1298 = vmax.f32 %v1288, 0.0
        %v1299 = vmax.f32 %v1292, 0.0
        %v1300 = vadd.f32 %v1296, %v855
        %v1301 = vadd.f32 %v1297, %v856
        %v1302 = vadd.f32 %v1298, %v857
        %v1303 = vadd.f32 %v1299, %v858
        %v1304 = vmax.f32 %v1280, 0.0
        %v1305 = vmax.f32 %v1284, 0.0
        %v1306 = vmax.f32 %v1290, 0.0
        %v1307 = vmax.f32 %v1294, 0.0
        %v1308 = vadd.f32 %v1304, %v863
        %v1309 = vadd.f32 %v1305, %v864
        %v1310 = vadd.f32 %v1306, %v865
        %v1311 = vadd.f32 %v1307, %v866
        %v1312 = vadd.f32 %v1300, %v1301
        %v1313 = vadd.f32 %v1312, %v1302
        %v1314 = vadd.f32 %v1313, %v1303
        %1315 = vadd.xlane.f32.xlu0 %v1314
        %v1316 = vpop.xlane.xlu0 %1315
        %v1317 = vrot.slane %v1316, 4
        %v1318 = vadd.f32 %v1316, %v1317
        %v1319 = vrot.slane %v1318, 2
        %v1320 = vadd.f32 %v1318, %v1319
        %v1321 = vrot.slane %v1320, 1
        %v1322 = vadd.f32 %v1320, %v1321
        %s1323 = vtos %v1322
        %s1324 = smul.f32 %s1323, 0.00024414063
        %v1325 = vmul.f32 %v1300, %v1300
        %v1326 = vmul.f32 %v1301, %v1301
        %v1327 = vmul.f32 %v1302, %v1302
        %v1328 = vmul.f32 %v1303, %v1303
        %v1329 = vadd.f32 %v1325, %v1326
        %v1330 = vadd.f32 %v1329, %v1327
        %v1331 = vadd.f32 %v1330, %v1328
        %1332 = vadd.xlane.f32.xlu0 %v1331
        %v1333 = vpop.xlane.xlu0 %1332
        %v1334 = vrot.slane %v1333, 4
        %v1335 = vadd.f32 %v1333, %v1334
        %v1336 = vrot.slane %v1335, 2
        %v1337 = vadd.f32 %v1335, %v1336
        %v1338 = vrot.slane %v1337, 1
        %v1339 = vadd.f32 %v1337, %v1338
        %s1340 = vtos %v1339
        %s1341 = smul.f32 %s1340, 0.00024414063
        %s1342 = smul.f32 %s1324, %s1324
        %s1343 = ssub.f32 %s1341, %s1342
        %v1344 = vstv %s1324
        %v1345 = vsub.f32 %v1300, %v1344
        %v1346 = vsub.f32 %v1301, %v1344
        %v1347 = vsub.f32 %v1302, %v1344
        %v1348 = vsub.f32 %v1303, %v1344
        %s1349 = sadd.f32 %s1343, 1e-05
        %v1350 = vstv %s1349
        %v1351 = vrsqrt.pop %v1350
        %s1352 = vtos %v1351
        %v1353 = vstv %s1352
        %v1354 = vmul.f32 %v1345, %v1353
        %v1355 = vmul.f32 %v1346, %v1353
        %v1356 = vmul.f32 %v1347, %v1353
        %v1357 = vmul.f32 %v1348, %v1353
        %v1358 = vadd.f32 %v1308, %v1309
        %v1359 = vadd.f32 %v1358, %v1310
        %v1360 = vadd.f32 %v1359, %v1311
        %1361 = vadd.xlane.f32.xlu0 %v1360
        %v1362 = vpop.xlane.xlu0 %1361
        %v1363 = vrot.slane %v1362, 4
        %v1364 = vadd.f32 %v1362, %v1363
        %v1365 = vrot.slane %v1364, 2
        %v1366 = vadd.f32 %v1364, %v1365
        %v1367 = vrot.slane %v1366, 1
        %v1368 = vadd.f32 %v1366, %v1367
        %s1369 = vtos %v1368
        %s1370 = smul.f32 %s1369, 0.00024414063
        %v1371 = vmul.f32 %v1308, %v1308
        %v1372 = vmul.f32 %v1309, %v1309
        %v1373 = vmul.f32 %v1310, %v1310
        %v1374 = vmul.f32 %v1311, %v1311
        %v1375 = vadd.f32 %v1371, %v1372
        %v1376 = vadd.f32 %v1375, %v1373
        %v1377 = vadd.f32 %v1376, %v1374
        %1378 = vadd.xlane.f32.xlu0 %v1377
        %v1379 = vpop.xlane.xlu0 %1378
        %v1380 = vrot.slane %v1379, 4
        %v1381 = vadd.f32 %v1379, %v1380
        %v1382 = vrot.slane %v1381, 2
        %v1383 = vadd.f32 %v1381, %v1382
        %v1384 = vrot.slane %v1383, 1
        %v1385 = vadd.f32 %v1383, %v1384
        %s1386 = vtos %v1385
        %s1387 = smul.f32 %s1386, 0.00024414063
        %s1388 = smul.f32 %s1370, %s1370
        %s1389 = ssub.f32 %s1387, %s1388
        %v1390 = vstv %s1370
        %v1391 = vsub.f32 %v1308, %v1390
        %v1392 = vsub.f32 %v1309, %v1390
        %v1393 = vsub.f32 %v1310, %v1390
        %v1394 = vsub.f32 %v1311, %v1390
        %s1395 = sadd.f32 %s1389, 1e-05
        %v1396 = vstv %s1395
        %v1397 = vrsqrt.pop %v1396
        %s1398 = vtos %v1397
        %v1399 = vstv %s1398
        %v1400 = vmul.f32 %v1391, %v1399
        %v1401 = vmul.f32 %v1392, %v1399
        %v1402 = vmul.f32 %v1393, %v1399
        %v1403 = vmul.f32 %v1394, %v1399
        %v1404 = vpack.c.bf16 %v1355, %v1354
        %v1405 = vpack.c.bf16 %v1357, %v1356
        %v1406 = vpack.c.bf16 %v1401, %v1400
        %v1407 = vpack.c.bf16 %v1403, %v1402
        %s1408 = scalar_lea.vmem [#allocation5], 128
        %v1409 = vld [vmem:[%s1408] sm:$0xf]
        %v1410 = vld [vmem:[%s1408 + $0x4] sm:$0xf]
        %v1411 = vld [vmem:[%s1408 + $0x8] sm:$0xf]
        %v1412 = vld [vmem:[%s1408 + $0xc] sm:$0xf]
        %v1413 = vld [vmem:[%s1408 + $0x10] sm:$0xf]
        %v1414 = vld [vmem:[%s1408 + $0x14] sm:$0xf]
        %v1415 = vld [vmem:[%s1408 + $0x18] sm:$0xf]
        %v1416 = vld [vmem:[%s1408 + $0x1c] sm:$0xf]
        %v1417 = vld [vmem:[%s1408 + $0x20] sm:$0xf]
        %v1418 = vld [vmem:[%s1408 + $0x24] sm:$0xf]
        %v1419 = vld [vmem:[%s1408 + $0x28] sm:$0xf]
        %v1420 = vld [vmem:[%s1408 + $0x2c] sm:$0xf]
        %v1421 = vld [vmem:[%s1408 + $0x30] sm:$0xf]
        %v1422 = vld [vmem:[%s1408 + $0x34] sm:$0xf]
        %v1423 = vld [vmem:[%s1408 + $0x38] sm:$0xf]
        %v1424 = vld [vmem:[%s1408 + $0x3c] sm:$0xf]
        %s1425 = scalar_lea.vmem [#allocation7], 2
        %v1426 = vld [vmem:[%s1425] sm:$0x1]
        %v1428 = vlaneseq
        %v1429 = vshrl.u32 %v1428, 7
        %v1430 = vsub.s32 0, %v1429
        %v1431 = vrot.slane %v1426, %v1430
        %v1449 = vunpack.c.l.b16 %v1409
        %v1450 = vunpack.c.l.b16 %v1410
        %v1451 = vunpack.c.l.b16 %v1411
        %v1452 = vunpack.c.l.b16 %v1412
        %v1453 = vunpack.c.l.b16 %v1413
        %v1454 = vunpack.c.l.b16 %v1414
        %v1455 = vunpack.c.l.b16 %v1415
        %v1456 = vunpack.c.l.b16 %v1416
        %v1457 = vunpack.c.l.b16 %v1417
        %v1458 = vunpack.c.l.b16 %v1418
        %v1459 = vunpack.c.l.b16 %v1419
        %v1460 = vunpack.c.l.b16 %v1420
        %v1461 = vunpack.c.l.b16 %v1421
        %v1462 = vunpack.c.l.b16 %v1422
        %v1463 = vunpack.c.l.b16 %v1423
        %v1464 = vunpack.c.l.b16 %v1424
        %v1465 = vpack.c.b16 %v1450, %v1449
        %v1466 = vpack.c.b16 %v1452, %v1451
        %v1467 = vpack.c.b16 %v1454, %v1453
        %v1468 = vpack.c.b16 %v1456, %v1455
        %v1469 = vpack.c.b16 %v1458, %v1457
        %v1470 = vpack.c.b16 %v1460, %v1459
        %v1471 = vpack.c.b16 %v1462, %v1461
        %v1472 = vpack.c.b16 %v1464, %v1463
        %1481 = vmatprep.subr.bf16.mxu0 0
        %1482 = vmatpush1.bf16.msra.mxu0 %v1472
        %1483 = vmatprep.subr.bf16.mxu0 0
        %1484 = vmatpush1.bf16.msra.mxu0 %v1471
        %1485 = vmatprep.subr.bf16.mxu0 0
        %1486 = vmatpush1.bf16.msra.mxu0 %v1470
        %1487 = vmatprep.subr.bf16.mxu0 0
        %1488 = vmatpush1.bf16.msra.mxu0 %v1469
        %1489 = vmatprep.subr.bf16.mxu0 0
        %1490 = vmatpush1.bf16.msra.mxu0 %v1468
        %1491 = vmatprep.subr.bf16.mxu0 0
        %1492 = vmatpush1.bf16.msra.mxu0 %v1467
        %1493 = vmatprep.subr.bf16.mxu0 0
        %1494 = vmatpush1.bf16.msra.mxu0 %v1466
        %1495 = vmatprep.subr.bf16.mxu0 0
        %1496 = vmatpush1.bf16.msra.mxu0 %v1465
        %1497 = vmatprep.subr.bf16.mxu0 0
        %1498 = vmatpush2.bf16.msra.mxu0 0
        %1499 = vmatprep.subr.bf16.mxu0 0
        %1500 = vmatpush2.bf16.msra.mxu0 0
        %1501 = vmatprep.subr.bf16.mxu0 0
        %1502 = vmatpush2.bf16.msra.mxu0 0
        %1503 = vmatprep.subr.bf16.mxu0 0
        %1504 = vmatpush2.bf16.msra.mxu0 0
        %1505 = vmatprep.subr.bf16.mxu0 0
        %1506 = vmatpush2.bf16.msra.mxu0 0
        %1507 = vmatprep.subr.bf16.mxu0 0
        %1508 = vmatpush2.bf16.msra.mxu0 0
        %1509 = vmatprep.subr.bf16.mxu0 0
        %1510 = vmatpush2.bf16.msra.mxu0 0
        %1511 = vmatprep.subr.bf16.mxu0 0
        %1512 = vmatpush2.bf16.msra.mxu0 0
        %1513 = vmatprep.mubr.bf16.mxu0 0
        %1514 = vmatmul.mubr.bf16.gmra.mxu0 %v1404
        %v1515 = vpop.f32.mrf.mxu0
        %v1516 = vadd.f32 %v1431, %v1515
        %v1517 = vpop.f32.mrf.mxu0
        %v1518 = vpop.f32.mrf.mxu0
        %v1519 = vadd.f32 %v1431, %v1518
        %v1520 = vpop.f32.mrf.mxu0
        %1521 = vmatprep.mubr.bf16.mxu0 0
        %1522 = vmatmul.mubr.bf16.gmra.mxu0 %v1405
        %v1523 = vpop.f32.mrf.mxu0
        %v1524 = vadd.f32 %v1431, %v1523
        %v1525 = vpop.f32.mrf.mxu0
        %v1526 = vpop.f32.mrf.mxu0
        %v1527 = vadd.f32 %v1431, %v1526
        %v1528 = vpop.f32.mrf.mxu0
        %1529 = vmatprep.mubr.bf16.mxu0 0
        %1530 = vmatmul.mubr.bf16.gmra.mxu0 %v1406
        %v1531 = vpop.f32.mrf.mxu0
        %v1532 = vadd.f32 %v1431, %v1531
        %v1533 = vpop.f32.mrf.mxu0
        %v1534 = vpop.f32.mrf.mxu0
        %v1535 = vadd.f32 %v1431, %v1534
        %v1536 = vpop.f32.mrf.mxu0
        %1537 = vmatprep.mubr.bf16.mxu0 0
        %1538 = vmatmul.mubr.bf16.gmra.mxu0 %v1407
        %v1539 = vpop.f32.mrf.mxu0
        %v1540 = vadd.f32 %v1431, %v1539
        %v1541 = vpop.f32.mrf.mxu0
        %v1542 = vpop.f32.mrf.mxu0
        %v1543 = vadd.f32 %v1431, %v1542
        %v1544 = vpop.f32.mrf.mxu0
        %1545 = vdwg.mxu0
        %v1546 = vpack.c.bf16 %v1519, %v1516
        %v1547 = vpack.c.bf16 %v1527, %v1524
        %v1548 = vpack.c.bf16 %v1535, %v1532
        %v1549 = vpack.c.bf16 %v1543, %v1540
        %v1550 = vld [vmem:[%s6] sm:$0xf]
        %v1551 = vld [vmem:[%s6 + $0x4] sm:$0xf]
        %v1552 = vld [vmem:[%s6 + $0x8] sm:$0xf]
        %v1553 = vld [vmem:[%s6 + $0xc] sm:$0xf]
        %v1558 = vunpack.c.l.b16 %v1550
        %v1559 = vunpack.c.l.b16 %v1551
        %v1560 = vunpack.c.l.b16 %v1552
        %v1561 = vunpack.c.l.b16 %v1553
        %v1562 = vpack.c.b16 %v1559, %v1558
        %v1563 = vpack.c.b16 %v1561, %v1560
        %1566 = vxpose.xlu0.c.b16.start [1/8] %v1562, 128
        %1567 = vxpose.xlu0.c.b16.cont [2/8] %v1563, 128
        %1568 = vxpose.xlu0.c.b16.cont [3/8] 0, 128
        %1569 = vxpose.xlu0.c.b16.cont [4/8] 0, 128
        %1570 = vxpose.xlu0.c.b16.cont [5/8] 0, 128
        %1571 = vxpose.xlu0.c.b16.cont [6/8] 0, 128
        %1572 = vxpose.xlu0.c.b16.cont [7/8] 0, 128
        %1573 = vxpose.xlu0.c.b16.end [8/8] 0, 128
        %v1574 = vpop.trf.xlu0
        %v1575 = vpop.trf.xlu0
        %v1576 = vpop.trf.xlu0
        %v1577 = vpop.trf.xlu0
        %v1578 = vpop.trf.xlu0
        %v1579 = vpop.trf.xlu0
        %v1580 = vpop.trf.xlu0
        %v1581 = vpop.trf.xlu0
        %v1583 = vsel %vm791, %v1574, 0
        %v1586 = vsel %vm791, %v1575, 0
        %v1589 = vsel %vm791, %v1576, 0
        %v1592 = vsel %vm791, %v1577, 0
        %1594 = vmatprep.subr.bf16.mxu0 0
        %1595 = vmatpush1.bf16.msra.mxu0 0
        %1596 = vmatprep.subr.bf16.mxu0 0
        %1597 = vmatpush1.bf16.msra.mxu0 0
        %1598 = vmatprep.subr.bf16.mxu0 0
        %1599 = vmatpush1.bf16.msra.mxu0 0
        %1600 = vmatprep.subr.bf16.mxu0 0
        %1601 = vmatpush1.bf16.msra.mxu0 0
        %1602 = vmatprep.subr.bf16.mxu0 0
        %1603 = vmatpush1.bf16.msra.mxu0 0
        %1604 = vmatprep.subr.bf16.mxu0 0
        %1605 = vmatpush1.bf16.msra.mxu0 0
        %1606 = vmatprep.subr.bf16.mxu0 %v1549
        %1607 = vmatpush1.bf16.msra.mxu0 %v1547
        %1608 = vmatprep.subr.bf16.mxu0 %v1548
        %1609 = vmatpush1.bf16.msra.mxu0 %v1546
        %1610 = vmatprep.subr.bf16.mxu0 0
        %1611 = vmatpush2.bf16.msra.mxu0 0
        %1612 = vmatprep.subr.bf16.mxu0 0
        %1613 = vmatpush2.bf16.msra.mxu0 0
        %1614 = vmatprep.subr.bf16.mxu0 0
        %1615 = vmatpush2.bf16.msra.mxu0 0
        %1616 = vmatprep.subr.bf16.mxu0 0
        %1617 = vmatpush2.bf16.msra.mxu0 0
        %1618 = vmatprep.subr.bf16.mxu0 0
        %1619 = vmatpush2.bf16.msra.mxu0 0
        %1620 = vmatprep.subr.bf16.mxu0 0
        %1621 = vmatpush2.bf16.msra.mxu0 0
        %1622 = vmatprep.subr.bf16.mxu0 0
        %1623 = vmatpush2.bf16.msra.mxu0 0
        %1624 = vmatprep.subr.bf16.mxu0 0
        %1625 = vmatpush2.bf16.msra.mxu0 0
        %1626 = vmatprep.mubr.bf16.mxu0 0
        %1627 = vmatmul.mubr.bf16.gmra.mxu0 %v1583
        %v1628 = vpop.f32.mrf.mxu0
        %v1629 = vadd.f32 0.0, %v1628
        %v1630 = vpop.f32.mrf.mxu0
        %v1631 = vadd.f32 0.0, %v1630
        %v1632 = vpop.f32.mrf.mxu0
        %v1633 = vadd.f32 0.0, %v1632
        %v1634 = vpop.f32.mrf.mxu0
        %v1635 = vadd.f32 0.0, %v1634
        %1636 = vmatprep.mubr.bf16.mxu0 0
        %1637 = vmatmul.mubr.bf16.gmra.mxu0 %v1586
        %v1638 = vpop.f32.mrf.mxu0
        %v1639 = vadd.f32 0.0, %v1638
        %v1640 = vpop.f32.mrf.mxu0
        %v1641 = vadd.f32 0.0, %v1640
        %v1642 = vpop.f32.mrf.mxu0
        %v1643 = vadd.f32 0.0, %v1642
        %v1644 = vpop.f32.mrf.mxu0
        %v1645 = vadd.f32 0.0, %v1644
        %1646 = vmatprep.mubr.bf16.mxu0 0
        %1647 = vmatmul.mubr.bf16.gmra.mxu0 %v1589
        %v1648 = vpop.f32.mrf.mxu0
        %v1649 = vadd.f32 0.0, %v1648
        %v1650 = vpop.f32.mrf.mxu0
        %v1651 = vadd.f32 0.0, %v1650
        %v1652 = vpop.f32.mrf.mxu0
        %v1653 = vadd.f32 0.0, %v1652
        %v1654 = vpop.f32.mrf.mxu0
        %v1655 = vadd.f32 0.0, %v1654
        %1656 = vmatprep.mubr.bf16.mxu0 0
        %1657 = vmatmul.mubr.bf16.gmra.mxu0 %v1592
        %v1658 = vpop.f32.mrf.mxu0
        %v1659 = vadd.f32 0.0, %v1658
        %v1660 = vpop.f32.mrf.mxu0
        %v1661 = vadd.f32 0.0, %v1660
        %v1662 = vpop.f32.mrf.mxu0
        %v1663 = vadd.f32 0.0, %v1662
        %v1664 = vpop.f32.mrf.mxu0
        %v1665 = vadd.f32 0.0, %v1664
        %1666 = vdwg.mxu0
        %v1667 = vpack.c.bf16 %v1633, %v1629
        %v1668 = vpack.c.bf16 %v1643, %v1639
        %1669 = vxpose.xlu0.c.b16.start [1/8] %v1667, 128
        %1670 = vxpose.xlu0.c.b16.cont [2/8] 0, 128
        %1671 = vxpose.xlu0.c.b16.cont [3/8] 0, 128
        %1672 = vxpose.xlu0.c.b16.cont [4/8] 0, 128
        %1673 = vxpose.xlu0.c.b16.cont [5/8] 0, 128
        %1674 = vxpose.xlu0.c.b16.cont [6/8] 0, 128
        %1675 = vxpose.xlu0.c.b16.cont [7/8] 0, 128
        %1676 = vxpose.xlu0.c.b16.end [8/8] 0, 128
        %v1677 = vpop.trf.xlu0
        %v1678 = vpop.trf.xlu0
        %v1679 = vpop.trf.xlu0
        %v1680 = vpop.trf.xlu0
        %v1681 = vpop.trf.xlu0
        %v1682 = vpop.trf.xlu0
        %v1683 = vpop.trf.xlu0
        %v1684 = vpop.trf.xlu0
        %vm1685 = vcmask 130048
        %v1687 = vsel %vm1685, %v1677, 0
        %v1690 = vsel %vm1685, %v1678, 0
        %v1693 = vsel %vm1685, %v1679, 0
        %v1696 = vsel %vm1685, %v1680, 0
        %v1699 = vsel %vm1685, %v1681, 0
        %v1702 = vsel %vm1685, %v1682, 0
        %v1705 = vsel %vm1685, %v1683, 0
        %v1708 = vsel %vm1685, %v1684, 0
        %1710 = vmatprep.subr.bf16.mxu0 0
        %1711 = vmatpush1.bf16.msra.mxu0 0
        %1712 = vmatprep.subr.bf16.mxu0 0
        %1713 = vmatpush1.bf16.msra.mxu0 0
        %1714 = vmatprep.subr.bf16.mxu0 0
        %1715 = vmatpush1.bf16.msra.mxu0 0
        %1716 = vmatprep.subr.bf16.mxu0 0
        %1717 = vmatpush1.bf16.msra.mxu0 0
        %1718 = vmatprep.subr.bf16.mxu0 0
        %1719 = vmatpush1.bf16.msra.mxu0 0
        %1720 = vmatprep.subr.bf16.mxu0 0
        %1721 = vmatpush1.bf16.msra.mxu0 0
        %1722 = vmatprep.subr.bf16.mxu0 0
        %1723 = vmatpush1.bf16.msra.mxu0 0
        %1724 = vmatprep.subr.bf16.mxu0 0
        %1725 = vmatpush1.bf16.msra.mxu0 %v1668
        %1726 = vmatprep.subr.bf16.mxu0 0
        %1727 = vmatpush2.bf16.msra.mxu0 0
        %1728 = vmatprep.subr.bf16.mxu0 0
        %1729 = vmatpush2.bf16.msra.mxu0 0
        %1730 = vmatprep.subr.bf16.mxu0 0
        %1731 = vmatpush2.bf16.msra.mxu0 0
        %1732 = vmatprep.subr.bf16.mxu0 0
        %1733 = vmatpush2.bf16.msra.mxu0 0
        %1734 = vmatprep.subr.bf16.mxu0 0
        %1735 = vmatpush2.bf16.msra.mxu0 0
        %1736 = vmatprep.subr.bf16.mxu0 0
        %1737 = vmatpush2.bf16.msra.mxu0 0
        %1738 = vmatprep.subr.bf16.mxu0 0
        %1739 = vmatpush2.bf16.msra.mxu0 0
        %1740 = vmatprep.subr.bf16.mxu0 0
        %1741 = vmatpush2.bf16.msra.mxu0 0
        %1742 = vmatprep.mubr.bf16.mxu0 0
        %1743 = vmatmul.mubr.bf16.gmra.mxu0 %v1687
        %v1744 = vpop.f32.mrf.mxu0
        %v1745 = vadd.f32 0.0, %v1744
        %v1746 = vpop.f32.mrf.mxu0
        %v1747 = vpop.f32.mrf.mxu0
        %v1748 = vadd.f32 0.0, %v1747
        %v1749 = vpop.f32.mrf.mxu0
        %1750 = vmatprep.mubr.bf16.mxu0 0
        %1751 = vmatmul.mubr.bf16.gmra.mxu0 %v1690
        %v1752 = vpop.f32.mrf.mxu0
        %v1753 = vadd.f32 0.0, %v1752
        %v1754 = vpop.f32.mrf.mxu0
        %v1755 = vpop.f32.mrf.mxu0
        %v1756 = vadd.f32 0.0, %v1755
        %v1757 = vpop.f32.mrf.mxu0
        %1758 = vmatprep.mubr.bf16.mxu0 0
        %1759 = vmatmul.mubr.bf16.gmra.mxu0 %v1693
        %v1760 = vpop.f32.mrf.mxu0
        %v1761 = vadd.f32 0.0, %v1760
        %v1762 = vpop.f32.mrf.mxu0
        %v1763 = vpop.f32.mrf.mxu0
        %v1764 = vadd.f32 0.0, %v1763
        %v1765 = vpop.f32.mrf.mxu0
        %1766 = vmatprep.mubr.bf16.mxu0 0
        %1767 = vmatmul.mubr.bf16.gmra.mxu0 %v1696
        %v1768 = vpop.f32.mrf.mxu0
        %v1769 = vadd.f32 0.0, %v1768
        %v1770 = vpop.f32.mrf.mxu0
        %v1771 = vpop.f32.mrf.mxu0
        %v1772 = vadd.f32 0.0, %v1771
        %v1773 = vpop.f32.mrf.mxu0
        %1774 = vmatprep.mubr.bf16.mxu0 0
        %1775 = vmatmul.mubr.bf16.gmra.mxu0 %v1699
        %v1776 = vpop.f32.mrf.mxu0
        %v1777 = vadd.f32 0.0, %v1776
        %v1778 = vpop.f32.mrf.mxu0
        %v1779 = vpop.f32.mrf.mxu0
        %v1780 = vadd.f32 0.0, %v1779
        %v1781 = vpop.f32.mrf.mxu0
        %1782 = vmatprep.mubr.bf16.mxu0 0
        %1783 = vmatmul.mubr.bf16.gmra.mxu0 %v1702
        %v1784 = vpop.f32.mrf.mxu0
        %v1785 = vadd.f32 0.0, %v1784
        %v1786 = vpop.f32.mrf.mxu0
        %v1787 = vpop.f32.mrf.mxu0
        %v1788 = vadd.f32 0.0, %v1787
        %v1789 = vpop.f32.mrf.mxu0
        %1790 = vmatprep.mubr.bf16.mxu0 0
        %1791 = vmatmul.mubr.bf16.gmra.mxu0 %v1705
        %v1792 = vpop.f32.mrf.mxu0
        %v1793 = vadd.f32 0.0, %v1792
        %v1794 = vpop.f32.mrf.mxu0
        %v1795 = vpop.f32.mrf.mxu0
        %v1796 = vadd.f32 0.0, %v1795
        %v1797 = vpop.f32.mrf.mxu0
        %1798 = vmatprep.mubr.bf16.mxu0 0
        %1799 = vmatmul.mubr.bf16.gmra.mxu0 %v1708
        %v1800 = vpop.f32.mrf.mxu0
        %v1801 = vadd.f32 0.0, %v1800
        %v1802 = vpop.f32.mrf.mxu0
        %v1803 = vpop.f32.mrf.mxu0
        %v1804 = vadd.f32 0.0, %v1803
        %v1805 = vpop.f32.mrf.mxu0
        %1806 = vdwg.mxu0
        %1807 = vmax.xlane.f32.xlu0 %v1745
        %v1808 = vpop.xlane.xlu0 %1807
        %1809 = vmax.xlane.f32.xlu0 %v1748
        %v1810 = vpop.xlane.xlu0 %1809
        %1811 = vmax.xlane.f32.xlu0 %v1753
        %v1812 = vpop.xlane.xlu0 %1811
        %1813 = vmax.xlane.f32.xlu0 %v1756
        %v1814 = vpop.xlane.xlu0 %1813
        %1815 = vmax.xlane.f32.xlu0 %v1761
        %v1816 = vpop.xlane.xlu0 %1815
        %1817 = vmax.xlane.f32.xlu0 %v1764
        %v1818 = vpop.xlane.xlu0 %1817
        %1819 = vmax.xlane.f32.xlu0 %v1769
        %v1820 = vpop.xlane.xlu0 %1819
        %1821 = vmax.xlane.f32.xlu0 %v1772
        %v1822 = vpop.xlane.xlu0 %1821
        %1823 = vmax.xlane.f32.xlu0 %v1777
        %v1824 = vpop.xlane.xlu0 %1823
        %1825 = vmax.xlane.f32.xlu0 %v1780
        %v1826 = vpop.xlane.xlu0 %1825
        %1827 = vmax.xlane.f32.xlu0 %v1785
        %v1828 = vpop.xlane.xlu0 %1827
        %1829 = vmax.xlane.f32.xlu0 %v1788
        %v1830 = vpop.xlane.xlu0 %1829
        %1831 = vmax.xlane.f32.xlu0 %v1793
        %v1832 = vpop.xlane.xlu0 %1831
        %1833 = vmax.xlane.f32.xlu0 %v1796
        %v1834 = vpop.xlane.xlu0 %1833
        %1835 = vmax.xlane.f32.xlu0 %v1801
        %v1836 = vpop.xlane.xlu0 %1835
        %1837 = vmax.xlane.f32.xlu0 %v1804
        %v1838 = vpop.xlane.xlu0 %1837
        %v1839 = vsub.f32 %v1745, %v1808
        %v1840 = vsub.f32 %v1748, %v1810
        %v1841 = vsub.f32 %v1753, %v1812
        %v1842 = vsub.f32 %v1756, %v1814
        %v1843 = vsub.f32 %v1761, %v1816
        %v1844 = vsub.f32 %v1764, %v1818
        %v1845 = vsub.f32 %v1769, %v1820
        %v1846 = vsub.f32 %v1772, %v1822
        %v1847 = vsub.f32 %v1777, %v1824
        %v1848 = vsub.f32 %v1780, %v1826
        %v1849 = vsub.f32 %v1785, %v1828
        %v1850 = vsub.f32 %v1788, %v1830
        %v1851 = vsub.f32 %v1793, %v1832
        %v1852 = vsub.f32 %v1796, %v1834
        %v1853 = vsub.f32 %v1801, %v1836
        %v1854 = vsub.f32 %v1804, %v1838
        %v1855 = vmul.f32 %v1839, 1.442695
        %v1856 = vpow.pop %v1855
        %v1857 = vmul.f32 %v1840, 1.442695
        %v1858 = vpow.pop %v1857
        %v1859 = vmul.f32 %v1841, 1.442695
        %v1860 = vpow.pop %v1859
        %v1861 = vmul.f32 %v1842, 1.442695
        %v1862 = vpow.pop %v1861
        %v1863 = vmul.f32 %v1843, 1.442695
        %v1864 = vpow.pop %v1863
        %v1865 = vmul.f32 %v1844, 1.442695
        %v1866 = vpow.pop %v1865
        %v1867 = vmul.f32 %v1845, 1.442695
        %v1868 = vpow.pop %v1867
        %v1869 = vmul.f32 %v1846, 1.442695
        %v1870 = vpow.pop %v1869
        %v1871 = vmul.f32 %v1847, 1.442695
        %v1872 = vpow.pop %v1871
        %v1873 = vmul.f32 %v1848, 1.442695
        %v1874 = vpow.pop %v1873
        %v1875 = vmul.f32 %v1849, 1.442695
        %v1876 = vpow.pop %v1875
        %v1877 = vmul.f32 %v1850, 1.442695
        %v1878 = vpow.pop %v1877
        %v1879 = vmul.f32 %v1851, 1.442695
        %v1880 = vpow.pop %v1879
        %v1881 = vmul.f32 %v1852, 1.442695
        %v1882 = vpow.pop %v1881
        %v1883 = vmul.f32 %v1853, 1.442695
        %v1884 = vpow.pop %v1883
        %v1885 = vmul.f32 %v1854, 1.442695
        %v1886 = vpow.pop %v1885
        %1887 = vadd.xlane.f32.xlu0 %v1856
        %v1888 = vpop.xlane.xlu0 %1887
        %1889 = vadd.xlane.f32.xlu0 %v1858
        %v1890 = vpop.xlane.xlu0 %1889
        %1891 = vadd.xlane.f32.xlu0 %v1860
        %v1892 = vpop.xlane.xlu0 %1891
        %1893 = vadd.xlane.f32.xlu0 %v1862
        %v1894 = vpop.xlane.xlu0 %1893
        %1895 = vadd.xlane.f32.xlu0 %v1864
        %v1896 = vpop.xlane.xlu0 %1895
        %1897 = vadd.xlane.f32.xlu0 %v1866
        %v1898 = vpop.xlane.xlu0 %1897
        %1899 = vadd.xlane.f32.xlu0 %v1868
        %v1900 = vpop.xlane.xlu0 %1899
        %1901 = vadd.xlane.f32.xlu0 %v1870
        %v1902 = vpop.xlane.xlu0 %1901
        %1903 = vadd.xlane.f32.xlu0 %v1872
        %v1904 = vpop.xlane.xlu0 %1903
        %1905 = vadd.xlane.f32.xlu0 %v1874
        %v1906 = vpop.xlane.xlu0 %1905
        %1907 = vadd.xlane.f32.xlu0 %v1876
        %v1908 = vpop.xlane.xlu0 %1907
        %1909 = vadd.xlane.f32.xlu0 %v1878
        %v1910 = vpop.xlane.xlu0 %1909
        %1911 = vadd.xlane.f32.xlu0 %v1880
        %v1912 = vpop.xlane.xlu0 %1911
        %1913 = vadd.xlane.f32.xlu0 %v1882
        %v1914 = vpop.xlane.xlu0 %1913
        %1915 = vadd.xlane.f32.xlu0 %v1884
        %v1916 = vpop.xlane.xlu0 %1915
        %1917 = vadd.xlane.f32.xlu0 %v1886
        %v1918 = vpop.xlane.xlu0 %1917
        %v1919 = vrcp.pop %v1888
        %v1920 = vrcp.pop %v1890
        %v1921 = vrcp.pop %v1892
        %v1922 = vrcp.pop %v1894
        %v1923 = vrcp.pop %v1896
        %v1924 = vrcp.pop %v1898
        %v1925 = vrcp.pop %v1900
        %v1926 = vrcp.pop %v1902
        %v1927 = vrcp.pop %v1904
        %v1928 = vrcp.pop %v1906
        %v1929 = vrcp.pop %v1908
        %v1930 = vrcp.pop %v1910
        %v1931 = vrcp.pop %v1912
        %v1932 = vrcp.pop %v1914
        %v1933 = vrcp.pop %v1916
        %v1934 = vrcp.pop %v1918
        %v1935 = vmul.f32 %v1856, %v1919
        %v1936 = vmul.f32 %v1858, %v1920
        %v1937 = vmul.f32 %v1860, %v1921
        %v1938 = vmul.f32 %v1862, %v1922
        %v1939 = vmul.f32 %v1864, %v1923
        %v1940 = vmul.f32 %v1866, %v1924
        %v1941 = vmul.f32 %v1868, %v1925
        %v1942 = vmul.f32 %v1870, %v1926
        %v1943 = vmul.f32 %v1872, %v1927
        %v1944 = vmul.f32 %v1874, %v1928
        %v1945 = vmul.f32 %v1876, %v1929
        %v1946 = vmul.f32 %v1878, %v1930
        %v1947 = vmul.f32 %v1880, %v1931
        %v1948 = vmul.f32 %v1882, %v1932
        %v1949 = vmul.f32 %v1884, %v1933
        %v1950 = vmul.f32 %v1886, %v1934
        %v1951 = vpack.c.bf16 %v1653, %v1649
        %v1952 = vpack.c.bf16 %v1663, %v1659
        %v1953 = vpack.c.bf16 %v1936, %v1935
        %v1954 = vpack.c.bf16 %v1938, %v1937
        %v1955 = vpack.c.bf16 %v1940, %v1939
        %v1956 = vpack.c.bf16 %v1942, %v1941
        %v1957 = vpack.c.bf16 %v1944, %v1943
        %v1958 = vpack.c.bf16 %v1946, %v1945
        %v1959 = vpack.c.bf16 %v1948, %v1947
        %v1960 = vpack.c.bf16 %v1950, %v1949
        %1961 = vmatprep.subr.bf16.mxu0 0
        %1962 = vmatpush1.bf16.xpose.msra.mxu0 %v1960
        %1963 = vmatprep.subr.bf16.mxu0 0
        %1964 = vmatpush1.bf16.xpose.msra.mxu0 %v1959
        %1965 = vmatprep.subr.bf16.mxu0 0
        %1966 = vmatpush1.bf16.xpose.msra.mxu0 %v1958
        %1967 = vmatprep.subr.bf16.mxu0 0
        %1968 = vmatpush1.bf16.xpose.msra.mxu0 %v1957
        %1969 = vmatprep.subr.bf16.mxu0 0
        %1970 = vmatpush1.bf16.xpose.msra.mxu0 %v1956
        %1971 = vmatprep.subr.bf16.mxu0 0
        %1972 = vmatpush1.bf16.xpose.msra.mxu0 %v1955
        %1973 = vmatprep.subr.bf16.mxu0 0
        %1974 = vmatpush1.bf16.xpose.msra.mxu0 %v1954
        %1975 = vmatprep.subr.bf16.mxu0 0
        %1976 = vmatpush1.bf16.xpose.msra.mxu0 %v1953
        %1977 = vmatprep.subr.bf16.mxu0 0
        %1978 = vmatpush2.bf16.xpose.msra.mxu0 0
        %1979 = vmatprep.subr.bf16.mxu0 0
        %1980 = vmatpush2.bf16.xpose.msra.mxu0 0
        %1981 = vmatprep.subr.bf16.mxu0 0
        %1982 = vmatpush2.bf16.xpose.msra.mxu0 0
        %1983 = vmatprep.subr.bf16.mxu0 0
        %1984 = vmatpush2.bf16.xpose.msra.mxu0 0
        %1985 = vmatprep.subr.bf16.mxu0 0
        %1986 = vmatpush2.bf16.xpose.msra.mxu0 0
        %1987 = vmatprep.subr.bf16.mxu0 0
        %1988 = vmatpush2.bf16.xpose.msra.mxu0 0
        %1989 = vmatprep.subr.bf16.mxu0 0
        %1990 = vmatpush2.bf16.xpose.msra.mxu0 0
        %1991 = vmatprep.subr.bf16.mxu0 0
        %1992 = vmatpush2.bf16.xpose.msra.mxu0 0
        %1993 = vmatprep.mubr.bf16.mxu0 0
        %1994 = vmatmul.mubr.bf16.gmra.mxu0 %v1951
        %v1995 = vpop.f32.mrf.mxu0
        %v1996 = vadd.f32 %v1300, %v1995
        %v1997 = vpop.f32.mrf.mxu0
        %v1998 = vpop.f32.mrf.mxu0
        %v1999 = vadd.f32 %v1301, %v1998
        %v2000 = vpop.f32.mrf.mxu0
        %2001 = vmatprep.mubr.bf16.mxu0 0
        %2002 = vmatmul.mubr.bf16.gmra.mxu0 %v1952
        %v2003 = vpop.f32.mrf.mxu0
        %v2004 = vadd.f32 %v1302, %v2003
        %v2005 = vpop.f32.mrf.mxu0
        %v2006 = vpop.f32.mrf.mxu0
        %v2007 = vadd.f32 %v1303, %v2006
        %v2008 = vpop.f32.mrf.mxu0
        %2009 = vdwg.mxu0
        %v2010 = vpack.c.bf16 %v1635, %v1631
        %v2011 = vpack.c.bf16 %v1645, %v1641
        %2012 = vxpose.xlu0.c.b16.start [1/8] %v2010, 128
        %2013 = vxpose.xlu0.c.b16.cont [2/8] 0, 128
        %2014 = vxpose.xlu0.c.b16.cont [3/8] 0, 128
        %2015 = vxpose.xlu0.c.b16.cont [4/8] 0, 128
        %2016 = vxpose.xlu0.c.b16.cont [5/8] 0, 128
        %2017 = vxpose.xlu0.c.b16.cont [6/8] 0, 128
        %2018 = vxpose.xlu0.c.b16.cont [7/8] 0, 128
        %2019 = vxpose.xlu0.c.b16.end [8/8] 0, 128
        %v2020 = vpop.trf.xlu0
        %v2021 = vpop.trf.xlu0
        %v2022 = vpop.trf.xlu0
        %v2023 = vpop.trf.xlu0
        %v2024 = vpop.trf.xlu0
        %v2025 = vpop.trf.xlu0
        %v2026 = vpop.trf.xlu0
        %v2027 = vpop.trf.xlu0
        %v2029 = vsel %vm1685, %v2020, 0
        %v2032 = vsel %vm1685, %v2021, 0
        %v2035 = vsel %vm1685, %v2022, 0
        %v2038 = vsel %vm1685, %v2023, 0
        %v2041 = vsel %vm1685, %v2024, 0
        %v2044 = vsel %vm1685, %v2025, 0
        %v2047 = vsel %vm1685, %v2026, 0
        %v2050 = vsel %vm1685, %v2027, 0
        %2052 = vmatprep.subr.bf16.mxu0 0
        %2053 = vmatpush1.bf16.msra.mxu0 0
        %2054 = vmatprep.subr.bf16.mxu0 0
        %2055 = vmatpush1.bf16.msra.mxu0 0
        %2056 = vmatprep.subr.bf16.mxu0 0
        %2057 = vmatpush1.bf16.msra.mxu0 0
        %2058 = vmatprep.subr.bf16.mxu0 0
        %2059 = vmatpush1.bf16.msra.mxu0 0
        %2060 = vmatprep.subr.bf16.mxu0 0
        %2061 = vmatpush1.bf16.msra.mxu0 0
        %2062 = vmatprep.subr.bf16.mxu0 0
        %2063 = vmatpush1.bf16.msra.mxu0 0
        %2064 = vmatprep.subr.bf16.mxu0 0
        %2065 = vmatpush1.bf16.msra.mxu0 0
        %2066 = vmatprep.subr.bf16.mxu0 0
        %2067 = vmatpush1.bf16.msra.mxu0 %v2011
        %2068 = vmatprep.subr.bf16.mxu0 0
        %2069 = vmatpush2.bf16.msra.mxu0 0
        %2070 = vmatprep.subr.bf16.mxu0 0
        %2071 = vmatpush2.bf16.msra.mxu0 0
        %2072 = vmatprep.subr.bf16.mxu0 0
        %2073 = vmatpush2.bf16.msra.mxu0 0
        %2074 = vmatprep.subr.bf16.mxu0 0
        %2075 = vmatpush2.bf16.msra.mxu0 0
        %2076 = vmatprep.subr.bf16.mxu0 0
        %2077 = vmatpush2.bf16.msra.mxu0 0
        %2078 = vmatprep.subr.bf16.mxu0 0
        %2079 = vmatpush2.bf16.msra.mxu0 0
        %2080 = vmatprep.subr.bf16.mxu0 0
        %2081 = vmatpush2.bf16.msra.mxu0 0
        %2082 = vmatprep.subr.bf16.mxu0 0
        %2083 = vmatpush2.bf16.msra.mxu0 0
        %2084 = vmatprep.mubr.bf16.mxu0 0
        %2085 = vmatmul.mubr.bf16.gmra.mxu0 %v2029
        %v2086 = vpop.f32.mrf.mxu0
        %v2087 = vadd.f32 0.0, %v2086
        %v2088 = vpop.f32.mrf.mxu0
        %v2089 = vpop.f32.mrf.mxu0
        %v2090 = vadd.f32 0.0, %v2089
        %v2091 = vpop.f32.mrf.mxu0
        %2092 = vmatprep.mubr.bf16.mxu0 0
        %2093 = vmatmul.mubr.bf16.gmra.mxu0 %v2032
        %v2094 = vpop.f32.mrf.mxu0
        %v2095 = vadd.f32 0.0, %v2094
        %v2096 = vpop.f32.mrf.mxu0
        %v2097 = vpop.f32.mrf.mxu0
        %v2098 = vadd.f32 0.0, %v2097
        %v2099 = vpop.f32.mrf.mxu0
        %2100 = vmatprep.mubr.bf16.mxu0 0
        %2101 = vmatmul.mubr.bf16.gmra.mxu0 %v2035
        %v2102 = vpop.f32.mrf.mxu0
        %v2103 = vadd.f32 0.0, %v2102
        %v2104 = vpop.f32.mrf.mxu0
        %v2105 = vpop.f32.mrf.mxu0
        %v2106 = vadd.f32 0.0, %v2105
        %v2107 = vpop.f32.mrf.mxu0
        %2108 = vmatprep.mubr.bf16.mxu0 0
        %2109 = vmatmul.mubr.bf16.gmra.mxu0 %v2038
        %v2110 = vpop.f32.mrf.mxu0
        %v2111 = vadd.f32 0.0, %v2110
        %v2112 = vpop.f32.mrf.mxu0
        %v2113 = vpop.f32.mrf.mxu0
        %v2114 = vadd.f32 0.0, %v2113
        %v2115 = vpop.f32.mrf.mxu0
        %2116 = vmatprep.mubr.bf16.mxu0 0
        %2117 = vmatmul.mubr.bf16.gmra.mxu0 %v2041
        %v2118 = vpop.f32.mrf.mxu0
        %v2119 = vadd.f32 0.0, %v2118
        %v2120 = vpop.f32.mrf.mxu0
        %v2121 = vpop.f32.mrf.mxu0
        %v2122 = vadd.f32 0.0, %v2121
        %v2123 = vpop.f32.mrf.mxu0
        %2124 = vmatprep.mubr.bf16.mxu0 0
        %2125 = vmatmul.mubr.bf16.gmra.mxu0 %v2044
        %v2126 = vpop.f32.mrf.mxu0
        %v2127 = vadd.f32 0.0, %v2126
        %v2128 = vpop.f32.mrf.mxu0
        %v2129 = vpop.f32.mrf.mxu0
        %v2130 = vadd.f32 0.0, %v2129
        %v2131 = vpop.f32.mrf.mxu0
        %2132 = vmatprep.mubr.bf16.mxu0 0
        %2133 = vmatmul.mubr.bf16.gmra.mxu0 %v2047
        %v2134 = vpop.f32.mrf.mxu0
        %v2135 = vadd.f32 0.0, %v2134
        %v2136 = vpop.f32.mrf.mxu0
        %v2137 = vpop.f32.mrf.mxu0
        %v2138 = vadd.f32 0.0, %v2137
        %v2139 = vpop.f32.mrf.mxu0
        %2140 = vmatprep.mubr.bf16.mxu0 0
        %2141 = vmatmul.mubr.bf16.gmra.mxu0 %v2050
        %v2142 = vpop.f32.mrf.mxu0
        %v2143 = vadd.f32 0.0, %v2142
        %v2144 = vpop.f32.mrf.mxu0
        %v2145 = vpop.f32.mrf.mxu0
        %v2146 = vadd.f32 0.0, %v2145
        %v2147 = vpop.f32.mrf.mxu0
        %2148 = vdwg.mxu0
        %2149 = vmax.xlane.f32.xlu0 %v2087
        %v2150 = vpop.xlane.xlu0 %2149
        %2151 = vmax.xlane.f32.xlu0 %v2090
        %v2152 = vpop.xlane.xlu0 %2151
        %2153 = vmax.xlane.f32.xlu0 %v2095
        %v2154 = vpop.xlane.xlu0 %2153
        %2155 = vmax.xlane.f32.xlu0 %v2098
        %v2156 = vpop.xlane.xlu0 %2155
        %2157 = vmax.xlane.f32.xlu0 %v2103
        %v2158 = vpop.xlane.xlu0 %2157
        %2159 = vmax.xlane.f32.xlu0 %v2106
        %v2160 = vpop.xlane.xlu0 %2159
        %2161 = vmax.xlane.f32.xlu0 %v2111
        %v2162 = vpop.xlane.xlu0 %2161
        %2163 = vmax.xlane.f32.xlu0 %v2114
        %v2164 = vpop.xlane.xlu0 %2163
        %2165 = vmax.xlane.f32.xlu0 %v2119
        %v2166 = vpop.xlane.xlu0 %2165
        %2167 = vmax.xlane.f32.xlu0 %v2122
        %v2168 = vpop.xlane.xlu0 %2167
        %2169 = vmax.xlane.f32.xlu0 %v2127
        %v2170 = vpop.xlane.xlu0 %2169
        %2171 = vmax.xlane.f32.xlu0 %v2130
        %v2172 = vpop.xlane.xlu0 %2171
        %2173 = vmax.xlane.f32.xlu0 %v2135
        %v2174 = vpop.xlane.xlu0 %2173
        %2175 = vmax.xlane.f32.xlu0 %v2138
        %v2176 = vpop.xlane.xlu0 %2175
        %2177 = vmax.xlane.f32.xlu0 %v2143
        %v2178 = vpop.xlane.xlu0 %2177
        %2179 = vmax.xlane.f32.xlu0 %v2146
        %v2180 = vpop.xlane.xlu0 %2179
        %v2181 = vsub.f32 %v2087, %v2150
        %v2182 = vsub.f32 %v2090, %v2152
        %v2183 = vsub.f32 %v2095, %v2154
        %v2184 = vsub.f32 %v2098, %v2156
        %v2185 = vsub.f32 %v2103, %v2158
        %v2186 = vsub.f32 %v2106, %v2160
        %v2187 = vsub.f32 %v2111, %v2162
        %v2188 = vsub.f32 %v2114, %v2164
        %v2189 = vsub.f32 %v2119, %v2166
        %v2190 = vsub.f32 %v2122, %v2168
        %v2191 = vsub.f32 %v2127, %v2170
        %v2192 = vsub.f32 %v2130, %v2172
        %v2193 = vsub.f32 %v2135, %v2174
        %v2194 = vsub.f32 %v2138, %v2176
        %v2195 = vsub.f32 %v2143, %v2178
        %v2196 = vsub.f32 %v2146, %v2180
        %v2197 = vmul.f32 %v2181, 1.442695
        %v2198 = vpow.pop %v2197
        %v2199 = vmul.f32 %v2182, 1.442695
        %v2200 = vpow.pop %v2199
        %v2201 = vmul.f32 %v2183, 1.442695
        %v2202 = vpow.pop %v2201
        %v2203 = vmul.f32 %v2184, 1.442695
        %v2204 = vpow.pop %v2203
        %v2205 = vmul.f32 %v2185, 1.442695
        %v2206 = vpow.pop %v2205
        %v2207 = vmul.f32 %v2186, 1.442695
        %v2208 = vpow.pop %v2207
        %v2209 = vmul.f32 %v2187, 1.442695
        %v2210 = vpow.pop %v2209
        %v2211 = vmul.f32 %v2188, 1.442695
        %v2212 = vpow.pop %v2211
        %v2213 = vmul.f32 %v2189, 1.442695
        %v2214 = vpow.pop %v2213
        %v2215 = vmul.f32 %v2190, 1.442695
        %v2216 = vpow.pop %v2215
        %v2217 = vmul.f32 %v2191, 1.442695
        %v2218 = vpow.pop %v2217
        %v2219 = vmul.f32 %v2192, 1.442695
        %v2220 = vpow.pop %v2219
        %v2221 = vmul.f32 %v2193, 1.442695
        %v2222 = vpow.pop %v2221
        %v2223 = vmul.f32 %v2194, 1.442695
        %v2224 = vpow.pop %v2223
        %v2225 = vmul.f32 %v2195, 1.442695
        %v2226 = vpow.pop %v2225
        %v2227 = vmul.f32 %v2196, 1.442695
        %v2228 = vpow.pop %v2227
        %2229 = vadd.xlane.f32.xlu0 %v2198
        %v2230 = vpop.xlane.xlu0 %2229
        %2231 = vadd.xlane.f32.xlu0 %v2200
        %v2232 = vpop.xlane.xlu0 %2231
        %2233 = vadd.xlane.f32.xlu0 %v2202
        %v2234 = vpop.xlane.xlu0 %2233
        %2235 = vadd.xlane.f32.xlu0 %v2204
        %v2236 = vpop.xlane.xlu0 %2235
        %2237 = vadd.xlane.f32.xlu0 %v2206
        %v2238 = vpop.xlane.xlu0 %2237
        %2239 = vadd.xlane.f32.xlu0 %v2208
        %v2240 = vpop.xlane.xlu0 %2239
        %2241 = vadd.xlane.f32.xlu0 %v2210
        %v2242 = vpop.xlane.xlu0 %2241
        %2243 = vadd.xlane.f32.xlu0 %v2212
        %v2244 = vpop.xlane.xlu0 %2243
        %2245 = vadd.xlane.f32.xlu0 %v2214
        %v2246 = vpop.xlane.xlu0 %2245
        %2247 = vadd.xlane.f32.xlu0 %v2216
        %v2248 = vpop.xlane.xlu0 %2247
        %2249 = vadd.xlane.f32.xlu0 %v2218
        %v2250 = vpop.xlane.xlu0 %2249
        %2251 = vadd.xlane.f32.xlu0 %v2220
        %v2252 = vpop.xlane.xlu0 %2251
        %2253 = vadd.xlane.f32.xlu0 %v2222
        %v2254 = vpop.xlane.xlu0 %2253
        %2255 = vadd.xlane.f32.xlu0 %v2224
        %v2256 = vpop.xlane.xlu0 %2255
        %2257 = vadd.xlane.f32.xlu0 %v2226
        %v2258 = vpop.xlane.xlu0 %2257
        %2259 = vadd.xlane.f32.xlu0 %v2228
        %v2260 = vpop.xlane.xlu0 %2259
        %v2261 = vrcp.pop %v2230
        %v2262 = vrcp.pop %v2232
        %v2263 = vrcp.pop %v2234
        %v2264 = vrcp.pop %v2236
        %v2265 = vrcp.pop %v2238
        %v2266 = vrcp.pop %v2240
        %v2267 = vrcp.pop %v2242
        %v2268 = vrcp.pop %v2244
        %v2269 = vrcp.pop %v2246
        %v2270 = vrcp.pop %v2248
        %v2271 = vrcp.pop %v2250
        %v2272 = vrcp.pop %v2252
        %v2273 = vrcp.pop %v2254
        %v2274 = vrcp.pop %v2256
        %v2275 = vrcp.pop %v2258
        %v2276 = vrcp.pop %v2260
        %v2277 = vmul.f32 %v2198, %v2261
        %v2278 = vmul.f32 %v2200, %v2262
        %v2279 = vmul.f32 %v2202, %v2263
        %v2280 = vmul.f32 %v2204, %v2264
        %v2281 = vmul.f32 %v2206, %v2265
        %v2282 = vmul.f32 %v2208, %v2266
        %v2283 = vmul.f32 %v2210, %v2267
        %v2284 = vmul.f32 %v2212, %v2268
        %v2285 = vmul.f32 %v2214, %v2269
        %v2286 = vmul.f32 %v2216, %v2270
        %v2287 = vmul.f32 %v2218, %v2271
        %v2288 = vmul.f32 %v2220, %v2272
        %v2289 = vmul.f32 %v2222, %v2273
        %v2290 = vmul.f32 %v2224, %v2274
        %v2291 = vmul.f32 %v2226, %v2275
        %v2292 = vmul.f32 %v2228, %v2276
        %v2293 = vpack.c.bf16 %v1655, %v1651
        %v2294 = vpack.c.bf16 %v1665, %v1661
        %v2295 = vpack.c.bf16 %v2278, %v2277
        %v2296 = vpack.c.bf16 %v2280, %v2279
        %v2297 = vpack.c.bf16 %v2282, %v2281
        %v2298 = vpack.c.bf16 %v2284, %v2283
        %v2299 = vpack.c.bf16 %v2286, %v2285
        %v2300 = vpack.c.bf16 %v2288, %v2287
        %v2301 = vpack.c.bf16 %v2290, %v2289
        %v2302 = vpack.c.bf16 %v2292, %v2291
        %2303 = vmatprep.subr.bf16.mxu0 0
        %2304 = vmatpush1.bf16.xpose.msra.mxu0 %v2302
        %2305 = vmatprep.subr.bf16.mxu0 0
        %2306 = vmatpush1.bf16.xpose.msra.mxu0 %v2301
        %2307 = vmatprep.subr.bf16.mxu0 0
        %2308 = vmatpush1.bf16.xpose.msra.mxu0 %v2300
        %2309 = vmatprep.subr.bf16.mxu0 0
        %2310 = vmatpush1.bf16.xpose.msra.mxu0 %v2299
        %2311 = vmatprep.subr.bf16.mxu0 0
        %2312 = vmatpush1.bf16.xpose.msra.mxu0 %v2298
        %2313 = vmatprep.subr.bf16.mxu0 0
        %2314 = vmatpush1.bf16.xpose.msra.mxu0 %v2297
        %2315 = vmatprep.subr.bf16.mxu0 0
        %2316 = vmatpush1.bf16.xpose.msra.mxu0 %v2296
        %2317 = vmatprep.subr.bf16.mxu0 0
        %2318 = vmatpush1.bf16.xpose.msra.mxu0 %v2295
        %2319 = vmatprep.subr.bf16.mxu0 0
        %2320 = vmatpush2.bf16.xpose.msra.mxu0 0
        %2321 = vmatprep.subr.bf16.mxu0 0
        %2322 = vmatpush2.bf16.xpose.msra.mxu0 0
        %2323 = vmatprep.subr.bf16.mxu0 0
        %2324 = vmatpush2.bf16.xpose.msra.mxu0 0
        %2325 = vmatprep.subr.bf16.mxu0 0
        %2326 = vmatpush2.bf16.xpose.msra.mxu0 0
        %2327 = vmatprep.subr.bf16.mxu0 0
        %2328 = vmatpush2.bf16.xpose.msra.mxu0 0
        %2329 = vmatprep.subr.bf16.mxu0 0
        %2330 = vmatpush2.bf16.xpose.msra.mxu0 0
        %2331 = vmatprep.subr.bf16.mxu0 0
        %2332 = vmatpush2.bf16.xpose.msra.mxu0 0
        %2333 = vmatprep.subr.bf16.mxu0 0
        %2334 = vmatpush2.bf16.xpose.msra.mxu0 0
        %2335 = vmatprep.mubr.bf16.mxu0 0
        %2336 = vmatmul.mubr.bf16.gmra.mxu0 %v2293
        %v2337 = vpop.f32.mrf.mxu0
        %v2338 = vadd.f32 %v1308, %v2337
        %v2339 = vpop.f32.mrf.mxu0
        %v2340 = vpop.f32.mrf.mxu0
        %v2341 = vadd.f32 %v1309, %v2340
        %v2342 = vpop.f32.mrf.mxu0
        %2343 = vmatprep.mubr.bf16.mxu0 0
        %2344 = vmatmul.mubr.bf16.gmra.mxu0 %v2294
        %v2345 = vpop.f32.mrf.mxu0
        %v2346 = vadd.f32 %v1310, %v2345
        %v2347 = vpop.f32.mrf.mxu0
        %v2348 = vpop.f32.mrf.mxu0
        %v2349 = vadd.f32 %v1311, %v2348
        %v2350 = vpop.f32.mrf.mxu0
        %2351 = vdwg.mxu0
        %v2352 = vadd.f32 %v1996, %v1999
        %v2353 = vadd.f32 %v2352, %v2004
        %v2354 = vadd.f32 %v2353, %v2007
        %2355 = vadd.xlane.f32.xlu0 %v2354
        %v2356 = vpop.xlane.xlu0 %2355
        %v2357 = vrot.slane %v2356, 4
        %v2358 = vadd.f32 %v2356, %v2357
        %v2359 = vrot.slane %v2358, 2
        %v2360 = vadd.f32 %v2358, %v2359
        %v2361 = vrot.slane %v2360, 1
        %v2362 = vadd.f32 %v2360, %v2361
        %s2363 = vtos %v2362
        %s2364 = smul.f32 %s2363, 0.00024414063
        %v2365 = vmul.f32 %v1996, %v1996
        %v2366 = vmul.f32 %v1999, %v1999
        %v2367 = vmul.f32 %v2004, %v2004
        %v2368 = vmul.f32 %v2007, %v2007
        %v2369 = vadd.f32 %v2365, %v2366
        %v2370 = vadd.f32 %v2369, %v2367
        %v2371 = vadd.f32 %v2370, %v2368
        %2372 = vadd.xlane.f32.xlu0 %v2371
        %v2373 = vpop.xlane.xlu0 %2372
        %v2374 = vrot.slane %v2373, 4
        %v2375 = vadd.f32 %v2373, %v2374
        %v2376 = vrot.slane %v2375, 2
        %v2377 = vadd.f32 %v2375, %v2376
        %v2378 = vrot.slane %v2377, 1
        %v2379 = vadd.f32 %v2377, %v2378
        %s2380 = vtos %v2379
        %s2381 = smul.f32 %s2380, 0.00024414063
        %s2382 = smul.f32 %s2364, %s2364
        %s2383 = ssub.f32 %s2381, %s2382
        %v2384 = vstv %s2364
        %v2385 = vsub.f32 %v1996, %v2384
        %v2386 = vsub.f32 %v1999, %v2384
        %v2387 = vsub.f32 %v2004, %v2384
        %v2388 = vsub.f32 %v2007, %v2384
        %s2389 = sadd.f32 %s2383, 1e-05
        %v2390 = vstv %s2389
        %v2391 = vrsqrt.pop %v2390
        %s2392 = vtos %v2391
        %v2393 = vstv %s2392
        %v2394 = vmul.f32 %v2385, %v2393
        %v2395 = vmul.f32 %v2386, %v2393
        %v2396 = vmul.f32 %v2387, %v2393
        %v2397 = vmul.f32 %v2388, %v2393
        %v2398 = vadd.f32 %v2338, %v2341
        %v2399 = vadd.f32 %v2398, %v2346
        %v2400 = vadd.f32 %v2399, %v2349
        %2401 = vadd.xlane.f32.xlu0 %v2400
        %v2402 = vpop.xlane.xlu0 %2401
        %v2403 = vrot.slane %v2402, 4
        %v2404 = vadd.f32 %v2402, %v2403
        %v2405 = vrot.slane %v2404, 2
        %v2406 = vadd.f32 %v2404, %v2405
        %v2407 = vrot.slane %v2406, 1
        %v2408 = vadd.f32 %v2406, %v2407
        %s2409 = vtos %v2408
        %s2410 = smul.f32 %s2409, 0.00024414063
        %v2411 = vmul.f32 %v2338, %v2338
        %v2412 = vmul.f32 %v2341, %v2341
        %v2413 = vmul.f32 %v2346, %v2346
        %v2414 = vmul.f32 %v2349, %v2349
        %v2415 = vadd.f32 %v2411, %v2412
        %v2416 = vadd.f32 %v2415, %v2413
        %v2417 = vadd.f32 %v2416, %v2414
        %2418 = vadd.xlane.f32.xlu0 %v2417
        %v2419 = vpop.xlane.xlu0 %2418
        %v2420 = vrot.slane %v2419, 4
        %v2421 = vadd.f32 %v2419, %v2420
        %v2422 = vrot.slane %v2421, 2
        %v2423 = vadd.f32 %v2421, %v2422
        %v2424 = vrot.slane %v2423, 1
        %v2425 = vadd.f32 %v2423, %v2424
        %s2426 = vtos %v2425
        %s2427 = smul.f32 %s2426, 0.00024414063
        %s2428 = smul.f32 %s2410, %s2410
        %s2429 = ssub.f32 %s2427, %s2428
        %v2430 = vstv %s2410
        %v2431 = vsub.f32 %v2338, %v2430
        %v2432 = vsub.f32 %v2341, %v2430
        %v2433 = vsub.f32 %v2346, %v2430
        %v2434 = vsub.f32 %v2349, %v2430
        %s2435 = sadd.f32 %s2429, 1e-05
        %v2436 = vstv %s2435
        %v2437 = vrsqrt.pop %v2436
        %s2438 = vtos %v2437
        %v2439 = vstv %s2438
        %v2440 = vmul.f32 %v2431, %v2439
        %v2441 = vmul.f32 %v2432, %v2439
        %v2442 = vmul.f32 %v2433, %v2439
        %v2443 = vmul.f32 %v2434, %v2439
        %v2444 = vpack.c.bf16 %v2395, %v2394
        %v2445 = vpack.c.bf16 %v2397, %v2396
        %v2446 = vpack.c.bf16 %v2441, %v2440
        %v2447 = vpack.c.bf16 %v2443, %v2442
        %s2448 = scalar_lea.vmem [#allocation5], 192
        %v2449 = vld [vmem:[%s2448] sm:$0xf]
        %v2450 = vld [vmem:[%s2448 + $0x4] sm:$0xf]
        %v2451 = vld [vmem:[%s2448 + $0x8] sm:$0xf]
        %v2452 = vld [vmem:[%s2448 + $0xc] sm:$0xf]
        %v2453 = vld [vmem:[%s2448 + $0x10] sm:$0xf]
        %v2454 = vld [vmem:[%s2448 + $0x14] sm:$0xf]
        %v2455 = vld [vmem:[%s2448 + $0x18] sm:$0xf]
        %v2456 = vld [vmem:[%s2448 + $0x1c] sm:$0xf]
        %v2457 = vld [vmem:[%s2448 + $0x20] sm:$0xf]
        %v2458 = vld [vmem:[%s2448 + $0x24] sm:$0xf]
        %v2459 = vld [vmem:[%s2448 + $0x28] sm:$0xf]
        %v2460 = vld [vmem:[%s2448 + $0x2c] sm:$0xf]
        %v2461 = vld [vmem:[%s2448 + $0x30] sm:$0xf]
        %v2462 = vld [vmem:[%s2448 + $0x34] sm:$0xf]
        %v2463 = vld [vmem:[%s2448 + $0x38] sm:$0xf]
        %v2464 = vld [vmem:[%s2448 + $0x3c] sm:$0xf]
        %s2465 = scalar_lea.vmem [#allocation7], 3
        %v2466 = vld [vmem:[%s2465] sm:$0x1]
        %v2468 = vlaneseq
        %v2469 = vshrl.u32 %v2468, 7
        %v2470 = vsub.s32 0, %v2469
        %v2471 = vrot.slane %v2466, %v2470
        %v2489 = vunpack.c.l.b16 %v2449
        %v2490 = vunpack.c.l.b16 %v2450
        %v2491 = vunpack.c.l.b16 %v2451
        %v2492 = vunpack.c.l.b16 %v2452
        %v2493 = vunpack.c.l.b16 %v2453
        %v2494 = vunpack.c.l.b16 %v2454
        %v2495 = vunpack.c.l.b16 %v2455
        %v2496 = vunpack.c.l.b16 %v2456
        %v2497 = vunpack.c.l.b16 %v2457
        %v2498 = vunpack.c.l.b16 %v2458
        %v2499 = vunpack.c.l.b16 %v2459
        %v2500 = vunpack.c.l.b16 %v2460
        %v2501 = vunpack.c.l.b16 %v2461
        %v2502 = vunpack.c.l.b16 %v2462
        %v2503 = vunpack.c.l.b16 %v2463
        %v2504 = vunpack.c.l.b16 %v2464
        %v2505 = vpack.c.b16 %v2490, %v2489
        %v2506 = vpack.c.b16 %v2492, %v2491
        %v2507 = vpack.c.b16 %v2494, %v2493
        %v2508 = vpack.c.b16 %v2496, %v2495
        %v2509 = vpack.c.b16 %v2498, %v2497
        %v2510 = vpack.c.b16 %v2500, %v2499
        %v2511 = vpack.c.b16 %v2502, %v2501
        %v2512 = vpack.c.b16 %v2504, %v2503
        %2521 = vmatprep.subr.bf16.mxu0 0
        %2522 = vmatpush1.bf16.msra.mxu0 %v2512
        %2523 = vmatprep.subr.bf16.mxu0 0
        %2524 = vmatpush1.bf16.msra.mxu0 %v2511
        %2525 = vmatprep.subr.bf16.mxu0 0
        %2526 = vmatpush1.bf16.msra.mxu0 %v2510
        %2527 = vmatprep.subr.bf16.mxu0 0
        %2528 = vmatpush1.bf16.msra.mxu0 %v2509
        %2529 = vmatprep.subr.bf16.mxu0 0
        %2530 = vmatpush1.bf16.msra.mxu0 %v2508
        %2531 = vmatprep.subr.bf16.mxu0 0
        %2532 = vmatpush1.bf16.msra.mxu0 %v2507
        %2533 = vmatprep.subr.bf16.mxu0 0
        %2534 = vmatpush1.bf16.msra.mxu0 %v2506
        %2535 = vmatprep.subr.bf16.mxu0 0
        %2536 = vmatpush1.bf16.msra.mxu0 %v2505
        %2537 = vmatprep.subr.bf16.mxu0 0
        %2538 = vmatpush2.bf16.msra.mxu0 0
        %2539 = vmatprep.subr.bf16.mxu0 0
        %2540 = vmatpush2.bf16.msra.mxu0 0
        %2541 = vmatprep.subr.bf16.mxu0 0
        %2542 = vmatpush2.bf16.msra.mxu0 0
        %2543 = vmatprep.subr.bf16.mxu0 0
        %2544 = vmatpush2.bf16.msra.mxu0 0
        %2545 = vmatprep.subr.bf16.mxu0 0
        %2546 = vmatpush2.bf16.msra.mxu0 0
        %2547 = vmatprep.subr.bf16.mxu0 0
        %2548 = vmatpush2.bf16.msra.mxu0 0
        %2549 = vmatprep.subr.bf16.mxu0 0
        %2550 = vmatpush2.bf16.msra.mxu0 0
        %2551 = vmatprep.subr.bf16.mxu0 0
        %2552 = vmatpush2.bf16.msra.mxu0 0
        %2553 = vmatprep.mubr.bf16.mxu0 0
        %2554 = vmatmul.mubr.bf16.gmra.mxu0 %v2444
        %v2555 = vpop.f32.mrf.mxu0
        %v2556 = vadd.f32 %v2471, %v2555
        %v2557 = vpop.f32.mrf.mxu0
        %v2558 = vpop.f32.mrf.mxu0
        %v2559 = vadd.f32 %v2471, %v2558
        %v2560 = vpop.f32.mrf.mxu0
        %2561 = vmatprep.mubr.bf16.mxu0 0
        %2562 = vmatmul.mubr.bf16.gmra.mxu0 %v2445
        %v2563 = vpop.f32.mrf.mxu0
        %v2564 = vadd.f32 %v2471, %v2563
        %v2565 = vpop.f32.mrf.mxu0
        %v2566 = vpop.f32.mrf.mxu0
        %v2567 = vadd.f32 %v2471, %v2566
        %v2568 = vpop.f32.mrf.mxu0
        %2569 = vmatprep.mubr.bf16.mxu0 0
        %2570 = vmatmul.mubr.bf16.gmra.mxu0 %v2446
        %v2571 = vpop.f32.mrf.mxu0
        %v2572 = vadd.f32 %v2471, %v2571
        %v2573 = vpop.f32.mrf.mxu0
        %v2574 = vpop.f32.mrf.mxu0
        %v2575 = vadd.f32 %v2471, %v2574
        %v2576 = vpop.f32.mrf.mxu0
        %2577 = vmatprep.mubr.bf16.mxu0 0
        %2578 = vmatmul.mubr.bf16.gmra.mxu0 %v2447
        %v2579 = vpop.f32.mrf.mxu0
        %v2580 = vadd.f32 %v2471, %v2579
        %v2581 = vpop.f32.mrf.mxu0
        %v2582 = vpop.f32.mrf.mxu0
        %v2583 = vadd.f32 %v2471, %v2582
        %v2584 = vpop.f32.mrf.mxu0
        %2585 = vdwg.mxu0
        %v2586 = vld [vmem:[#allocation8] sm:$0xf]
        %v2587 = vld [vmem:[#allocation8 + $0x4] sm:$0xf]
        %v2588 = vld [vmem:[#allocation8 + $0x8] sm:$0xf]
        %v2589 = vld [vmem:[#allocation8 + $0xc] sm:$0xf]
        %v2590 = vpack.c.bf16 %v2559, %v2556
        %v2591 = vpack.c.bf16 %v2567, %v2564
        %v2592 = vpack.c.bf16 %v2575, %v2572
        %v2593 = vpack.c.bf16 %v2583, %v2580
        %v2594 = vld [vmem:[%s8] sm:$0xff]
        %v2595 = vld [vmem:[%s8 + $0x8] sm:$0xff]
        %v2596 = vld [vmem:[%s8 + $0x10] sm:$0xff]
        %v2597 = vld [vmem:[%s8 + $0x18] sm:$0xff]
        %2599 = vset.pattern.permute.xlu0 0
        %2600 = vperm.xlu0 %2599, %v2594
        %v2601 = vpop.permute.xlu0 %2600
        %2604 = vset.pattern.permute.xlu0 0
        %2605 = vperm.xlu0 %2604, %v2595
        %v2606 = vpop.permute.xlu0 %2605
        %2609 = vset.pattern.permute.xlu0 0
        %2610 = vperm.xlu0 %2609, %v2596
        %v2611 = vpop.permute.xlu0 %2610
        %2614 = vset.pattern.permute.xlu0 0
        %2615 = vperm.xlu0 %2614, %v2597
        %v2616 = vpop.permute.xlu0 %2615
        %v2622 = vunpack.c.l.b16 %v2586
        %v2623 = vunpack.c.l.b16 %v2587
        %v2624 = vunpack.c.l.b16 %v2588
        %v2625 = vunpack.c.l.b16 %v2589
        %v2626 = vpack.c.b16 %v2623, %v2622
        %v2627 = vpack.c.b16 %v2625, %v2624
        %v2629 = vsel %vm791, %v2626, 0
        %v2632 = vsel %vm791, %v2627, 0
        %2634 = vmatprep.subr.bf16.mxu0 0
        %2635 = vmatpush1.bf16.msra.mxu0 0
        %2636 = vmatprep.subr.bf16.mxu0 0
        %2637 = vmatpush1.bf16.msra.mxu0 0
        %2638 = vmatprep.subr.bf16.mxu0 0
        %2639 = vmatpush1.bf16.msra.mxu0 0
        %2640 = vmatprep.subr.bf16.mxu0 0
        %2641 = vmatpush1.bf16.msra.mxu0 0
        %2642 = vmatprep.subr.bf16.mxu0 0
        %2643 = vmatpush1.bf16.msra.mxu0 0
        %2644 = vmatprep.subr.bf16.mxu0 0
        %2645 = vmatpush1.bf16.msra.mxu0 0
        %2646 = vmatprep.subr.bf16.mxu0 %v2593
        %2647 = vmatpush1.bf16.msra.mxu0 %v2591
        %2648 = vmatprep.subr.bf16.mxu0 %v2592
        %2649 = vmatpush1.bf16.msra.mxu0 %v2590
        %2650 = vmatprep.subr.bf16.mxu0 0
        %2651 = vmatpush2.bf16.msra.mxu0 0
        %2652 = vmatprep.subr.bf16.mxu0 0
        %2653 = vmatpush2.bf16.msra.mxu0 0
        %2654 = vmatprep.subr.bf16.mxu0 0
        %2655 = vmatpush2.bf16.msra.mxu0 0
        %2656 = vmatprep.subr.bf16.mxu0 0
        %2657 = vmatpush2.bf16.msra.mxu0 0
        %2658 = vmatprep.subr.bf16.mxu0 0
        %2659 = vmatpush2.bf16.msra.mxu0 0
        %2660 = vmatprep.subr.bf16.mxu0 0
        %2661 = vmatpush2.bf16.msra.mxu0 0
        %2662 = vmatprep.subr.bf16.mxu0 0
        %2663 = vmatpush2.bf16.msra.mxu0 0
        %2664 = vmatprep.subr.bf16.mxu0 0
        %2665 = vmatpush2.bf16.msra.mxu0 0
        %2666 = vmatprep.mubr.bf16.mxu0 0
        %2667 = vmatmul.mubr.bf16.gmra.mxu0 %v2629
        %v2668 = vpop.f32.mrf.mxu0
        %v2669 = vadd.f32 %v2601, %v2668
        %v2670 = vpop.f32.mrf.mxu0
        %v2671 = vadd.f32 %v2601, %v2670
        %v2672 = vpop.f32.mrf.mxu0
        %v2673 = vadd.f32 %v2606, %v2672
        %v2674 = vpop.f32.mrf.mxu0
        %v2675 = vadd.f32 %v2606, %v2674
        %2676 = vmatprep.mubr.bf16.mxu0 0
        %2677 = vmatmul.mubr.bf16.gmra.mxu0 %v2632
        %v2678 = vpop.f32.mrf.mxu0
        %v2679 = vadd.f32 %v2611, %v2678
        %v2680 = vpop.f32.mrf.mxu0
        %v2681 = vadd.f32 %v2611, %v2680
        %v2682 = vpop.f32.mrf.mxu0
        %v2683 = vadd.f32 %v2616, %v2682
        %v2684 = vpop.f32.mrf.mxu0
        %v2685 = vadd.f32 %v2616, %v2684
        %2686 = vdwg.mxu0
        %v2687 = vmax.f32 %v2669, 0.0
        %v2688 = vmax.f32 %v2673, 0.0
        %v2689 = vmax.f32 %v2679, 0.0
        %v2690 = vmax.f32 %v2683, 0.0
        %v2691 = vadd.f32 %v2687, %v1996
        %v2692 = vadd.f32 %v2688, %v1999
        %v2693 = vadd.f32 %v2689, %v2004
        %v2694 = vadd.f32 %v2690, %v2007
        %2695 = vst [vmem:[%s395] sm:$0xff] %v2691
        %2696 = vst [vmem:[%s395 + $0x8] sm:$0xff] %v2692
        %2697 = vst [vmem:[%s395 + $0x10] sm:$0xff] %v2693
        %2698 = vst [vmem:[%s395 + $0x18] sm:$0xff] %v2694
        %v2699 = vmax.f32 %v2671, 0.0
        %v2700 = vmax.f32 %v2675, 0.0
        %v2701 = vmax.f32 %v2681, 0.0
        %v2702 = vmax.f32 %v2685, 0.0
        %v2703 = vadd.f32 %v2699, %v2338
        %v2704 = vadd.f32 %v2700, %v2341
        %v2705 = vadd.f32 %v2701, %v2346
        %v2706 = vadd.f32 %v2702, %v2349
        %s2707 = scalar_lea.vmem %s395, 32 [#allocation10]
        %2708 = vst [vmem:[%s2707] sm:$0xff] %v2703
        %2709 = vst [vmem:[%s2707 + $0x8] sm:$0xff] %v2704
        %2710 = vst [vmem:[%s2707 + $0x10] sm:$0xff] %v2705
        %2711 = vst [vmem:[%s2707 + $0x18] sm:$0xff] %v2706
        %s2712 = sand.u32 %s230, 1
        %s2713 = scalar_lea.sflag [#allocation4], %s2712
        %s2714 = sand.u32 %s230, 1
        %s2715 = smul.addr %s2714, 64
        %s2716 = scalar_lea.vmem [#allocation10], %s2715
        // Predicated region
        $region73: #{fwd.1} parent=55 // pred_check
          %p2717 = pneg %p240
        $region74: #{fwd.1} parent=55 // pred_check_branch
          %2719 = sbr.rel (%p2717) target = $region76
        $region75: #{fwd.1} parent=55 // pred_region
          %s2720 = smul.u32 2, %s28
          %s2722 = ssub.s32 1024, 1024
          %2723 = vsyncadd %s2713, %s2722
          %s2724 = smul.addr %s2720, 4
          %s2725 = smul.addr %s2724, 128
          %s2726 = scalar_lea.hbm %s9, %s2725
          %s2727 = sshll.u32 %s2716, 4
          %s2728 = int_to_ptr.vmem [resolvable:$true] %s2727
          %2733 = dma.vmem_to_hbm [thread:$0]  %s2728, 1024, %s2726, %s2713, 128, 128, 8
        $region76: #{fwd.1} parent=55 // pred_fallthru
          _
      $region56: #{fwd.1} parent=5 // pred_fallthru
        _
      %p2734 = scmp.le.s32.totalorder 2, %s23
      // Predicated region
      $region77: #{fwd.1} parent=5 // pred_check
        %p2735 = pneg %p2734
      $region78: #{fwd.1} parent=5 // pred_check_branch
        %2737 = sbr.rel (%p2735) target = $region80
      $region79: #{fwd.1} parent=5 // pred_region
        %s2738 = ssub.s32 %s23, 2
        // Predicated region
        $region81: #{fwd.1} parent=79 // pred_check
          %p2739 = pneg %p246
        $region82: #{fwd.1} parent=79 // pred_check_branch
          %2741 = sbr.rel (%p2739) target = $region84
        $region83: #{fwd.1} parent=79 // pred_region
          %s2742 = sand.u32 %s231, 1
          %s2743 = scalar_lea.sflag [#allocation4], %s2742
          %s2744 = sand.u32 %s231, 1
          %s2745 = smul.addr %s2744, 64
          %s2746 = scalar_lea.vmem [#allocation10], %s2745
          %2747 = dma.done %s2743, 1024
        $region84: #{fwd.1} parent=79 // pred_fallthru
          _
      $region80: #{fwd.1} parent=5 // pred_fallthru
        _
    $region6: #{fwd.1} parent=1 // loop_footer
      %s27 = sadd.s32 1, %s23
    $region7: #{fwd.1} parent=1 // loop_footer_branch
      %22 = sbr.rel target = $region3
    $region8: #{fwd.1} parent=1 // loop_exit
      _
    %2748 = vsyncpa [#allocation3], 1
    %s2749 = scalar_lea.sflag [#allocation3], 1
    %2750 = vsyncpa %s2749, 1
    %2751 = vsyncpa [#allocation6], 1
    %2752 = vsyncpa [#allocation9], 1
    %2753 = vsyncpa [#allocation4], 1
    %s2754 = scalar_lea.sflag [#allocation4], 1
    %2755 = vsyncpa %s2754, 1

</llo_original>
